<compile_context>
chip_gen: v7x
topology: tpu7x:2x2x1
jax: 0.10.0
libtpu: 0.0.40
codegen_flags: <defaults>
</compile_context>

<pallas_src>
import functools

import jax
import jax.numpy as jnp
import numpy as np
from jax import lax
from jax.experimental import pallas as pl
from jax.experimental.pallas import tpu as pltpu

KH = 3            # kernel height (lead axis), stride 1, pad 1
KW = 15           # kernel width (time axis),  stride 2, pad 7
PH, PW = 1, 7
SW = 2
N_SHIFT = (KW + 1) // 2   # 8 distinct stride-2 column shifts (kw // 2)
GROUP = 8                 # rows per shift group: 2*KH = 6 taps padded to 8 sublanes
K_PAD = N_SHIFT * GROUP   # 64


# ----------------------------------------------------------------------------
# Pallas kernel: in-VMEM shift-major patch assembly + chunked matmul epilogue
# ----------------------------------------------------------------------------
def _inconv_kernel(x_ref, w_ref, b_ref, o_ref, p_ref, *,
                   H_out, W_out, row_chunk, negative_slope):
    """One grid step = one batch element (full (C_out, H_out*W_out) slab).

    x_ref: (2*H_pad_ext, W_half) bf16 -- phase-interleaved padded input rows:
           x_ref[2*r + p, c] = x_padded[r, 2*c + p]
    w_ref: (C_out, K_PAD) bf16 -- BN-scale-folded, shift-major conv weight.
    b_ref: (C_out, 1)     f32  -- folded BN bias.
    o_ref: (C_out, H_out*W_out) f32 output slab (== NCHW bytes for this n).
    p_ref: (K_PAD, H_out*W_out) bf16 VMEM scratch -- in-kernel "im2col".
    """
    # ---- patch assembly ----------------------------------------------------
    # For output row h and shift s, the 6 live taps (kh=0..2, phase=0..1) are
    # the contiguous input rows 2*h .. 2*h+5 at column offset s; we store a
    # full 8-row group (rows 6,7 have zero weight columns) so every store is
    # an 8-sublane, 128-lane-aligned block.  All offsets are static.
    for h in range(H_out):
        rows = x_ref[pl.ds(2 * h, GROUP), :]                 # (8, W_half) bf16
        for s in range(N_SHIFT):
            p_ref[pl.ds(GROUP * s, GROUP), pl.ds(h * W_out, W_out)] = \
                rows[:, s:s + W_out]

    # ---- matmul + fused BN bias + leaky_relu -------------------------------
    w = w_ref[...]                    # (C_out, K_PAD) bf16, hoisted
    b = b_ref[...]                    # (C_out, 1) f32, hoisted
    cw = row_chunk * W_out            # matmul N per chunk (256 in the test)
    for c in range(H_out // row_chunk):
        cols = pl.ds(c * cw, cw)
        y = jnp.dot(w, p_ref[:, cols], preferred_element_type=jnp.float32)
        y = y + b
        o_ref[:, cols] = jnp.where(y > 0.0, y, negative_slope * y)


# ----------------------------------------------------------------------------
# INCONV forward (layout plumbing in plain JAX, fused in the same jit)
# ----------------------------------------------------------------------------
def inconv_forward(x, weight, gamma, beta, running_mean, running_var, *,
                   eps=1e-5, negative_slope=0.01):
    """x: (N, 1, H, W) f32; weight: (C_out, 1, 3, 15). Returns NCHW f32."""
    N, C_in, H, W = x.shape
    C_out = weight.shape[0]
    # TODO(synk): generalize the shift-major packing to C_in > 1 (Res2D_LC
    # always feeds INCONV with in_ch=1 via x.unsqueeze(1)).
    assert C_in == 1 and weight.shape[1:] == (1, KH, KW)

    H_out = H                                     # stride 1, pad 1, k 3
    W_out = (W + 2 * PW - KW) // SW + 1
    W_padded = W + 2 * PW
    w_extra = W_padded % 2                        # make padded width even
    W_half = (W_padded + w_extra) // 2            # == W_out + PW
    H_pad_ext = H + 2 * PH + 1                    # +1 zero row keeps every
                                                  # 8-row read in bounds

    # ---- input prep: pad, interleave even/odd W-phases as rows, bf16 -------
    x_pad = jnp.pad(x[:, 0], ((0, 0), (PH, PH + 1), (PW, PW + w_extra)))
    x_ph = x_pad.reshape(N, H_pad_ext, W_half, 2)
    x_flat = jnp.transpose(x_ph, (0, 1, 3, 2)).reshape(
        N, 2 * H_pad_ext, W_half).astype(jnp.bfloat16)

    # ---- weight/bias prep: fold inference BN, reorder K to shift-major -----
    scale = gamma / jnp.sqrt(running_var + eps)                    # (C_out,)
    bias_col = (beta - running_mean * scale).astype(jnp.float32).reshape(C_out, 1)
    w_fold = weight[:, 0] * scale[:, None, None]                   # (C_out, KH, KW)
    cols = []
    for s in range(N_SHIFT):
        for j in range(GROUP):            # K row = 8*s + j, j = 2*kh + phase
            kh, phase = j // 2, j % 2
            kw = 2 * s + phase
            if kh < KH and kw < KW:
                cols.append(w_fold[:, kh, kw])
            else:
                cols.append(jnp.zeros((C_out,), w_fold.dtype))     # pad rows
    w_mat = jnp.stack(cols, axis=1).astype(jnp.bfloat16)           # (C_out, 64)

    row_chunk = 2 if H_out % 2 == 0 else 1        # matmul N = row_chunk*W_out

    kernel = functools.partial(_inconv_kernel, H_out=H_out, W_out=W_out,
                               row_chunk=row_chunk,
                               negative_slope=negative_slope)

    out_flat = pl.pallas_call(
        kernel,
        out_shape=jax.ShapeDtypeStruct((N, C_out, H_out * W_out), jnp.float32),
        grid_spec=pltpu.PrefetchScalarGridSpec(
            num_scalar_prefetch=0,
            grid=(N,),
            in_specs=[
                pl.BlockSpec((None, 2 * H_pad_ext, W_half), lambda n: (n, 0, 0)),
                pl.BlockSpec((C_out, K_PAD), lambda n: (0, 0)),
                pl.BlockSpec((C_out, 1), lambda n: (0, 0)),
            ],
            out_specs=pl.BlockSpec((None, C_out, H_out * W_out),
                                   lambda n: (n, 0, 0)),
            scratch_shapes=[pltpu.VMEM((K_PAD, H_out * W_out), jnp.bfloat16)],
        ),
        compiler_params=pltpu.CompilerParams(
            dimension_semantics=("parallel",),
            vmem_limit_bytes=32 * 1024 * 1024),
    )(x_flat, w_mat, bias_col)

    # (N, C_out, H_out*W_out) is byte-identical to NCHW: free reshape, no copy.
    return out_flat.reshape(N, C_out, H_out, W_out)


# ----------------------------------------------------------------------------
# Pure-JAX reference (same bf16 storage quantization, f32 math)
# ----------------------------------------------------------------------------
def inconv_reference(x, weight, gamma, beta, running_mean, running_var, *,
                     eps=1e-5, negative_slope=0.01):
    scale = gamma / jnp.sqrt(running_var + eps)
    bias = beta - running_mean * scale
    w_fold = weight * scale[:, None, None, None]
    xq = x.astype(jnp.bfloat16).astype(jnp.float32)
    wq = w_fold.astype(jnp.bfloat16).astype(jnp.float32)
    y = lax.conv_general_dilated(
        xq, wq, window_strides=(1, SW), padding=((PH, PH), (PW, PW)),
        dimension_numbers=("NCHW", "OIHW", "NCHW"),
        precision=lax.Precision.HIGHEST)
    y = y + bias[None, :, None, None]
    return jnp.where(y > 0, y, negative_slope * y)


if __name__ == "__main__":
    key = jax.random.PRNGKey(0)
    k_x, k_w, k_g, k_b, k_m, k_v = jax.random.split(key, 6)

    # Res2D_LC feeds INCONV with x.unsqueeze(1): (batch, 1, leads=12, time).
    N, C_in, H, W = 2, 1, 12, 256
    C_out = 128                       # module default out_ch

    x = jax.random.normal(k_x, (N, C_in, H, W), dtype=jnp.float32)
    fan_in = C_in * KH * KW
    bound = float(np.sqrt(1.0 / fan_in))
    weight = jax.random.uniform(k_w, (C_out, C_in, KH, KW), dtype=jnp.float32,
                                minval=-bound, maxval=bound)
    gamma = 1.0 + 0.1 * jax.random.normal(k_g, (C_out,), dtype=jnp.float32)
    beta = 0.1 * jax.random.normal(k_b, (C_out,), dtype=jnp.float32)
    running_mean = 0.1 * jax.random.normal(k_m, (C_out,), dtype=jnp.float32)
    running_var = 1.0 + 0.1 * jax.random.uniform(k_v, (C_out,), dtype=jnp.float32)

    fwd = jax.jit(inconv_forward)
    out = jax.block_until_ready(
        fwd(x, weight, gamma, beta, running_mean, running_var))

    ref = jax.block_until_ready(
        inconv_reference(x, weight, gamma, beta, running_mean, running_var))

    W_out = (W + 2 * PW - KW) // SW + 1
    assert out.shape == (N, C_out, H, W_out), out.shape
    np.testing.assert_allclose(np.asarray(out), np.asarray(ref),
                               rtol=1e-3, atol=1e-3)
    print("KERNEL_OK")
</pallas_src>

<mosaic_0001>
module attributes {stable_mosaic.version = 11 : i64} {
  func.func @_inconv_kernel(%arg0: i32, %arg1: memref<1x30x135xbf16, #tpu.memory_space<vmem>>, %arg2: memref<128x64xbf16, #tpu.memory_space<vmem>>, %arg3: memref<128x1xf32, #tpu.memory_space<vmem>>, %arg4: memref<1x128x1536xf32, #tpu.memory_space<vmem>>, %arg5: memref<64x1536xbf16, #tpu.memory_space<vmem>>) attributes {dimension_semantics = [#tpu.dimension_semantics<parallel>], iteration_bounds = array<i64: 2>, scalar_prefetch = 0 : i64, scratch_operands = 1 : i64, tpu.core_type = #tpu.core_type<tc>, window_params = [{transform_indices = @transform_0, window_bounds = array<i64: 1, 30, 135>}, {pipeline_mode = #tpu.pipeline_mode<synchronous>, transform_indices = @transform_1, window_bounds = array<i64: 128, 64>}, {pipeline_mode = #tpu.pipeline_mode<synchronous>, transform_indices = @transform_2, window_bounds = array<i64: 128, 1>}, {transform_indices = @transform_3, window_bounds = array<i64: 1, 128, 1536>}]} {
    %c0 = arith.constant 0 : index
    %c0_0 = arith.constant 0 : index
    %c0_1 = arith.constant 0 : index
    %0 = vector.load %arg1[%c0, %c0_0, %c0_1] : memref<1x30x135xbf16, #tpu.memory_space<vmem>>, vector<1x8x135xbf16>
    %1 = vector.shape_cast %0 : vector<1x8x135xbf16> to vector<8x135xbf16>
    %2 = vector.extract_strided_slice %1 {offsets = [0, 0], sizes = [8, 128], strides = [1, 1]} : vector<8x135xbf16> to vector<8x128xbf16>
    %c0_2 = arith.constant 0 : index
    %c0_3 = arith.constant 0 : index
    %3 = vector.load %arg5[%c0_2, %c0_3] : memref<64x1536xbf16, #tpu.memory_space<vmem>>, vector<8x128xbf16>
    tpu.vector_store %arg5[%c0_2, %c0_3], %2 {strides = array<i32>} : memref<64x1536xbf16, #tpu.memory_space<vmem>>, vector<8x128xbf16>,
    %4 = vector.extract_strided_slice %1 {offsets = [0, 1], sizes = [8, 128], strides = [1, 1]} : vector<8x135xbf16> to vector<8x128xbf16>
    %c8 = arith.constant 8 : index
    %c0_4 = arith.constant 0 : index
    %5 = vector.load %arg5[%c8, %c0_4] : memref<64x1536xbf16, #tpu.memory_space<vmem>>, vector<8x128xbf16>
    tpu.vector_store %arg5[%c8, %c0_4], %4 {strides = array<i32>} : memref<64x1536xbf16, #tpu.memory_space<vmem>>, vector<8x128xbf16>,
    %6 = vector.extract_strided_slice %1 {offsets = [0, 2], sizes = [8, 128], strides = [1, 1]} : vector<8x135xbf16> to vector<8x128xbf16>
    %c16 = arith.constant 16 : index
    %c0_5 = arith.constant 0 : index
    %7 = vector.load %arg5[%c16, %c0_5] : memref<64x1536xbf16, #tpu.memory_space<vmem>>, vector<8x128xbf16>
    tpu.vector_store %arg5[%c16, %c0_5], %6 {strides = array<i32>} : memref<64x1536xbf16, #tpu.memory_space<vmem>>, vector<8x128xbf16>,
    %8 = vector.extract_strided_slice %1 {offsets = [0, 3], sizes = [8, 128], strides = [1, 1]} : vector<8x135xbf16> to vector<8x128xbf16>
    %c24 = arith.constant 24 : index
    %c0_6 = arith.constant 0 : index
    %9 = vector.load %arg5[%c24, %c0_6] : memref<64x1536xbf16, #tpu.memory_space<vmem>>, vector<8x128xbf16>
    tpu.vector_store %arg5[%c24, %c0_6], %8 {strides = array<i32>} : memref<64x1536xbf16, #tpu.memory_space<vmem>>, vector<8x128xbf16>,
    %10 = vector.extract_strided_slice %1 {offsets = [0, 4], sizes = [8, 128], strides = [1, 1]} : vector<8x135xbf16> to vector<8x128xbf16>
    %c32 = arith.constant 32 : index
    %c0_7 = arith.constant 0 : index
    %11 = vector.load %arg5[%c32, %c0_7] : memref<64x1536xbf16, #tpu.memory_space<vmem>>, vector<8x128xbf16>
    tpu.vector_store %arg5[%c32, %c0_7], %10 {strides = array<i32>} : memref<64x1536xbf16, #tpu.memory_space<vmem>>, vector<8x128xbf16>,
    %12 = vector.extract_strided_slice %1 {offsets = [0, 5], sizes = [8, 128], strides = [1, 1]} : vector<8x135xbf16> to vector<8x128xbf16>
    %c40 = arith.constant 40 : index
    %c0_8 = arith.constant 0 : index
    %13 = vector.load %arg5[%c40, %c0_8] : memref<64x1536xbf16, #tpu.memory_space<vmem>>, vector<8x128xbf16>
    tpu.vector_store %arg5[%c40, %c0_8], %12 {strides = array<i32>} : memref<64x1536xbf16, #tpu.memory_space<vmem>>, vector<8x128xbf16>,
    %14 = vector.extract_strided_slice %1 {offsets = [0, 6], sizes = [8, 128], strides = [1, 1]} : vector<8x135xbf16> to vector<8x128xbf16>
    %c48 = arith.constant 48 : index
    %c0_9 = arith.constant 0 : index
    %15 = vector.load %arg5[%c48, %c0_9] : memref<64x1536xbf16, #tpu.memory_space<vmem>>, vector<8x128xbf16>
    tpu.vector_store %arg5[%c48, %c0_9], %14 {strides = array<i32>} : memref<64x1536xbf16, #tpu.memory_space<vmem>>, vector<8x128xbf16>,
    %16 = vector.extract_strided_slice %1 {offsets = [0, 7], sizes = [8, 128], strides = [1, 1]} : vector<8x135xbf16> to vector<8x128xbf16>
    %c56 = arith.constant 56 : index
    %c0_10 = arith.constant 0 : index
    %17 = vector.load %arg5[%c56, %c0_10] : memref<64x1536xbf16, #tpu.memory_space<vmem>>, vector<8x128xbf16>
    tpu.vector_store %arg5[%c56, %c0_10], %16 {strides = array<i32>} : memref<64x1536xbf16, #tpu.memory_space<vmem>>, vector<8x128xbf16>,
    %c0_11 = arith.constant 0 : index
    %c2 = arith.constant 2 : index
    %c0_12 = arith.constant 0 : index
    %18 = vector.load %arg1[%c0_11, %c2, %c0_12] : memref<1x30x135xbf16, #tpu.memory_space<vmem>>, vector<1x8x135xbf16>
    %19 = vector.shape_cast %18 : vector<1x8x135xbf16> to vector<8x135xbf16>
    %20 = vector.extract_strided_slice %19 {offsets = [0, 0], sizes = [8, 128], strides = [1, 1]} : vector<8x135xbf16> to vector<8x128xbf16>
    %c0_13 = arith.constant 0 : index
    %c128 = arith.constant 128 : index
    %21 = vector.load %arg5[%c0_13, %c128] : memref<64x1536xbf16, #tpu.memory_space<vmem>>, vector<8x128xbf16>
    tpu.vector_store %arg5[%c0_13, %c128], %20 {strides = array<i32>} : memref<64x1536xbf16, #tpu.memory_space<vmem>>, vector<8x128xbf16>,
    %22 = vector.extract_strided_slice %19 {offsets = [0, 1], sizes = [8, 128], strides = [1, 1]} : vector<8x135xbf16> to vector<8x128xbf16>
    %c8_14 = arith.constant 8 : index
    %c128_15 = arith.constant 128 : index
    %23 = vector.load %arg5[%c8_14, %c128_15] : memref<64x1536xbf16, #tpu.memory_space<vmem>>, vector<8x128xbf16>
    tpu.vector_store %arg5[%c8_14, %c128_15], %22 {strides = array<i32>} : memref<64x1536xbf16, #tpu.memory_space<vmem>>, vector<8x128xbf16>,
    %24 = vector.extract_strided_slice %19 {offsets = [0, 2], sizes = [8, 128], strides = [1, 1]} : vector<8x135xbf16> to vector<8x128xbf16>
    %c16_16 = arith.constant 16 : index
    %c128_17 = arith.constant 128 : index
    %25 = vector.load %arg5[%c16_16, %c128_17] : memref<64x1536xbf16, #tpu.memory_space<vmem>>, vector<8x128xbf16>
    tpu.vector_store %arg5[%c16_16, %c128_17], %24 {strides = array<i32>} : memref<64x1536xbf16, #tpu.memory_space<vmem>>, vector<8x128xbf16>,
    %26 = vector.extract_strided_slice %19 {offsets = [0, 3], sizes = [8, 128], strides = [1, 1]} : vector<8x135xbf16> to vector<8x128xbf16>
    %c24_18 = arith.constant 24 : index
    %c128_19 = arith.constant 128 : index
    %27 = vector.load %arg5[%c24_18, %c128_19] : memref<64x1536xbf16, #tpu.memory_space<vmem>>, vector<8x128xbf16>
    tpu.vector_store %arg5[%c24_18, %c128_19], %26 {strides = array<i32>} : memref<64x1536xbf16, #tpu.memory_space<vmem>>, vector<8x128xbf16>,
    %28 = vector.extract_strided_slice %19 {offsets = [0, 4], sizes = [8, 128], strides = [1, 1]} : vector<8x135xbf16> to vector<8x128xbf16>
    %c32_20 = arith.constant 32 : index
    %c128_21 = arith.constant 128 : index
    %29 = vector.load %arg5[%c32_20, %c128_21] : memref<64x1536xbf16, #tpu.memory_space<vmem>>, vector<8x128xbf16>
    tpu.vector_store %arg5[%c32_20, %c128_21], %28 {strides = array<i32>} : memref<64x1536xbf16, #tpu.memory_space<vmem>>, vector<8x128xbf16>,
    %30 = vector.extract_strided_slice %19 {offsets = [0, 5], sizes = [8, 128], strides = [1, 1]} : vector<8x135xbf16> to vector<8x128xbf16>
    %c40_22 = arith.constant 40 : index
    %c128_23 = arith.constant 128 : index
    %31 = vector.load %arg5[%c40_22, %c128_23] : memref<64x1536xbf16, #tpu.memory_space<vmem>>, vector<8x128xbf16>
    tpu.vector_store %arg5[%c40_22, %c128_23], %30 {strides = array<i32>} : memref<64x1536xbf16, #tpu.memory_space<vmem>>, vector<8x128xbf16>,
    %32 = vector.extract_strided_slice %19 {offsets = [0, 6], sizes = [8, 128], strides = [1, 1]} : vector<8x135xbf16> to vector<8x128xbf16>
    %c48_24 = arith.constant 48 : index
    %c128_25 = arith.constant 128 : index
    %33 = vector.load %arg5[%c48_24, %c128_25] : memref<64x1536xbf16, #tpu.memory_space<vmem>>, vector<8x128xbf16>
    tpu.vector_store %arg5[%c48_24, %c128_25], %32 {strides = array<i32>} : memref<64x1536xbf16, #tpu.memory_space<vmem>>, vector<8x128xbf16>,
    %34 = vector.extract_strided_slice %19 {offsets = [0, 7], sizes = [8, 128], strides = [1, 1]} : vector<8x135xbf16> to vector<8x128xbf16>
    %c56_26 = arith.constant 56 : index
    %c128_27 = arith.constant 128 : index
    %35 = vector.load %arg5[%c56_26, %c128_27] : memref<64x1536xbf16, #tpu.memory_space<vmem>>, vector<8x128xbf16>
    tpu.vector_store %arg5[%c56_26, %c128_27], %34 {strides = array<i32>} : memref<64x1536xbf16, #tpu.memory_space<vmem>>, vector<8x128xbf16>,
    %c0_28 = arith.constant 0 : index
    %c4 = arith.constant 4 : index
    %c0_29 = arith.constant 0 : index
    %36 = vector.load %arg1[%c0_28, %c4, %c0_29] : memref<1x30x135xbf16, #tpu.memory_space<vmem>>, vector<1x8x135xbf16>
    %37 = vector.shape_cast %36 : vector<1x8x135xbf16> to vector<8x135xbf16>
    %38 = vector.extract_strided_slice %37 {offsets = [0, 0], sizes = [8, 128], strides = [1, 1]} : vector<8x135xbf16> to vector<8x128xbf16>
    %c0_30 = arith.constant 0 : index
    %c256 = arith.constant 256 : index
    %39 = vector.load %arg5[%c0_30, %c256] : memref<64x1536xbf16, #tpu.memory_space<vmem>>, vector<8x128xbf16>
    tpu.vector_store %arg5[%c0_30, %c256], %38 {strides = array<i32>} : memref<64x1536xbf16, #tpu.memory_space<vmem>>, vector<8x128xbf16>,
    %40 = vector.extract_strided_slice %37 {offsets = [0, 1], sizes = [8, 128], strides = [1, 1]} : vector<8x135xbf16> to vector<8x128xbf16>
    %c8_31 = arith.constant 8 : index
    %c256_32 = arith.constant 256 : index
    %41 = vector.load %arg5[%c8_31, %c256_32] : memref<64x1536xbf16, #tpu.memory_space<vmem>>, vector<8x128xbf16>
    tpu.vector_store %arg5[%c8_31, %c256_32], %40 {strides = array<i32>} : memref<64x1536xbf16, #tpu.memory_space<vmem>>, vector<8x128xbf16>,
    %42 = vector.extract_strided_slice %37 {offsets = [0, 2], sizes = [8, 128], strides = [1, 1]} : vector<8x135xbf16> to vector<8x128xbf16>
    %c16_33 = arith.constant 16 : index
    %c256_34 = arith.constant 256 : index
    %43 = vector.load %arg5[%c16_33, %c256_34] : memref<64x1536xbf16, #tpu.memory_space<vmem>>, vector<8x128xbf16>
    tpu.vector_store %arg5[%c16_33, %c256_34], %42 {strides = array<i32>} : memref<64x1536xbf16, #tpu.memory_space<vmem>>, vector<8x128xbf16>,
    %44 = vector.extract_strided_slice %37 {offsets = [0, 3], sizes = [8, 128], strides = [1, 1]} : vector<8x135xbf16> to vector<8x128xbf16>
    %c24_35 = arith.constant 24 : index
    %c256_36 = arith.constant 256 : index
    %45 = vector.load %arg5[%c24_35, %c256_36] : memref<64x1536xbf16, #tpu.memory_space<vmem>>, vector<8x128xbf16>
    tpu.vector_store %arg5[%c24_35, %c256_36], %44 {strides = array<i32>} : memref<64x1536xbf16, #tpu.memory_space<vmem>>, vector<8x128xbf16>,
    %46 = vector.extract_strided_slice %37 {offsets = [0, 4], sizes = [8, 128], strides = [1, 1]} : vector<8x135xbf16> to vector<8x128xbf16>
    %c32_37 = arith.constant 32 : index
    %c256_38 = arith.constant 256 : index
    %47 = vector.load %arg5[%c32_37, %c256_38] : memref<64x1536xbf16, #tpu.memory_space<vmem>>, vector<8x128xbf16>
    tpu.vector_store %arg5[%c32_37, %c256_38], %46 {strides = array<i32>} : memref<64x1536xbf16, #tpu.memory_space<vmem>>, vector<8x128xbf16>,
    %48 = vector.extract_strided_slice %37 {offsets = [0, 5], sizes = [8, 128], strides = [1, 1]} : vector<8x135xbf16> to vector<8x128xbf16>
    %c40_39 = arith.constant 40 : index
    %c256_40 = arith.constant 256 : index
    %49 = vector.load %arg5[%c40_39, %c256_40] : memref<64x1536xbf16, #tpu.memory_space<vmem>>, vector<8x128xbf16>
    tpu.vector_store %arg5[%c40_39, %c256_40], %48 {strides = array<i32>} : memref<64x1536xbf16, #tpu.memory_space<vmem>>, vector<8x128xbf16>,
    %50 = vector.extract_strided_slice %37 {offsets = [0, 6], sizes = [8, 128], strides = [1, 1]} : vector<8x135xbf16> to vector<8x128xbf16>
    %c48_41 = arith.constant 48 : index
    %c256_42 = arith.constant 256 : index
    %51 = vector.load %arg5[%c48_41, %c256_42] : memref<64x1536xbf16, #tpu.memory_space<vmem>>, vector<8x128xbf16>
    tpu.vector_store %arg5[%c48_41, %c256_42], %50 {strides = array<i32>} : memref<64x1536xbf16, #tpu.memory_space<vmem>>, vector<8x128xbf16>,
    %52 = vector.extract_strided_slice %37 {offsets = [0, 7], sizes = [8, 128], strides = [1, 1]} : vector<8x135xbf16> to vector<8x128xbf16>
    %c56_43 = arith.constant 56 : index
    %c256_44 = arith.constant 256 : index
    %53 = vector.load %arg5[%c56_43, %c256_44] : memref<64x1536xbf16, #tpu.memory_space<vmem>>, vector<8x128xbf16>
    tpu.vector_store %arg5[%c56_43, %c256_44], %52 {strides = array<i32>} : memref<64x1536xbf16, #tpu.memory_space<vmem>>, vector<8x128xbf16>,
    %c0_45 = arith.constant 0 : index
    %c6 = arith.constant 6 : index
    %c0_46 = arith.constant 0 : index
    %54 = vector.load %arg1[%c0_45, %c6, %c0_46] : memref<1x30x135xbf16, #tpu.memory_space<vmem>>, vector<1x8x135xbf16>
    %55 = vector.shape_cast %54 : vector<1x8x135xbf16> to vector<8x135xbf16>
    %56 = vector.extract_strided_slice %55 {offsets = [0, 0], sizes = [8, 128], strides = [1, 1]} : vector<8x135xbf16> to vector<8x128xbf16>
    %c0_47 = arith.constant 0 : index
    %c384 = arith.constant 384 : index
    %57 = vector.load %arg5[%c0_47, %c384] : memref<64x1536xbf16, #tpu.memory_space<vmem>>, vector<8x128xbf16>
    tpu.vector_store %arg5[%c0_47, %c384], %56 {strides = array<i32>} : memref<64x1536xbf16, #tpu.memory_space<vmem>>, vector<8x128xbf16>,
    %58 = vector.extract_strided_slice %55 {offsets = [0, 1], sizes = [8, 128], strides = [1, 1]} : vector<8x135xbf16> to vector<8x128xbf16>
    %c8_48 = arith.constant 8 : index
    %c384_49 = arith.constant 384 : index
    %59 = vector.load %arg5[%c8_48, %c384_49] : memref<64x1536xbf16, #tpu.memory_space<vmem>>, vector<8x128xbf16>
    tpu.vector_store %arg5[%c8_48, %c384_49], %58 {strides = array<i32>} : memref<64x1536xbf16, #tpu.memory_space<vmem>>, vector<8x128xbf16>,
    %60 = vector.extract_strided_slice %55 {offsets = [0, 2], sizes = [8, 128], strides = [1, 1]} : vector<8x135xbf16> to vector<8x128xbf16>
    %c16_50 = arith.constant 16 : index
    %c384_51 = arith.constant 384 : index
    %61 = vector.load %arg5[%c16_50, %c384_51] : memref<64x1536xbf16, #tpu.memory_space<vmem>>, vector<8x128xbf16>
    tpu.vector_store %arg5[%c16_50, %c384_51], %60 {strides = array<i32>} : memref<64x1536xbf16, #tpu.memory_space<vmem>>, vector<8x128xbf16>,
    %62 = vector.extract_strided_slice %55 {offsets = [0, 3], sizes = [8, 128], strides = [1, 1]} : vector<8x135xbf16> to vector<8x128xbf16>
    %c24_52 = arith.constant 24 : index
    %c384_53 = arith.constant 384 : index
    %63 = vector.load %arg5[%c24_52, %c384_53] : memref<64x1536xbf16, #tpu.memory_space<vmem>>, vector<8x128xbf16>
    tpu.vector_store %arg5[%c24_52, %c384_53], %62 {strides = array<i32>} : memref<64x1536xbf16, #tpu.memory_space<vmem>>, vector<8x128xbf16>,
    %64 = vector.extract_strided_slice %55 {offsets = [0, 4], sizes = [8, 128], strides = [1, 1]} : vector<8x135xbf16> to vector<8x128xbf16>
    %c32_54 = arith.constant 32 : index
    %c384_55 = arith.constant 384 : index
    %65 = vector.load %arg5[%c32_54, %c384_55] : memref<64x1536xbf16, #tpu.memory_space<vmem>>, vector<8x128xbf16>
    tpu.vector_store %arg5[%c32_54, %c384_55], %64 {strides = array<i32>} : memref<64x1536xbf16, #tpu.memory_space<vmem>>, vector<8x128xbf16>,
    %66 = vector.extract_strided_slice %55 {offsets = [0, 5], sizes = [8, 128], strides = [1, 1]} : vector<8x135xbf16> to vector<8x128xbf16>
    %c40_56 = arith.constant 40 : index
    %c384_57 = arith.constant 384 : index
    %67 = vector.load %arg5[%c40_56, %c384_57] : memref<64x1536xbf16, #tpu.memory_space<vmem>>, vector<8x128xbf16>
    tpu.vector_store %arg5[%c40_56, %c384_57], %66 {strides = array<i32>} : memref<64x1536xbf16, #tpu.memory_space<vmem>>, vector<8x128xbf16>,
    %68 = vector.extract_strided_slice %55 {offsets = [0, 6], sizes = [8, 128], strides = [1, 1]} : vector<8x135xbf16> to vector<8x128xbf16>
    %c48_58 = arith.constant 48 : index
    %c384_59 = arith.constant 384 : index
    %69 = vector.load %arg5[%c48_58, %c384_59] : memref<64x1536xbf16, #tpu.memory_space<vmem>>, vector<8x128xbf16>
    tpu.vector_store %arg5[%c48_58, %c384_59], %68 {strides = array<i32>} : memref<64x1536xbf16, #tpu.memory_space<vmem>>, vector<8x128xbf16>,
    %70 = vector.extract_strided_slice %55 {offsets = [0, 7], sizes = [8, 128], strides = [1, 1]} : vector<8x135xbf16> to vector<8x128xbf16>
    %c56_60 = arith.constant 56 : index
    %c384_61 = arith.constant 384 : index
    %71 = vector.load %arg5[%c56_60, %c384_61] : memref<64x1536xbf16, #tpu.memory_space<vmem>>, vector<8x128xbf16>
    tpu.vector_store %arg5[%c56_60, %c384_61], %70 {strides = array<i32>} : memref<64x1536xbf16, #tpu.memory_space<vmem>>, vector<8x128xbf16>,
    %c0_62 = arith.constant 0 : index
    %c8_63 = arith.constant 8 : index
    %c0_64 = arith.constant 0 : index
    %72 = vector.load %arg1[%c0_62, %c8_63, %c0_64] : memref<1x30x135xbf16, #tpu.memory_space<vmem>>, vector<1x8x135xbf16>
    %73 = vector.shape_cast %72 : vector<1x8x135xbf16> to vector<8x135xbf16>
    %74 = vector.extract_strided_slice %73 {offsets = [0, 0], sizes = [8, 128], strides = [1, 1]} : vector<8x135xbf16> to vector<8x128xbf16>
    %c0_65 = arith.constant 0 : index
    %c512 = arith.constant 512 : index
    %75 = vector.load %arg5[%c0_65, %c512] : memref<64x1536xbf16, #tpu.memory_space<vmem>>, vector<8x128xbf16>
    tpu.vector_store %arg5[%c0_65, %c512], %74 {strides = array<i32>} : memref<64x1536xbf16, #tpu.memory_space<vmem>>, vector<8x128xbf16>,
    %76 = vector.extract_strided_slice %73 {offsets = [0, 1], sizes = [8, 128], strides = [1, 1]} : vector<8x135xbf16> to vector<8x128xbf16>
    %c8_66 = arith.constant 8 : index
    %c512_67 = arith.constant 512 : index
    %77 = vector.load %arg5[%c8_66, %c512_67] : memref<64x1536xbf16, #tpu.memory_space<vmem>>, vector<8x128xbf16>
    tpu.vector_store %arg5[%c8_66, %c512_67], %76 {strides = array<i32>} : memref<64x1536xbf16, #tpu.memory_space<vmem>>, vector<8x128xbf16>,
    %78 = vector.extract_strided_slice %73 {offsets = [0, 2], sizes = [8, 128], strides = [1, 1]} : vector<8x135xbf16> to vector<8x128xbf16>
    %c16_68 = arith.constant 16 : index
    %c512_69 = arith.constant 512 : index
    %79 = vector.load %arg5[%c16_68, %c512_69] : memref<64x1536xbf16, #tpu.memory_space<vmem>>, vector<8x128xbf16>
    tpu.vector_store %arg5[%c16_68, %c512_69], %78 {strides = array<i32>} : memref<64x1536xbf16, #tpu.memory_space<vmem>>, vector<8x128xbf16>,
    %80 = vector.extract_strided_slice %73 {offsets = [0, 3], sizes = [8, 128], strides = [1, 1]} : vector<8x135xbf16> to vector<8x128xbf16>
    %c24_70 = arith.constant 24 : index
    %c512_71 = arith.constant 512 : index
    %81 = vector.load %arg5[%c24_70, %c512_71] : memref<64x1536xbf16, #tpu.memory_space<vmem>>, vector<8x128xbf16>
    tpu.vector_store %arg5[%c24_70, %c512_71], %80 {strides = array<i32>} : memref<64x1536xbf16, #tpu.memory_space<vmem>>, vector<8x128xbf16>,
    %82 = vector.extract_strided_slice %73 {offsets = [0, 4], sizes = [8, 128], strides = [1, 1]} : vector<8x135xbf16> to vector<8x128xbf16>
    %c32_72 = arith.constant 32 : index
    %c512_73 = arith.constant 512 : index
    %83 = vector.load %arg5[%c32_72, %c512_73] : memref<64x1536xbf16, #tpu.memory_space<vmem>>, vector<8x128xbf16>
    tpu.vector_store %arg5[%c32_72, %c512_73], %82 {strides = array<i32>} : memref<64x1536xbf16, #tpu.memory_space<vmem>>, vector<8x128xbf16>,
    %84 = vector.extract_strided_slice %73 {offsets = [0, 5], sizes = [8, 128], strides = [1, 1]} : vector<8x135xbf16> to vector<8x128xbf16>
    %c40_74 = arith.constant 40 : index
    %c512_75 = arith.constant 512 : index
    %85 = vector.load %arg5[%c40_74, %c512_75] : memref<64x1536xbf16, #tpu.memory_space<vmem>>, vector<8x128xbf16>
    tpu.vector_store %arg5[%c40_74, %c512_75], %84 {strides = array<i32>} : memref<64x1536xbf16, #tpu.memory_space<vmem>>, vector<8x128xbf16>,
    %86 = vector.extract_strided_slice %73 {offsets = [0, 6], sizes = [8, 128], strides = [1, 1]} : vector<8x135xbf16> to vector<8x128xbf16>
    %c48_76 = arith.constant 48 : index
    %c512_77 = arith.constant 512 : index
    %87 = vector.load %arg5[%c48_76, %c512_77] : memref<64x1536xbf16, #tpu.memory_space<vmem>>, vector<8x128xbf16>
    tpu.vector_store %arg5[%c48_76, %c512_77], %86 {strides = array<i32>} : memref<64x1536xbf16, #tpu.memory_space<vmem>>, vector<8x128xbf16>,
    %88 = vector.extract_strided_slice %73 {offsets = [0, 7], sizes = [8, 128], strides = [1, 1]} : vector<8x135xbf16> to vector<8x128xbf16>
    %c56_78 = arith.constant 56 : index
    %c512_79 = arith.constant 512 : index
    %89 = vector.load %arg5[%c56_78, %c512_79] : memref<64x1536xbf16, #tpu.memory_space<vmem>>, vector<8x128xbf16>
    tpu.vector_store %arg5[%c56_78, %c512_79], %88 {strides = array<i32>} : memref<64x1536xbf16, #tpu.memory_space<vmem>>, vector<8x128xbf16>,
    %c0_80 = arith.constant 0 : index
    %c10 = arith.constant 10 : index
    %c0_81 = arith.constant 0 : index
    %90 = vector.load %arg1[%c0_80, %c10, %c0_81] : memref<1x30x135xbf16, #tpu.memory_space<vmem>>, vector<1x8x135xbf16>
    %91 = vector.shape_cast %90 : vector<1x8x135xbf16> to vector<8x135xbf16>
    %92 = vector.extract_strided_slice %91 {offsets = [0, 0], sizes = [8, 128], strides = [1, 1]} : vector<8x135xbf16> to vector<8x128xbf16>
    %c0_82 = arith.constant 0 : index
    %c640 = arith.constant 640 : index
    %93 = vector.load %arg5[%c0_82, %c640] : memref<64x1536xbf16, #tpu.memory_space<vmem>>, vector<8x128xbf16>
    tpu.vector_store %arg5[%c0_82, %c640], %92 {strides = array<i32>} : memref<64x1536xbf16, #tpu.memory_space<vmem>>, vector<8x128xbf16>,
    %94 = vector.extract_strided_slice %91 {offsets = [0, 1], sizes = [8, 128], strides = [1, 1]} : vector<8x135xbf16> to vector<8x128xbf16>
    %c8_83 = arith.constant 8 : index
    %c640_84 = arith.constant 640 : index
    %95 = vector.load %arg5[%c8_83, %c640_84] : memref<64x1536xbf16, #tpu.memory_space<vmem>>, vector<8x128xbf16>
    tpu.vector_store %arg5[%c8_83, %c640_84], %94 {strides = array<i32>} : memref<64x1536xbf16, #tpu.memory_space<vmem>>, vector<8x128xbf16>,
    %96 = vector.extract_strided_slice %91 {offsets = [0, 2], sizes = [8, 128], strides = [1, 1]} : vector<8x135xbf16> to vector<8x128xbf16>
    %c16_85 = arith.constant 16 : index
    %c640_86 = arith.constant 640 : index
    %97 = vector.load %arg5[%c16_85, %c640_86] : memref<64x1536xbf16, #tpu.memory_space<vmem>>, vector<8x128xbf16>
    tpu.vector_store %arg5[%c16_85, %c640_86], %96 {strides = array<i32>} : memref<64x1536xbf16, #tpu.memory_space<vmem>>, vector<8x128xbf16>,
    %98 = vector.extract_strided_slice %91 {offsets = [0, 3], sizes = [8, 128], strides = [1, 1]} : vector<8x135xbf16> to vector<8x128xbf16>
    %c24_87 = arith.constant 24 : index
    %c640_88 = arith.constant 640 : index
    %99 = vector.load %arg5[%c24_87, %c640_88] : memref<64x1536xbf16, #tpu.memory_space<vmem>>, vector<8x128xbf16>
    tpu.vector_store %arg5[%c24_87, %c640_88], %98 {strides = array<i32>} : memref<64x1536xbf16, #tpu.memory_space<vmem>>, vector<8x128xbf16>,
    %100 = vector.extract_strided_slice %91 {offsets = [0, 4], sizes = [8, 128], strides = [1, 1]} : vector<8x135xbf16> to vector<8x128xbf16>
    %c32_89 = arith.constant 32 : index
    %c640_90 = arith.constant 640 : index
    %101 = vector.load %arg5[%c32_89, %c640_90] : memref<64x1536xbf16, #tpu.memory_space<vmem>>, vector<8x128xbf16>
    tpu.vector_store %arg5[%c32_89, %c640_90], %100 {strides = array<i32>} : memref<64x1536xbf16, #tpu.memory_space<vmem>>, vector<8x128xbf16>,
    %102 = vector.extract_strided_slice %91 {offsets = [0, 5], sizes = [8, 128], strides = [1, 1]} : vector<8x135xbf16> to vector<8x128xbf16>
    %c40_91 = arith.constant 40 : index
    %c640_92 = arith.constant 640 : index
    %103 = vector.load %arg5[%c40_91, %c640_92] : memref<64x1536xbf16, #tpu.memory_space<vmem>>, vector<8x128xbf16>
    tpu.vector_store %arg5[%c40_91, %c640_92], %102 {strides = array<i32>} : memref<64x1536xbf16, #tpu.memory_space<vmem>>, vector<8x128xbf16>,
    %104 = vector.extract_strided_slice %91 {offsets = [0, 6], sizes = [8, 128], strides = [1, 1]} : vector<8x135xbf16> to vector<8x128xbf16>
    %c48_93 = arith.constant 48 : index
    %c640_94 = arith.constant 640 : index
    %105 = vector.load %arg5[%c48_93, %c640_94] : memref<64x1536xbf16, #tpu.memory_space<vmem>>, vector<8x128xbf16>
    tpu.vector_store %arg5[%c48_93, %c640_94], %104 {strides = array<i32>} : memref<64x1536xbf16, #tpu.memory_space<vmem>>, vector<8x128xbf16>,
    %106 = vector.extract_strided_slice %91 {offsets = [0, 7], sizes = [8, 128], strides = [1, 1]} : vector<8x135xbf16> to vector<8x128xbf16>
    %c56_95 = arith.constant 56 : index
    %c640_96 = arith.constant 640 : index
    %107 = vector.load %arg5[%c56_95, %c640_96] : memref<64x1536xbf16, #tpu.memory_space<vmem>>, vector<8x128xbf16>
    tpu.vector_store %arg5[%c56_95, %c640_96], %106 {strides = array<i32>} : memref<64x1536xbf16, #tpu.memory_space<vmem>>, vector<8x128xbf16>,
    %c0_97 = arith.constant 0 : index
    %c12 = arith.constant 12 : index
    %c0_98 = arith.constant 0 : index
    %108 = vector.load %arg1[%c0_97, %c12, %c0_98] : memref<1x30x135xbf16, #tpu.memory_space<vmem>>, vector<1x8x135xbf16>
    %109 = vector.shape_cast %108 : vector<1x8x135xbf16> to vector<8x135xbf16>
    %110 = vector.extract_strided_slice %109 {offsets = [0, 0], sizes = [8, 128], strides = [1, 1]} : vector<8x135xbf16> to vector<8x128xbf16>
    %c0_99 = arith.constant 0 : index
    %c768 = arith.constant 768 : index
    %111 = vector.load %arg5[%c0_99, %c768] : memref<64x1536xbf16, #tpu.memory_space<vmem>>, vector<8x128xbf16>
    tpu.vector_store %arg5[%c0_99, %c768], %110 {strides = array<i32>} : memref<64x1536xbf16, #tpu.memory_space<vmem>>, vector<8x128xbf16>,
    %112 = vector.extract_strided_slice %109 {offsets = [0, 1], sizes = [8, 128], strides = [1, 1]} : vector<8x135xbf16> to vector<8x128xbf16>
    %c8_100 = arith.constant 8 : index
    %c768_101 = arith.constant 768 : index
    %113 = vector.load %arg5[%c8_100, %c768_101] : memref<64x1536xbf16, #tpu.memory_space<vmem>>, vector<8x128xbf16>
    tpu.vector_store %arg5[%c8_100, %c768_101], %112 {strides = array<i32>} : memref<64x1536xbf16, #tpu.memory_space<vmem>>, vector<8x128xbf16>,
    %114 = vector.extract_strided_slice %109 {offsets = [0, 2], sizes = [8, 128], strides = [1, 1]} : vector<8x135xbf16> to vector<8x128xbf16>
    %c16_102 = arith.constant 16 : index
    %c768_103 = arith.constant 768 : index
    %115 = vector.load %arg5[%c16_102, %c768_103] : memref<64x1536xbf16, #tpu.memory_space<vmem>>, vector<8x128xbf16>
    tpu.vector_store %arg5[%c16_102, %c768_103], %114 {strides = array<i32>} : memref<64x1536xbf16, #tpu.memory_space<vmem>>, vector<8x128xbf16>,
    %116 = vector.extract_strided_slice %109 {offsets = [0, 3], sizes = [8, 128], strides = [1, 1]} : vector<8x135xbf16> to vector<8x128xbf16>
    %c24_104 = arith.constant 24 : index
    %c768_105 = arith.constant 768 : index
    %117 = vector.load %arg5[%c24_104, %c768_105] : memref<64x1536xbf16, #tpu.memory_space<vmem>>, vector<8x128xbf16>
    tpu.vector_store %arg5[%c24_104, %c768_105], %116 {strides = array<i32>} : memref<64x1536xbf16, #tpu.memory_space<vmem>>, vector<8x128xbf16>,
    %118 = vector.extract_strided_slice %109 {offsets = [0, 4], sizes = [8, 128], strides = [1, 1]} : vector<8x135xbf16> to vector<8x128xbf16>
    %c32_106 = arith.constant 32 : index
    %c768_107 = arith.constant 768 : index
    %119 = vector.load %arg5[%c32_106, %c768_107] : memref<64x1536xbf16, #tpu.memory_space<vmem>>, vector<8x128xbf16>
    tpu.vector_store %arg5[%c32_106, %c768_107], %118 {strides = array<i32>} : memref<64x1536xbf16, #tpu.memory_space<vmem>>, vector<8x128xbf16>,
    %120 = vector.extract_strided_slice %109 {offsets = [0, 5], sizes = [8, 128], strides = [1, 1]} : vector<8x135xbf16> to vector<8x128xbf16>
    %c40_108 = arith.constant 40 : index
    %c768_109 = arith.constant 768 : index
    %121 = vector.load %arg5[%c40_108, %c768_109] : memref<64x1536xbf16, #tpu.memory_space<vmem>>, vector<8x128xbf16>
    tpu.vector_store %arg5[%c40_108, %c768_109], %120 {strides = array<i32>} : memref<64x1536xbf16, #tpu.memory_space<vmem>>, vector<8x128xbf16>,
    %122 = vector.extract_strided_slice %109 {offsets = [0, 6], sizes = [8, 128], strides = [1, 1]} : vector<8x135xbf16> to vector<8x128xbf16>
    %c48_110 = arith.constant 48 : index
    %c768_111 = arith.constant 768 : index
    %123 = vector.load %arg5[%c48_110, %c768_111] : memref<64x1536xbf16, #tpu.memory_space<vmem>>, vector<8x128xbf16>
    tpu.vector_store %arg5[%c48_110, %c768_111], %122 {strides = array<i32>} : memref<64x1536xbf16, #tpu.memory_space<vmem>>, vector<8x128xbf16>,
    %124 = vector.extract_strided_slice %109 {offsets = [0, 7], sizes = [8, 128], strides = [1, 1]} : vector<8x135xbf16> to vector<8x128xbf16>
    %c56_112 = arith.constant 56 : index
    %c768_113 = arith.constant 768 : index
    %125 = vector.load %arg5[%c56_112, %c768_113] : memref<64x1536xbf16, #tpu.memory_space<vmem>>, vector<8x128xbf16>
    tpu.vector_store %arg5[%c56_112, %c768_113], %124 {strides = array<i32>} : memref<64x1536xbf16, #tpu.memory_space<vmem>>, vector<8x128xbf16>,
    %c0_114 = arith.constant 0 : index
    %c14 = arith.constant 14 : index
    %c0_115 = arith.constant 0 : index
    %126 = vector.load %arg1[%c0_114, %c14, %c0_115] : memref<1x30x135xbf16, #tpu.memory_space<vmem>>, vector<1x8x135xbf16>
    %127 = vector.shape_cast %126 : vector<1x8x135xbf16> to vector<8x135xbf16>
    %128 = vector.extract_strided_slice %127 {offsets = [0, 0], sizes = [8, 128], strides = [1, 1]} : vector<8x135xbf16> to vector<8x128xbf16>
    %c0_116 = arith.constant 0 : index
    %c896 = arith.constant 896 : index
    %129 = vector.load %arg5[%c0_116, %c896] : memref<64x1536xbf16, #tpu.memory_space<vmem>>, vector<8x128xbf16>
    tpu.vector_store %arg5[%c0_116, %c896], %128 {strides = array<i32>} : memref<64x1536xbf16, #tpu.memory_space<vmem>>, vector<8x128xbf16>,
    %130 = vector.extract_strided_slice %127 {offsets = [0, 1], sizes = [8, 128], strides = [1, 1]} : vector<8x135xbf16> to vector<8x128xbf16>
    %c8_117 = arith.constant 8 : index
    %c896_118 = arith.constant 896 : index
    %131 = vector.load %arg5[%c8_117, %c896_118] : memref<64x1536xbf16, #tpu.memory_space<vmem>>, vector<8x128xbf16>
    tpu.vector_store %arg5[%c8_117, %c896_118], %130 {strides = array<i32>} : memref<64x1536xbf16, #tpu.memory_space<vmem>>, vector<8x128xbf16>,
    %132 = vector.extract_strided_slice %127 {offsets = [0, 2], sizes = [8, 128], strides = [1, 1]} : vector<8x135xbf16> to vector<8x128xbf16>
    %c16_119 = arith.constant 16 : index
    %c896_120 = arith.constant 896 : index
    %133 = vector.load %arg5[%c16_119, %c896_120] : memref<64x1536xbf16, #tpu.memory_space<vmem>>, vector<8x128xbf16>
    tpu.vector_store %arg5[%c16_119, %c896_120], %132 {strides = array<i32>} : memref<64x1536xbf16, #tpu.memory_space<vmem>>, vector<8x128xbf16>,
    %134 = vector.extract_strided_slice %127 {offsets = [0, 3], sizes = [8, 128], strides = [1, 1]} : vector<8x135xbf16> to vector<8x128xbf16>
    %c24_121 = arith.constant 24 : index
    %c896_122 = arith.constant 896 : index
    %135 = vector.load %arg5[%c24_121, %c896_122] : memref<64x1536xbf16, #tpu.memory_space<vmem>>, vector<8x128xbf16>
    tpu.vector_store %arg5[%c24_121, %c896_122], %134 {strides = array<i32>} : memref<64x1536xbf16, #tpu.memory_space<vmem>>, vector<8x128xbf16>,
    %136 = vector.extract_strided_slice %127 {offsets = [0, 4], sizes = [8, 128], strides = [1, 1]} : vector<8x135xbf16> to vector<8x128xbf16>
    %c32_123 = arith.constant 32 : index
    %c896_124 = arith.constant 896 : index
    %137 = vector.load %arg5[%c32_123, %c896_124] : memref<64x1536xbf16, #tpu.memory_space<vmem>>, vector<8x128xbf16>
    tpu.vector_store %arg5[%c32_123, %c896_124], %136 {strides = array<i32>} : memref<64x1536xbf16, #tpu.memory_space<vmem>>, vector<8x128xbf16>,
    %138 = vector.extract_strided_slice %127 {offsets = [0, 5], sizes = [8, 128], strides = [1, 1]} : vector<8x135xbf16> to vector<8x128xbf16>
    %c40_125 = arith.constant 40 : index
    %c896_126 = arith.constant 896 : index
    %139 = vector.load %arg5[%c40_125, %c896_126] : memref<64x1536xbf16, #tpu.memory_space<vmem>>, vector<8x128xbf16>
    tpu.vector_store %arg5[%c40_125, %c896_126], %138 {strides = array<i32>} : memref<64x1536xbf16, #tpu.memory_space<vmem>>, vector<8x128xbf16>,
    %140 = vector.extract_strided_slice %127 {offsets = [0, 6], sizes = [8, 128], strides = [1, 1]} : vector<8x135xbf16> to vector<8x128xbf16>
    %c48_127 = arith.constant 48 : index
    %c896_128 = arith.constant 896 : index
    %141 = vector.load %arg5[%c48_127, %c896_128] : memref<64x1536xbf16, #tpu.memory_space<vmem>>, vector<8x128xbf16>
    tpu.vector_store %arg5[%c48_127, %c896_128], %140 {strides = array<i32>} : memref<64x1536xbf16, #tpu.memory_space<vmem>>, vector<8x128xbf16>,
    %142 = vector.extract_strided_slice %127 {offsets = [0, 7], sizes = [8, 128], strides = [1, 1]} : vector<8x135xbf16> to vector<8x128xbf16>
    %c56_129 = arith.constant 56 : index
    %c896_130 = arith.constant 896 : index
    %143 = vector.load %arg5[%c56_129, %c896_130] : memref<64x1536xbf16, #tpu.memory_space<vmem>>, vector<8x128xbf16>
    tpu.vector_store %arg5[%c56_129, %c896_130], %142 {strides = array<i32>} : memref<64x1536xbf16, #tpu.memory_space<vmem>>, vector<8x128xbf16>,
    %c0_131 = arith.constant 0 : index
    %c16_132 = arith.constant 16 : index
    %c0_133 = arith.constant 0 : index
    %144 = vector.load %arg1[%c0_131, %c16_132, %c0_133] : memref<1x30x135xbf16, #tpu.memory_space<vmem>>, vector<1x8x135xbf16>
    %145 = vector.shape_cast %144 : vector<1x8x135xbf16> to vector<8x135xbf16>
    %146 = vector.extract_strided_slice %145 {offsets = [0, 0], sizes = [8, 128], strides = [1, 1]} : vector<8x135xbf16> to vector<8x128xbf16>
    %c0_134 = arith.constant 0 : index
    %c1024 = arith.constant 1024 : index
    %147 = vector.load %arg5[%c0_134, %c1024] : memref<64x1536xbf16, #tpu.memory_space<vmem>>, vector<8x128xbf16>
    tpu.vector_store %arg5[%c0_134, %c1024], %146 {strides = array<i32>} : memref<64x1536xbf16, #tpu.memory_space<vmem>>, vector<8x128xbf16>,
    %148 = vector.extract_strided_slice %145 {offsets = [0, 1], sizes = [8, 128], strides = [1, 1]} : vector<8x135xbf16> to vector<8x128xbf16>
    %c8_135 = arith.constant 8 : index
    %c1024_136 = arith.constant 1024 : index
    %149 = vector.load %arg5[%c8_135, %c1024_136] : memref<64x1536xbf16, #tpu.memory_space<vmem>>, vector<8x128xbf16>
    tpu.vector_store %arg5[%c8_135, %c1024_136], %148 {strides = array<i32>} : memref<64x1536xbf16, #tpu.memory_space<vmem>>, vector<8x128xbf16>,
    %150 = vector.extract_strided_slice %145 {offsets = [0, 2], sizes = [8, 128], strides = [1, 1]} : vector<8x135xbf16> to vector<8x128xbf16>
    %c16_137 = arith.constant 16 : index
    %c1024_138 = arith.constant 1024 : index
    %151 = vector.load %arg5[%c16_137, %c1024_138] : memref<64x1536xbf16, #tpu.memory_space<vmem>>, vector<8x128xbf16>
    tpu.vector_store %arg5[%c16_137, %c1024_138], %150 {strides = array<i32>} : memref<64x1536xbf16, #tpu.memory_space<vmem>>, vector<8x128xbf16>,
    %152 = vector.extract_strided_slice %145 {offsets = [0, 3], sizes = [8, 128], strides = [1, 1]} : vector<8x135xbf16> to vector<8x128xbf16>
    %c24_139 = arith.constant 24 : index
    %c1024_140 = arith.constant 1024 : index
    %153 = vector.load %arg5[%c24_139, %c1024_140] : memref<64x1536xbf16, #tpu.memory_space<vmem>>, vector<8x128xbf16>
    tpu.vector_store %arg5[%c24_139, %c1024_140], %152 {strides = array<i32>} : memref<64x1536xbf16, #tpu.memory_space<vmem>>, vector<8x128xbf16>,
    %154 = vector.extract_strided_slice %145 {offsets = [0, 4], sizes = [8, 128], strides = [1, 1]} : vector<8x135xbf16> to vector<8x128xbf16>
    %c32_141 = arith.constant 32 : index
    %c1024_142 = arith.constant 1024 : index
    %155 = vector.load %arg5[%c32_141, %c1024_142] : memref<64x1536xbf16, #tpu.memory_space<vmem>>, vector<8x128xbf16>
    tpu.vector_store %arg5[%c32_141, %c1024_142], %154 {strides = array<i32>} : memref<64x1536xbf16, #tpu.memory_space<vmem>>, vector<8x128xbf16>,
    %156 = vector.extract_strided_slice %145 {offsets = [0, 5], sizes = [8, 128], strides = [1, 1]} : vector<8x135xbf16> to vector<8x128xbf16>
    %c40_143 = arith.constant 40 : index
    %c1024_144 = arith.constant 1024 : index
    %157 = vector.load %arg5[%c40_143, %c1024_144] : memref<64x1536xbf16, #tpu.memory_space<vmem>>, vector<8x128xbf16>
    tpu.vector_store %arg5[%c40_143, %c1024_144], %156 {strides = array<i32>} : memref<64x1536xbf16, #tpu.memory_space<vmem>>, vector<8x128xbf16>,
    %158 = vector.extract_strided_slice %145 {offsets = [0, 6], sizes = [8, 128], strides = [1, 1]} : vector<8x135xbf16> to vector<8x128xbf16>
    %c48_145 = arith.constant 48 : index
    %c1024_146 = arith.constant 1024 : index
    %159 = vector.load %arg5[%c48_145, %c1024_146] : memref<64x1536xbf16, #tpu.memory_space<vmem>>, vector<8x128xbf16>
    tpu.vector_store %arg5[%c48_145, %c1024_146], %158 {strides = array<i32>} : memref<64x1536xbf16, #tpu.memory_space<vmem>>, vector<8x128xbf16>,
    %160 = vector.extract_strided_slice %145 {offsets = [0, 7], sizes = [8, 128], strides = [1, 1]} : vector<8x135xbf16> to vector<8x128xbf16>
    %c56_147 = arith.constant 56 : index
    %c1024_148 = arith.constant 1024 : index
    %161 = vector.load %arg5[%c56_147, %c1024_148] : memref<64x1536xbf16, #tpu.memory_space<vmem>>, vector<8x128xbf16>
    tpu.vector_store %arg5[%c56_147, %c1024_148], %160 {strides = array<i32>} : memref<64x1536xbf16, #tpu.memory_space<vmem>>, vector<8x128xbf16>,
    %c0_149 = arith.constant 0 : index
    %c18 = arith.constant 18 : index
    %c0_150 = arith.constant 0 : index
    %162 = vector.load %arg1[%c0_149, %c18, %c0_150] : memref<1x30x135xbf16, #tpu.memory_space<vmem>>, vector<1x8x135xbf16>
    %163 = vector.shape_cast %162 : vector<1x8x135xbf16> to vector<8x135xbf16>
    %164 = vector.extract_strided_slice %163 {offsets = [0, 0], sizes = [8, 128], strides = [1, 1]} : vector<8x135xbf16> to vector<8x128xbf16>
    %c0_151 = arith.constant 0 : index
    %c1152 = arith.constant 1152 : index
    %165 = vector.load %arg5[%c0_151, %c1152] : memref<64x1536xbf16, #tpu.memory_space<vmem>>, vector<8x128xbf16>
    tpu.vector_store %arg5[%c0_151, %c1152], %164 {strides = array<i32>} : memref<64x1536xbf16, #tpu.memory_space<vmem>>, vector<8x128xbf16>,
    %166 = vector.extract_strided_slice %163 {offsets = [0, 1], sizes = [8, 128], strides = [1, 1]} : vector<8x135xbf16> to vector<8x128xbf16>
    %c8_152 = arith.constant 8 : index
    %c1152_153 = arith.constant 1152 : index
    %167 = vector.load %arg5[%c8_152, %c1152_153] : memref<64x1536xbf16, #tpu.memory_space<vmem>>, vector<8x128xbf16>
    tpu.vector_store %arg5[%c8_152, %c1152_153], %166 {strides = array<i32>} : memref<64x1536xbf16, #tpu.memory_space<vmem>>, vector<8x128xbf16>,
    %168 = vector.extract_strided_slice %163 {offsets = [0, 2], sizes = [8, 128], strides = [1, 1]} : vector<8x135xbf16> to vector<8x128xbf16>
    %c16_154 = arith.constant 16 : index
    %c1152_155 = arith.constant 1152 : index
    %169 = vector.load %arg5[%c16_154, %c1152_155] : memref<64x1536xbf16, #tpu.memory_space<vmem>>, vector<8x128xbf16>
    tpu.vector_store %arg5[%c16_154, %c1152_155], %168 {strides = array<i32>} : memref<64x1536xbf16, #tpu.memory_space<vmem>>, vector<8x128xbf16>,
    %170 = vector.extract_strided_slice %163 {offsets = [0, 3], sizes = [8, 128], strides = [1, 1]} : vector<8x135xbf16> to vector<8x128xbf16>
    %c24_156 = arith.constant 24 : index
    %c1152_157 = arith.constant 1152 : index
    %171 = vector.load %arg5[%c24_156, %c1152_157] : memref<64x1536xbf16, #tpu.memory_space<vmem>>, vector<8x128xbf16>
    tpu.vector_store %arg5[%c24_156, %c1152_157], %170 {strides = array<i32>} : memref<64x1536xbf16, #tpu.memory_space<vmem>>, vector<8x128xbf16>,
    %172 = vector.extract_strided_slice %163 {offsets = [0, 4], sizes = [8, 128], strides = [1, 1]} : vector<8x135xbf16> to vector<8x128xbf16>
    %c32_158 = arith.constant 32 : index
    %c1152_159 = arith.constant 1152 : index
    %173 = vector.load %arg5[%c32_158, %c1152_159] : memref<64x1536xbf16, #tpu.memory_space<vmem>>, vector<8x128xbf16>
    tpu.vector_store %arg5[%c32_158, %c1152_159], %172 {strides = array<i32>} : memref<64x1536xbf16, #tpu.memory_space<vmem>>, vector<8x128xbf16>,
    %174 = vector.extract_strided_slice %163 {offsets = [0, 5], sizes = [8, 128], strides = [1, 1]} : vector<8x135xbf16> to vector<8x128xbf16>
    %c40_160 = arith.constant 40 : index
    %c1152_161 = arith.constant 1152 : index
    %175 = vector.load %arg5[%c40_160, %c1152_161] : memref<64x1536xbf16, #tpu.memory_space<vmem>>, vector<8x128xbf16>
    tpu.vector_store %arg5[%c40_160, %c1152_161], %174 {strides = array<i32>} : memref<64x1536xbf16, #tpu.memory_space<vmem>>, vector<8x128xbf16>,
    %176 = vector.extract_strided_slice %163 {offsets = [0, 6], sizes = [8, 128], strides = [1, 1]} : vector<8x135xbf16> to vector<8x128xbf16>
    %c48_162 = arith.constant 48 : index
    %c1152_163 = arith.constant 1152 : index
    %177 = vector.load %arg5[%c48_162, %c1152_163] : memref<64x1536xbf16, #tpu.memory_space<vmem>>, vector<8x128xbf16>
    tpu.vector_store %arg5[%c48_162, %c1152_163], %176 {strides = array<i32>} : memref<64x1536xbf16, #tpu.memory_space<vmem>>, vector<8x128xbf16>,
    %178 = vector.extract_strided_slice %163 {offsets = [0, 7], sizes = [8, 128], strides = [1, 1]} : vector<8x135xbf16> to vector<8x128xbf16>
    %c56_164 = arith.constant 56 : index
    %c1152_165 = arith.constant 1152 : index
    %179 = vector.load %arg5[%c56_164, %c1152_165] : memref<64x1536xbf16, #tpu.memory_space<vmem>>, vector<8x128xbf16>
    tpu.vector_store %arg5[%c56_164, %c1152_165], %178 {strides = array<i32>} : memref<64x1536xbf16, #tpu.memory_space<vmem>>, vector<8x128xbf16>,
    %c0_166 = arith.constant 0 : index
    %c20 = arith.constant 20 : index
    %c0_167 = arith.constant 0 : index
    %180 = vector.load %arg1[%c0_166, %c20, %c0_167] : memref<1x30x135xbf16, #tpu.memory_space<vmem>>, vector<1x8x135xbf16>
    %181 = vector.shape_cast %180 : vector<1x8x135xbf16> to vector<8x135xbf16>
    %182 = vector.extract_strided_slice %181 {offsets = [0, 0], sizes = [8, 128], strides = [1, 1]} : vector<8x135xbf16> to vector<8x128xbf16>
    %c0_168 = arith.constant 0 : index
    %c1280 = arith.constant 1280 : index
    %183 = vector.load %arg5[%c0_168, %c1280] : memref<64x1536xbf16, #tpu.memory_space<vmem>>, vector<8x128xbf16>
    tpu.vector_store %arg5[%c0_168, %c1280], %182 {strides = array<i32>} : memref<64x1536xbf16, #tpu.memory_space<vmem>>, vector<8x128xbf16>,
    %184 = vector.extract_strided_slice %181 {offsets = [0, 1], sizes = [8, 128], strides = [1, 1]} : vector<8x135xbf16> to vector<8x128xbf16>
    %c8_169 = arith.constant 8 : index
    %c1280_170 = arith.constant 1280 : index
    %185 = vector.load %arg5[%c8_169, %c1280_170] : memref<64x1536xbf16, #tpu.memory_space<vmem>>, vector<8x128xbf16>
    tpu.vector_store %arg5[%c8_169, %c1280_170], %184 {strides = array<i32>} : memref<64x1536xbf16, #tpu.memory_space<vmem>>, vector<8x128xbf16>,
    %186 = vector.extract_strided_slice %181 {offsets = [0, 2], sizes = [8, 128], strides = [1, 1]} : vector<8x135xbf16> to vector<8x128xbf16>
    %c16_171 = arith.constant 16 : index
    %c1280_172 = arith.constant 1280 : index
    %187 = vector.load %arg5[%c16_171, %c1280_172] : memref<64x1536xbf16, #tpu.memory_space<vmem>>, vector<8x128xbf16>
    tpu.vector_store %arg5[%c16_171, %c1280_172], %186 {strides = array<i32>} : memref<64x1536xbf16, #tpu.memory_space<vmem>>, vector<8x128xbf16>,
    %188 = vector.extract_strided_slice %181 {offsets = [0, 3], sizes = [8, 128], strides = [1, 1]} : vector<8x135xbf16> to vector<8x128xbf16>
    %c24_173 = arith.constant 24 : index
    %c1280_174 = arith.constant 1280 : index
    %189 = vector.load %arg5[%c24_173, %c1280_174] : memref<64x1536xbf16, #tpu.memory_space<vmem>>, vector<8x128xbf16>
    tpu.vector_store %arg5[%c24_173, %c1280_174], %188 {strides = array<i32>} : memref<64x1536xbf16, #tpu.memory_space<vmem>>, vector<8x128xbf16>,
    %190 = vector.extract_strided_slice %181 {offsets = [0, 4], sizes = [8, 128], strides = [1, 1]} : vector<8x135xbf16> to vector<8x128xbf16>
    %c32_175 = arith.constant 32 : index
    %c1280_176 = arith.constant 1280 : index
    %191 = vector.load %arg5[%c32_175, %c1280_176] : memref<64x1536xbf16, #tpu.memory_space<vmem>>, vector<8x128xbf16>
    tpu.vector_store %arg5[%c32_175, %c1280_176], %190 {strides = array<i32>} : memref<64x1536xbf16, #tpu.memory_space<vmem>>, vector<8x128xbf16>,
    %192 = vector.extract_strided_slice %181 {offsets = [0, 5], sizes = [8, 128], strides = [1, 1]} : vector<8x135xbf16> to vector<8x128xbf16>
    %c40_177 = arith.constant 40 : index
    %c1280_178 = arith.constant 1280 : index
    %193 = vector.load %arg5[%c40_177, %c1280_178] : memref<64x1536xbf16, #tpu.memory_space<vmem>>, vector<8x128xbf16>
    tpu.vector_store %arg5[%c40_177, %c1280_178], %192 {strides = array<i32>} : memref<64x1536xbf16, #tpu.memory_space<vmem>>, vector<8x128xbf16>,
    %194 = vector.extract_strided_slice %181 {offsets = [0, 6], sizes = [8, 128], strides = [1, 1]} : vector<8x135xbf16> to vector<8x128xbf16>
    %c48_179 = arith.constant 48 : index
    %c1280_180 = arith.constant 1280 : index
    %195 = vector.load %arg5[%c48_179, %c1280_180] : memref<64x1536xbf16, #tpu.memory_space<vmem>>, vector<8x128xbf16>
    tpu.vector_store %arg5[%c48_179, %c1280_180], %194 {strides = array<i32>} : memref<64x1536xbf16, #tpu.memory_space<vmem>>, vector<8x128xbf16>,
    %196 = vector.extract_strided_slice %181 {offsets = [0, 7], sizes = [8, 128], strides = [1, 1]} : vector<8x135xbf16> to vector<8x128xbf16>
    %c56_181 = arith.constant 56 : index
    %c1280_182 = arith.constant 1280 : index
    %197 = vector.load %arg5[%c56_181, %c1280_182] : memref<64x1536xbf16, #tpu.memory_space<vmem>>, vector<8x128xbf16>
    tpu.vector_store %arg5[%c56_181, %c1280_182], %196 {strides = array<i32>} : memref<64x1536xbf16, #tpu.memory_space<vmem>>, vector<8x128xbf16>,
    %c0_183 = arith.constant 0 : index
    %c22 = arith.constant 22 : index
    %c0_184 = arith.constant 0 : index
    %198 = vector.load %arg1[%c0_183, %c22, %c0_184] : memref<1x30x135xbf16, #tpu.memory_space<vmem>>, vector<1x8x135xbf16>
    %199 = vector.shape_cast %198 : vector<1x8x135xbf16> to vector<8x135xbf16>
    %200 = vector.extract_strided_slice %199 {offsets = [0, 0], sizes = [8, 128], strides = [1, 1]} : vector<8x135xbf16> to vector<8x128xbf16>
    %c0_185 = arith.constant 0 : index
    %c1408 = arith.constant 1408 : index
    %201 = vector.load %arg5[%c0_185, %c1408] : memref<64x1536xbf16, #tpu.memory_space<vmem>>, vector<8x128xbf16>
    tpu.vector_store %arg5[%c0_185, %c1408], %200 {strides = array<i32>} : memref<64x1536xbf16, #tpu.memory_space<vmem>>, vector<8x128xbf16>,
    %202 = vector.extract_strided_slice %199 {offsets = [0, 1], sizes = [8, 128], strides = [1, 1]} : vector<8x135xbf16> to vector<8x128xbf16>
    %c8_186 = arith.constant 8 : index
    %c1408_187 = arith.constant 1408 : index
    %203 = vector.load %arg5[%c8_186, %c1408_187] : memref<64x1536xbf16, #tpu.memory_space<vmem>>, vector<8x128xbf16>
    tpu.vector_store %arg5[%c8_186, %c1408_187], %202 {strides = array<i32>} : memref<64x1536xbf16, #tpu.memory_space<vmem>>, vector<8x128xbf16>,
    %204 = vector.extract_strided_slice %199 {offsets = [0, 2], sizes = [8, 128], strides = [1, 1]} : vector<8x135xbf16> to vector<8x128xbf16>
    %c16_188 = arith.constant 16 : index
    %c1408_189 = arith.constant 1408 : index
    %205 = vector.load %arg5[%c16_188, %c1408_189] : memref<64x1536xbf16, #tpu.memory_space<vmem>>, vector<8x128xbf16>
    tpu.vector_store %arg5[%c16_188, %c1408_189], %204 {strides = array<i32>} : memref<64x1536xbf16, #tpu.memory_space<vmem>>, vector<8x128xbf16>,
    %206 = vector.extract_strided_slice %199 {offsets = [0, 3], sizes = [8, 128], strides = [1, 1]} : vector<8x135xbf16> to vector<8x128xbf16>
    %c24_190 = arith.constant 24 : index
    %c1408_191 = arith.constant 1408 : index
    %207 = vector.load %arg5[%c24_190, %c1408_191] : memref<64x1536xbf16, #tpu.memory_space<vmem>>, vector<8x128xbf16>
    tpu.vector_store %arg5[%c24_190, %c1408_191], %206 {strides = array<i32>} : memref<64x1536xbf16, #tpu.memory_space<vmem>>, vector<8x128xbf16>,
    %208 = vector.extract_strided_slice %199 {offsets = [0, 4], sizes = [8, 128], strides = [1, 1]} : vector<8x135xbf16> to vector<8x128xbf16>
    %c32_192 = arith.constant 32 : index
    %c1408_193 = arith.constant 1408 : index
    %209 = vector.load %arg5[%c32_192, %c1408_193] : memref<64x1536xbf16, #tpu.memory_space<vmem>>, vector<8x128xbf16>
    tpu.vector_store %arg5[%c32_192, %c1408_193], %208 {strides = array<i32>} : memref<64x1536xbf16, #tpu.memory_space<vmem>>, vector<8x128xbf16>,
    %210 = vector.extract_strided_slice %199 {offsets = [0, 5], sizes = [8, 128], strides = [1, 1]} : vector<8x135xbf16> to vector<8x128xbf16>
    %c40_194 = arith.constant 40 : index
    %c1408_195 = arith.constant 1408 : index
    %211 = vector.load %arg5[%c40_194, %c1408_195] : memref<64x1536xbf16, #tpu.memory_space<vmem>>, vector<8x128xbf16>
    tpu.vector_store %arg5[%c40_194, %c1408_195], %210 {strides = array<i32>} : memref<64x1536xbf16, #tpu.memory_space<vmem>>, vector<8x128xbf16>,
    %212 = vector.extract_strided_slice %199 {offsets = [0, 6], sizes = [8, 128], strides = [1, 1]} : vector<8x135xbf16> to vector<8x128xbf16>
    %c48_196 = arith.constant 48 : index
    %c1408_197 = arith.constant 1408 : index
    %213 = vector.load %arg5[%c48_196, %c1408_197] : memref<64x1536xbf16, #tpu.memory_space<vmem>>, vector<8x128xbf16>
    tpu.vector_store %arg5[%c48_196, %c1408_197], %212 {strides = array<i32>} : memref<64x1536xbf16, #tpu.memory_space<vmem>>, vector<8x128xbf16>,
    %214 = vector.extract_strided_slice %199 {offsets = [0, 7], sizes = [8, 128], strides = [1, 1]} : vector<8x135xbf16> to vector<8x128xbf16>
    %c56_198 = arith.constant 56 : index
    %c1408_199 = arith.constant 1408 : index
    %215 = vector.load %arg5[%c56_198, %c1408_199] : memref<64x1536xbf16, #tpu.memory_space<vmem>>, vector<8x128xbf16>
    tpu.vector_store %arg5[%c56_198, %c1408_199], %214 {strides = array<i32>} : memref<64x1536xbf16, #tpu.memory_space<vmem>>, vector<8x128xbf16>,
    %c0_200 = arith.constant 0 : index
    %c0_201 = arith.constant 0 : index
    %216 = vector.load %arg2[%c0_200, %c0_201] : memref<128x64xbf16, #tpu.memory_space<vmem>>, vector<128x64xbf16>
    %c0_202 = arith.constant 0 : index
    %c0_203 = arith.constant 0 : index
    %217 = vector.load %arg3[%c0_202, %c0_203] : memref<128x1xf32, #tpu.memory_space<vmem>>, vector<128x1xf32>
    %c0_204 = arith.constant 0 : index
    %c0_205 = arith.constant 0 : index
    %218 = vector.load %arg5[%c0_204, %c0_205] : memref<64x1536xbf16, #tpu.memory_space<vmem>>, vector<64x256xbf16>
    %cst = arith.constant dense<0.000000e+00> : vector<128x256xf32>
    %219 = tpu.matmul %216, %218, %cst {dimension_numbers = #tpu.dot_dimension_numbers<[1], [0], [0], [1], [0, 0, 1, 1], [], []>} : vector<128x64xbf16>, vector<64x256xbf16>, vector<128x256xf32> -> vector<128x256xf32>
    %220 = vector.broadcast %217 : vector<128x1xf32> to vector<128x256xf32>
    %221 = arith.addf %219, %220 : vector<128x256xf32>
    %cst_206 = arith.constant 0.000000e+00 : f32
    %222 = vector.broadcast %cst_206 : f32 to vector<128x256xf32>
    %223 = arith.cmpf ogt, %221, %222 : vector<128x256xf32>
    %cst_207 = arith.constant 0.00999999977 : f32
    %224 = vector.broadcast %cst_207 : f32 to vector<128x256xf32>
    %225 = arith.mulf %224, %221 : vector<128x256xf32>
    %226 = arith.select %223, %221, %225 : vector<128x256xi1>, vector<128x256xf32>
    %c0_208 = arith.constant 0 : index
    %c0_209 = arith.constant 0 : index
    %c0_210 = arith.constant 0 : index
    %227 = vector.load %arg4[%c0_208, %c0_209, %c0_210] : memref<1x128x1536xf32, #tpu.memory_space<vmem>>, vector<1x128x256xf32>
    %228 = vector.shape_cast %227 : vector<1x128x256xf32> to vector<128x256xf32>
    %229 = vector.shape_cast %226 : vector<128x256xf32> to vector<1x128x256xf32>
    tpu.vector_store %arg4[%c0_208, %c0_209, %c0_210], %229 {strides = array<i32>} : memref<1x128x1536xf32, #tpu.memory_space<vmem>>, vector<1x128x256xf32>,
    %c0_211 = arith.constant 0 : index
    %c256_212 = arith.constant 256 : index
    %230 = vector.load %arg5[%c0_211, %c256_212] : memref<64x1536xbf16, #tpu.memory_space<vmem>>, vector<64x256xbf16>
    %cst_213 = arith.constant dense<0.000000e+00> : vector<128x256xf32>
    %231 = tpu.matmul %216, %230, %cst_213 {dimension_numbers = #tpu.dot_dimension_numbers<[1], [0], [0], [1], [0, 0, 1, 1], [], []>} : vector<128x64xbf16>, vector<64x256xbf16>, vector<128x256xf32> -> vector<128x256xf32>
    %232 = vector.broadcast %217 : vector<128x1xf32> to vector<128x256xf32>
    %233 = arith.addf %231, %232 : vector<128x256xf32>
    %cst_214 = arith.constant 0.000000e+00 : f32
    %234 = vector.broadcast %cst_214 : f32 to vector<128x256xf32>
    %235 = arith.cmpf ogt, %233, %234 : vector<128x256xf32>
    %cst_215 = arith.constant 0.00999999977 : f32
    %236 = vector.broadcast %cst_215 : f32 to vector<128x256xf32>
    %237 = arith.mulf %236, %233 : vector<128x256xf32>
    %238 = arith.select %235, %233, %237 : vector<128x256xi1>, vector<128x256xf32>
    %c0_216 = arith.constant 0 : index
    %c0_217 = arith.constant 0 : index
    %c256_218 = arith.constant 256 : index
    %239 = vector.load %arg4[%c0_216, %c0_217, %c256_218] : memref<1x128x1536xf32, #tpu.memory_space<vmem>>, vector<1x128x256xf32>
    %240 = vector.shape_cast %239 : vector<1x128x256xf32> to vector<128x256xf32>
    %241 = vector.shape_cast %238 : vector<128x256xf32> to vector<1x128x256xf32>
    tpu.vector_store %arg4[%c0_216, %c0_217, %c256_218], %241 {strides = array<i32>} : memref<1x128x1536xf32, #tpu.memory_space<vmem>>, vector<1x128x256xf32>,
    %c0_219 = arith.constant 0 : index
    %c512_220 = arith.constant 512 : index
    %242 = vector.load %arg5[%c0_219, %c512_220] : memref<64x1536xbf16, #tpu.memory_space<vmem>>, vector<64x256xbf16>
    %cst_221 = arith.constant dense<0.000000e+00> : vector<128x256xf32>
    %243 = tpu.matmul %216, %242, %cst_221 {dimension_numbers = #tpu.dot_dimension_numbers<[1], [0], [0], [1], [0, 0, 1, 1], [], []>} : vector<128x64xbf16>, vector<64x256xbf16>, vector<128x256xf32> -> vector<128x256xf32>
    %244 = vector.broadcast %217 : vector<128x1xf32> to vector<128x256xf32>
    %245 = arith.addf %243, %244 : vector<128x256xf32>
    %cst_222 = arith.constant 0.000000e+00 : f32
    %246 = vector.broadcast %cst_222 : f32 to vector<128x256xf32>
    %247 = arith.cmpf ogt, %245, %246 : vector<128x256xf32>
    %cst_223 = arith.constant 0.00999999977 : f32
    %248 = vector.broadcast %cst_223 : f32 to vector<128x256xf32>
    %249 = arith.mulf %248, %245 : vector<128x256xf32>
    %250 = arith.select %247, %245, %249 : vector<128x256xi1>, vector<128x256xf32>
    %c0_224 = arith.constant 0 : index
    %c0_225 = arith.constant 0 : index
    %c512_226 = arith.constant 512 : index
    %251 = vector.load %arg4[%c0_224, %c0_225, %c512_226] : memref<1x128x1536xf32, #tpu.memory_space<vmem>>, vector<1x128x256xf32>
    %252 = vector.shape_cast %251 : vector<1x128x256xf32> to vector<128x256xf32>
    %253 = vector.shape_cast %250 : vector<128x256xf32> to vector<1x128x256xf32>
    tpu.vector_store %arg4[%c0_224, %c0_225, %c512_226], %253 {strides = array<i32>} : memref<1x128x1536xf32, #tpu.memory_space<vmem>>, vector<1x128x256xf32>,
    %c0_227 = arith.constant 0 : index
    %c768_228 = arith.constant 768 : index
    %254 = vector.load %arg5[%c0_227, %c768_228] : memref<64x1536xbf16, #tpu.memory_space<vmem>>, vector<64x256xbf16>
    %cst_229 = arith.constant dense<0.000000e+00> : vector<128x256xf32>
    %255 = tpu.matmul %216, %254, %cst_229 {dimension_numbers = #tpu.dot_dimension_numbers<[1], [0], [0], [1], [0, 0, 1, 1], [], []>} : vector<128x64xbf16>, vector<64x256xbf16>, vector<128x256xf32> -> vector<128x256xf32>
    %256 = vector.broadcast %217 : vector<128x1xf32> to vector<128x256xf32>
    %257 = arith.addf %255, %256 : vector<128x256xf32>
    %cst_230 = arith.constant 0.000000e+00 : f32
    %258 = vector.broadcast %cst_230 : f32 to vector<128x256xf32>
    %259 = arith.cmpf ogt, %257, %258 : vector<128x256xf32>
    %cst_231 = arith.constant 0.00999999977 : f32
    %260 = vector.broadcast %cst_231 : f32 to vector<128x256xf32>
    %261 = arith.mulf %260, %257 : vector<128x256xf32>
    %262 = arith.select %259, %257, %261 : vector<128x256xi1>, vector<128x256xf32>
    %c0_232 = arith.constant 0 : index
    %c0_233 = arith.constant 0 : index
    %c768_234 = arith.constant 768 : index
    %263 = vector.load %arg4[%c0_232, %c0_233, %c768_234] : memref<1x128x1536xf32, #tpu.memory_space<vmem>>, vector<1x128x256xf32>
    %264 = vector.shape_cast %263 : vector<1x128x256xf32> to vector<128x256xf32>
    %265 = vector.shape_cast %262 : vector<128x256xf32> to vector<1x128x256xf32>
    tpu.vector_store %arg4[%c0_232, %c0_233, %c768_234], %265 {strides = array<i32>} : memref<1x128x1536xf32, #tpu.memory_space<vmem>>, vector<1x128x256xf32>,
    %c0_235 = arith.constant 0 : index
    %c1024_236 = arith.constant 1024 : index
    %266 = vector.load %arg5[%c0_235, %c1024_236] : memref<64x1536xbf16, #tpu.memory_space<vmem>>, vector<64x256xbf16>
    %cst_237 = arith.constant dense<0.000000e+00> : vector<128x256xf32>
    %267 = tpu.matmul %216, %266, %cst_237 {dimension_numbers = #tpu.dot_dimension_numbers<[1], [0], [0], [1], [0, 0, 1, 1], [], []>} : vector<128x64xbf16>, vector<64x256xbf16>, vector<128x256xf32> -> vector<128x256xf32>
    %268 = vector.broadcast %217 : vector<128x1xf32> to vector<128x256xf32>
    %269 = arith.addf %267, %268 : vector<128x256xf32>
    %cst_238 = arith.constant 0.000000e+00 : f32
    %270 = vector.broadcast %cst_238 : f32 to vector<128x256xf32>
    %271 = arith.cmpf ogt, %269, %270 : vector<128x256xf32>
    %cst_239 = arith.constant 0.00999999977 : f32
    %272 = vector.broadcast %cst_239 : f32 to vector<128x256xf32>
    %273 = arith.mulf %272, %269 : vector<128x256xf32>
    %274 = arith.select %271, %269, %273 : vector<128x256xi1>, vector<128x256xf32>
    %c0_240 = arith.constant 0 : index
    %c0_241 = arith.constant 0 : index
    %c1024_242 = arith.constant 1024 : index
    %275 = vector.load %arg4[%c0_240, %c0_241, %c1024_242] : memref<1x128x1536xf32, #tpu.memory_space<vmem>>, vector<1x128x256xf32>
    %276 = vector.shape_cast %275 : vector<1x128x256xf32> to vector<128x256xf32>
    %277 = vector.shape_cast %274 : vector<128x256xf32> to vector<1x128x256xf32>
    tpu.vector_store %arg4[%c0_240, %c0_241, %c1024_242], %277 {strides = array<i32>} : memref<1x128x1536xf32, #tpu.memory_space<vmem>>, vector<1x128x256xf32>,
    %c0_243 = arith.constant 0 : index
    %c1280_244 = arith.constant 1280 : index
    %278 = vector.load %arg5[%c0_243, %c1280_244] : memref<64x1536xbf16, #tpu.memory_space<vmem>>, vector<64x256xbf16>
    %cst_245 = arith.constant dense<0.000000e+00> : vector<128x256xf32>
    %279 = tpu.matmul %216, %278, %cst_245 {dimension_numbers = #tpu.dot_dimension_numbers<[1], [0], [0], [1], [0, 0, 1, 1], [], []>} : vector<128x64xbf16>, vector<64x256xbf16>, vector<128x256xf32> -> vector<128x256xf32>
    %280 = vector.broadcast %217 : vector<128x1xf32> to vector<128x256xf32>
    %281 = arith.addf %279, %280 : vector<128x256xf32>
    %cst_246 = arith.constant 0.000000e+00 : f32
    %282 = vector.broadcast %cst_246 : f32 to vector<128x256xf32>
    %283 = arith.cmpf ogt, %281, %282 : vector<128x256xf32>
    %cst_247 = arith.constant 0.00999999977 : f32
    %284 = vector.broadcast %cst_247 : f32 to vector<128x256xf32>
    %285 = arith.mulf %284, %281 : vector<128x256xf32>
    %286 = arith.select %283, %281, %285 : vector<128x256xi1>, vector<128x256xf32>
    %c0_248 = arith.constant 0 : index
    %c0_249 = arith.constant 0 : index
    %c1280_250 = arith.constant 1280 : index
    %287 = vector.load %arg4[%c0_248, %c0_249, %c1280_250] : memref<1x128x1536xf32, #tpu.memory_space<vmem>>, vector<1x128x256xf32>
    %288 = vector.shape_cast %287 : vector<1x128x256xf32> to vector<128x256xf32>
    %289 = vector.shape_cast %286 : vector<128x256xf32> to vector<1x128x256xf32>
    tpu.vector_store %arg4[%c0_248, %c0_249, %c1280_250], %289 {strides = array<i32>} : memref<1x128x1536xf32, #tpu.memory_space<vmem>>, vector<1x128x256xf32>,
    return
  }
  func.func @transform_0(%arg0: i32) -> (i32, i32, i32) {
    %c0_i32 = arith.constant 0 : i32
    %c0_i32_0 = arith.constant 0 : i32
    %c0_i32_1 = arith.constant 0 : i32
    return %arg0, %c0_i32, %c0_i32_0 : i32, i32, i32
  }
  func.func @transform_1(%arg0: i32) -> (i32, i32) {
    %c0_i32 = arith.constant 0 : i32
    %c0_i32_0 = arith.constant 0 : i32
    %c0_i32_1 = arith.constant 0 : i32
    return %c0_i32, %c0_i32_0 : i32, i32
  }
  func.func @transform_2(%arg0: i32) -> (i32, i32) {
    %c0_i32 = arith.constant 0 : i32
    %c0_i32_0 = arith.constant 0 : i32
    %c0_i32_1 = arith.constant 0 : i32
    return %c0_i32, %c0_i32_0 : i32, i32
  }
  func.func @transform_3(%arg0: i32) -> (i32, i32, i32) {
    %c0_i32 = arith.constant 0 : i32
    %c0_i32_0 = arith.constant 0 : i32
    %c0_i32_1 = arith.constant 0 : i32
    return %arg0, %c0_i32, %c0_i32_0 : i32, i32, i32
  }
}

</mosaic_0001>

<llo_original>
// kernel: inconv_forward.1
$region0: #{inconv_forward.1}
  #allocation0 [shape = 'u32[]', space=smem, size = 0x4, offset = 0x4, fixed_abs, tag = 'smem constant byte address 0x4 - core index']
  #allocation1 [shape = 'u32[144,128]{1,0:T(1,128)}', space=vmem, size = 0x12000, scoped, tag = 'internal scratch']
  #allocation2 [shape = 'bf16[64,1536]{1,0:T(16,128)(2,1)}', space=vmem, size = 0x30000, scoped, tag = 'scratch operand']
  %s0 = inlined_call_operand.vmem [shape: bf16[2,30,135], index: 0, kind: input, shape index: {}]
  %s1 = inlined_call_operand.vmem [shape: bf16[128,64], index: 1, kind: input, shape index: {}]
  %s2 = inlined_call_operand.vmem [shape: f32[128,1], index: 2, kind: input, shape index: {}]
  %s3 = inlined_call_operand.vmem [shape: f32[2,128,1536], index: 3, kind: output, shape index: {}]
  %s4 = sld [smem:[#allocation0]]
  $region45: #{inconv_forward.1} parent=0
    _
  %s6 = ssub.s32 1, %s4
  %s7 = scalar_select 0, %s6, %s4
  loop: start=0, step=1, limit=4
  $region2: #{inconv_forward.1} parent=0 // loop_pre_header
    _
  $region3: #{inconv_forward.1} parent=0 // loop_header
    %s9 = sphi 0, %s13
    %p10 = scmp.ge.s32.totalorder %s9, 4
    %s19 = sphi 0, %s21
    %s22 = sphi 0, %s19
    %s23 = sphi 0, %s22
    %s39 = sphi 0, %s23
    %s43 = sphi 0, %s43
    %s45 = sphi 0, %s43
    %s46 = sphi 0, %s45
    %s60 = sphi 0, %s46
    %s64 = sphi 0, %s64
    %s66 = sphi 0, %s64
    %s67 = sphi 0, %s66
    %s81 = sphi 0, %s67
    %s87 = sphi 0, %s89
    %s90 = sphi 0, %s87
    %s91 = sphi 0, %s90
    %s107 = sphi 0, %s91
  $region4: #{inconv_forward.1} parent=0 // loop_header_branch
    %12 = sbr.rel (%p10) target = $region8
  $region5: #{inconv_forward.1} parent=0 // loop_body
    %s14 = ssub.s32 %s9, 1
    %s15 = ssub.s32 %s9, 2
    %s16 = sadd.s32 %s9, 1
    %s17 = ssub.s32 %s9, %s16
    %p18 = scmp.eq.s32.totalorder %s17, 0
    %s20 = sadd.s32 %s19, 1
    %s21 = scalar_select %p18, %s19, %s20
    %p24 = pneg %p18
    %p25 = scmp.eq.s32.totalorder %s9, 1
    %p26 = por %p24, %p25
    %p27 = scmp.ne.s32.totalorder %s19, %s22
    %p28 = scmp.eq.s32.totalorder %s9, 0
    %p29 = por %p27, %p28
    %p30 = scmp.ne.s32.totalorder %s19, %s22
    %p31 = scmp.eq.s32.totalorder %s14, 1
    %p32 = por %p30, %p31
    %p33 = scmp.ne.s32.totalorder %s22, %s23
    %p34 = scmp.eq.s32.totalorder %s14, 0
    %p35 = por %p33, %p34
    %p36 = scmp.ne.s32.totalorder %s22, %s23
    %p37 = scmp.eq.s32.totalorder %s15, 1
    %p38 = por %p36, %p37
    %p40 = scmp.ne.s32.totalorder %s23, %s39
    %p41 = scmp.eq.s32.totalorder %s15, 0
    %p42 = por %p40, %p41
    %s44 = sadd.s32 %s43, 1
    %p47 = scmp.eq.s32.totalorder %s9, 1
    %p48 = scmp.ne.s32.totalorder %s43, %s45
    %p49 = scmp.eq.s32.totalorder %s9, 0
    %p50 = por %p48, %p49
    %p51 = scmp.ne.s32.totalorder %s43, %s45
    %p52 = scmp.eq.s32.totalorder %s14, 1
    %p53 = por %p51, %p52
    %p54 = scmp.ne.s32.totalorder %s45, %s46
    %p55 = scmp.eq.s32.totalorder %s14, 0
    %p56 = por %p54, %p55
    %p57 = scmp.ne.s32.totalorder %s45, %s46
    %p58 = scmp.eq.s32.totalorder %s15, 1
    %p59 = por %p57, %p58
    %p61 = scmp.ne.s32.totalorder %s46, %s60
    %p62 = scmp.eq.s32.totalorder %s15, 0
    %p63 = por %p61, %p62
    %s65 = sadd.s32 %s64, 1
    %p68 = scmp.eq.s32.totalorder %s9, 1
    %p69 = scmp.ne.s32.totalorder %s64, %s66
    %p70 = scmp.eq.s32.totalorder %s9, 0
    %p71 = por %p69, %p70
    %p72 = scmp.ne.s32.totalorder %s64, %s66
    %p73 = scmp.eq.s32.totalorder %s14, 1
    %p74 = por %p72, %p73
    %p75 = scmp.ne.s32.totalorder %s66, %s67
    %p76 = scmp.eq.s32.totalorder %s14, 0
    %p77 = por %p75, %p76
    %p78 = scmp.ne.s32.totalorder %s66, %s67
    %p79 = scmp.eq.s32.totalorder %s15, 1
    %p80 = por %p78, %p79
    %p82 = scmp.ne.s32.totalorder %s67, %s81
    %p83 = scmp.eq.s32.totalorder %s15, 0
    %p84 = por %p82, %p83
    %s85 = ssub.s32 %s9, %s16
    %p86 = scmp.eq.s32.totalorder %s85, 0
    %s88 = sadd.s32 %s87, 1
    %s89 = scalar_select %p86, %s87, %s88
    %p92 = pneg %p86
    %p93 = scmp.eq.s32.totalorder %s9, 1
    %p94 = por %p92, %p93
    %p95 = scmp.ne.s32.totalorder %s87, %s90
    %p96 = scmp.eq.s32.totalorder %s9, 0
    %p97 = por %p95, %p96
    %p98 = scmp.ne.s32.totalorder %s87, %s90
    %p99 = scmp.eq.s32.totalorder %s14, 1
    %p100 = por %p98, %p99
    %p101 = scmp.ne.s32.totalorder %s90, %s91
    %p102 = scmp.eq.s32.totalorder %s14, 0
    %p103 = por %p101, %p102
    %p104 = scmp.ne.s32.totalorder %s90, %s91
    %p105 = scmp.eq.s32.totalorder %s15, 1
    %p106 = por %p104, %p105
    %p108 = scmp.ne.s32.totalorder %s91, %s107
    %p109 = scmp.eq.s32.totalorder %s15, 0
    %p110 = por %p108, %p109
    %p111 = scmp.le.s32.totalorder 1, %s9
    %p112 = scmp.lt.s32.totalorder %s9, 3
    %p113 = pnand %p111, %p112
    %p114 = pneg %p113
    // Predicated region
    $region9: #{inconv_forward.1} parent=5 // pred_check
      _
    $region10: #{inconv_forward.1} parent=5 // pred_check_branch
      %116 = sbr.rel (%p113) target = $region12
    $region11: #{inconv_forward.1} parent=5 // pred_region
      %s117 = ssub.s32 %s9, 1
      // Predicated region
      $region13: #{inconv_forward.1} parent=11 // pred_check
        %p118 = pneg %p56
      $region14: #{inconv_forward.1} parent=11 // pred_check_branch
        %120 = sbr.rel (%p118) target = $region16
      $region15: #{inconv_forward.1} parent=11 // pred_region
        _
      $region16: #{inconv_forward.1} parent=11 // pred_fallthru
        _
      // Predicated region
      $region17: #{inconv_forward.1} parent=11 // pred_check
        %p121 = pneg %p77
      $region18: #{inconv_forward.1} parent=11 // pred_check_branch
        %123 = sbr.rel (%p121) target = $region20
      $region19: #{inconv_forward.1} parent=11 // pred_region
        _
      $region20: #{inconv_forward.1} parent=11 // pred_fallthru
        _
    $region12: #{inconv_forward.1} parent=5 // pred_fallthru
      _
    %p124 = scmp.lt.s32.totalorder %s9, 2
    // Predicated region
    $region21: #{inconv_forward.1} parent=5 // pred_check
      %p125 = pneg %p124
    $region22: #{inconv_forward.1} parent=5 // pred_check_branch
      %127 = sbr.rel (%p125) target = $region24
    $region23: #{inconv_forward.1} parent=5 // pred_region
      // Predicated region
      $region25: #{inconv_forward.1} parent=23 // pred_check
        %p128 = pneg %p29
      $region26: #{inconv_forward.1} parent=23 // pred_check_branch
        %130 = sbr.rel (%p128) target = $region28
      $region27: #{inconv_forward.1} parent=23 // pred_region
        %p131 = scmp.lt.s32.totalorder %s9, 1
        %s132 = scalar_select %p131, %s9, 1
        %s133 = smul.addr %s132, 8
        %s134 = smul.addr %s133, 4
        %s135 = scalar_lea.vmem %s0, %s134
      $region28: #{inconv_forward.1} parent=23 // pred_fallthru
        _
    $region24: #{inconv_forward.1} parent=5 // pred_fallthru
      _
    %p136 = scmp.le.s32.totalorder 1, %s9
    %p137 = scmp.lt.s32.totalorder %s9, 3
    %p138 = pnand %p136, %p137
    %p139 = pneg %p138
    // Predicated region
    $region29: #{inconv_forward.1} parent=5 // pred_check
      _
    $region30: #{inconv_forward.1} parent=5 // pred_check_branch
      %141 = sbr.rel (%p138) target = $region32
    $region31: #{inconv_forward.1} parent=5 // pred_region
      %s142 = ssub.s32 %s9, 1
      %p143 = scmp.lt.s32.totalorder %s14, 1
      %s144 = scalar_select %p143, %s14, 1
      %s145 = smul.addr %s144, 8
      %s146 = smul.addr %s145, 4
      %s147 = scalar_lea.vmem %s0, %s146
      %p148 = pneg %p35
      %p149 = pneg %p32
      %p150 = pneg %p56
      %p151 = pneg %p53
      %p152 = pneg %p77
      %p153 = pneg %p74
      %p154 = pneg %p103
      %p155 = pneg %p100
      %p156 = scmp.lt.s32.totalorder %s14, 1
      %s157 = scalar_select %p156, %s14, 1
      %s158 = smul.addr %s157, 192
      %s159 = smul.addr %s158, 8
      %s160 = scalar_lea.vmem %s3, %s159
      %p161 = scmp.lt.s32.totalorder %s14, 1
      %s162 = scalar_select %p161, %s14, 1
      %s163 = smul.addr %s162, 8
      %s164 = smul.addr %s163, 4
      %s165 = scalar_lea.vmem %s0, %s164
      %p166 = scmp.lt.s32.totalorder %s14, 1
      %s167 = scalar_select %p166, %s14, 1
      %s168 = smul.addr %s167, 192
      %s169 = smul.addr %s168, 8
      %s170 = scalar_lea.vmem %s3, %s169
      %v172 = vld [vmem:[%s165] sm:$0xff]
      %173 = vst [vmem:[#allocation2] sm:$0xf] %v172
      %v175 = vunpack.c.l.b16 %v172
      %v176 = vunpack.c.h.b16 %v172
      %v177 = vpack.c.b16 %v175, %v175
      %v178 = vpack.c.b16 %v176, %v176
      %179 = vrot.lane.b32.xlu0 %v177, 127
      %v180 = vpop.permute.xlu0 %179
      %181 = vrot.lane.b32.xlu0 %v178, 127
      %v182 = vpop.permute.xlu0 %181
      %vm183 = vcmask 1039360
      %v184 = vsel %vm183, %v180, %v182
      %186 = vst [vmem:[#allocation2] sm:$0xf0] %v184
      %187 = vrot.lane.b32.xlu0 %v177, 126
      %v188 = vpop.permute.xlu0 %187
      %189 = vrot.lane.b32.xlu0 %v178, 126
      %v190 = vpop.permute.xlu0 %189
      %vm191 = vcmask 1031168
      %v192 = vsel %vm191, %v188, %v190
      %194 = vst [vmem:[#allocation2 + $0x60] sm:$0xf] %v192
      %195 = vrot.lane.b32.xlu0 %v177, 125
      %v196 = vpop.permute.xlu0 %195
      %197 = vrot.lane.b32.xlu0 %v178, 125
      %v198 = vpop.permute.xlu0 %197
      %vm199 = vcmask 1022976
      %v200 = vsel %vm199, %v196, %v198
      %202 = vst [vmem:[#allocation2 + $0x60] sm:$0xf0] %v200
      %203 = vrot.lane.b32.xlu0 %v177, 124
      %v204 = vpop.permute.xlu0 %203
      %205 = vrot.lane.b32.xlu0 %v178, 124
      %v206 = vpop.permute.xlu0 %205
      %vm207 = vcmask 1014784
      %v208 = vsel %vm207, %v204, %v206
      %210 = vst [vmem:[#allocation2 + $0xc0] sm:$0xf] %v208
      %211 = vrot.lane.b32.xlu0 %v177, 123
      %v212 = vpop.permute.xlu0 %211
      %213 = vrot.lane.b32.xlu0 %v178, 123
      %v214 = vpop.permute.xlu0 %213
      %vm215 = vcmask 1006592
      %v216 = vsel %vm215, %v212, %v214
      %218 = vst [vmem:[#allocation2 + $0xc0] sm:$0xf0] %v216
      %219 = vrot.lane.b32.xlu0 %v177, 122
      %v220 = vpop.permute.xlu0 %219
      %221 = vrot.lane.b32.xlu0 %v178, 122
      %v222 = vpop.permute.xlu0 %221
      %vm223 = vcmask 998400
      %v224 = vsel %vm223, %v220, %v222
      %226 = vst [vmem:[#allocation2 + $0x120] sm:$0xf] %v224
      %227 = vrot.lane.b32.xlu0 %v177, 121
      %v228 = vpop.permute.xlu0 %227
      %229 = vrot.lane.b32.xlu0 %v178, 121
      %v230 = vpop.permute.xlu0 %229
      %vm231 = vcmask 990208
      %v232 = vsel %vm231, %v228, %v230
      %234 = vst [vmem:[#allocation2 + $0x120] sm:$0xf0] %v232
      %v235 = vld [vmem:[%s165] sm:$0xee]
      %v236 = vld [vmem:[%s165 + $0x8] sm:$0x11]
      %v239 = vunpack.c.l.b16 %v235
      %v240 = vunpack.c.l.b16 %v236
      %v241 = vpack.c.b16 %v240, %v239
      %v242 = vrot.slane %v241, 1
      %244 = vst [vmem:[#allocation2 + $0x8] sm:$0xf] %v242
      %v245 = vunpack.c.h.b16 %v235
      %v246 = vunpack.c.h.b16 %v236
      %v247 = vpack.c.b16 %v246, %v245
      %v248 = vrot.slane %v241, 5
      %v249 = vrot.slane %v247, 5
      %250 = vrot.lane.b32.xlu0 %v248, 127
      %v251 = vpop.permute.xlu0 %250
      %252 = vrot.lane.b32.xlu0 %v249, 127
      %v253 = vpop.permute.xlu0 %252
      %v254 = vsel %vm183, %v251, %v253
      %256 = vst [vmem:[#allocation2 + $0x8] sm:$0xf0] %v254
      %v257 = vrot.slane %v247, 1
      %258 = vrot.lane.b32.xlu0 %v242, 126
      %v259 = vpop.permute.xlu0 %258
      %260 = vrot.lane.b32.xlu0 %v257, 126
      %v261 = vpop.permute.xlu0 %260
      %v262 = vsel %vm191, %v259, %v261
      %264 = vst [vmem:[#allocation2 + $0x68] sm:$0xf] %v262
      %265 = vrot.lane.b32.xlu0 %v248, 125
      %v266 = vpop.permute.xlu0 %265
      %267 = vrot.lane.b32.xlu0 %v249, 125
      %v268 = vpop.permute.xlu0 %267
      %v269 = vsel %vm199, %v266, %v268
      %271 = vst [vmem:[#allocation2 + $0x68] sm:$0xf0] %v269
      %272 = vrot.lane.b32.xlu0 %v242, 124
      %v273 = vpop.permute.xlu0 %272
      %274 = vrot.lane.b32.xlu0 %v257, 124
      %v275 = vpop.permute.xlu0 %274
      %v276 = vsel %vm207, %v273, %v275
      %278 = vst [vmem:[#allocation2 + $0xc8] sm:$0xf] %v276
      %279 = vrot.lane.b32.xlu0 %v248, 123
      %v280 = vpop.permute.xlu0 %279
      %281 = vrot.lane.b32.xlu0 %v249, 123
      %v282 = vpop.permute.xlu0 %281
      %v283 = vsel %vm215, %v280, %v282
      %285 = vst [vmem:[#allocation2 + $0xc8] sm:$0xf0] %v283
      %286 = vrot.lane.b32.xlu0 %v242, 122
      %v287 = vpop.permute.xlu0 %286
      %288 = vrot.lane.b32.xlu0 %v257, 122
      %v289 = vpop.permute.xlu0 %288
      %v290 = vsel %vm223, %v287, %v289
      %292 = vst [vmem:[#allocation2 + $0x128] sm:$0xf] %v290
      %293 = vrot.lane.b32.xlu0 %v248, 121
      %v294 = vpop.permute.xlu0 %293
      %295 = vrot.lane.b32.xlu0 %v249, 121
      %v296 = vpop.permute.xlu0 %295
      %v297 = vsel %vm231, %v294, %v296
      %299 = vst [vmem:[#allocation2 + $0x128] sm:$0xf0] %v297
      %v300 = vld [vmem:[%s165] sm:$0xcc]
      %v301 = vld [vmem:[%s165 + $0x8] sm:$0x33]
      %v304 = vunpack.c.l.b16 %v300
      %v305 = vunpack.c.l.b16 %v301
      %v306 = vpack.c.b16 %v305, %v304
      %v307 = vrot.slane %v306, 2
      %309 = vst [vmem:[#allocation2 + $0x10] sm:$0xf] %v307
      %v310 = vunpack.c.h.b16 %v300
      %v311 = vunpack.c.h.b16 %v301
      %v312 = vpack.c.b16 %v311, %v310
      %v313 = vrot.slane %v306, 6
      %v314 = vrot.slane %v312, 6
      %315 = vrot.lane.b32.xlu0 %v313, 127
      %v316 = vpop.permute.xlu0 %315
      %317 = vrot.lane.b32.xlu0 %v314, 127
      %v318 = vpop.permute.xlu0 %317
      %v319 = vsel %vm183, %v316, %v318
      %321 = vst [vmem:[#allocation2 + $0x10] sm:$0xf0] %v319
      %v322 = vrot.slane %v312, 2
      %323 = vrot.lane.b32.xlu0 %v307, 126
      %v324 = vpop.permute.xlu0 %323
      %325 = vrot.lane.b32.xlu0 %v322, 126
      %v326 = vpop.permute.xlu0 %325
      %v327 = vsel %vm191, %v324, %v326
      %329 = vst [vmem:[#allocation2 + $0x70] sm:$0xf] %v327
      %330 = vrot.lane.b32.xlu0 %v313, 125
      %v331 = vpop.permute.xlu0 %330
      %332 = vrot.lane.b32.xlu0 %v314, 125
      %v333 = vpop.permute.xlu0 %332
      %v334 = vsel %vm199, %v331, %v333
      %336 = vst [vmem:[#allocation2 + $0x70] sm:$0xf0] %v334
      %337 = vrot.lane.b32.xlu0 %v307, 124
      %v338 = vpop.permute.xlu0 %337
      %339 = vrot.lane.b32.xlu0 %v322, 124
      %v340 = vpop.permute.xlu0 %339
      %v341 = vsel %vm207, %v338, %v340
      %343 = vst [vmem:[#allocation2 + $0xd0] sm:$0xf] %v341
      %344 = vrot.lane.b32.xlu0 %v313, 123
      %v345 = vpop.permute.xlu0 %344
      %346 = vrot.lane.b32.xlu0 %v314, 123
      %v347 = vpop.permute.xlu0 %346
      %v348 = vsel %vm215, %v345, %v347
      %350 = vst [vmem:[#allocation2 + $0xd0] sm:$0xf0] %v348
      %351 = vrot.lane.b32.xlu0 %v307, 122
      %v352 = vpop.permute.xlu0 %351
      %353 = vrot.lane.b32.xlu0 %v322, 122
      %v354 = vpop.permute.xlu0 %353
      %v355 = vsel %vm223, %v352, %v354
      %357 = vst [vmem:[#allocation2 + $0x130] sm:$0xf] %v355
      %358 = vrot.lane.b32.xlu0 %v313, 121
      %v359 = vpop.permute.xlu0 %358
      %360 = vrot.lane.b32.xlu0 %v314, 121
      %v361 = vpop.permute.xlu0 %360
      %v362 = vsel %vm231, %v359, %v361
      %364 = vst [vmem:[#allocation2 + $0x130] sm:$0xf0] %v362
      %v365 = vld [vmem:[%s165] sm:$0x88]
      %v366 = vld [vmem:[%s165 + $0x8] sm:$0x77]
      %v369 = vunpack.c.l.b16 %v365
      %v370 = vunpack.c.l.b16 %v366
      %v371 = vpack.c.b16 %v370, %v369
      %v372 = vrot.slane %v371, 3
      %374 = vst [vmem:[#allocation2 + $0x18] sm:$0xf] %v372
      %v375 = vunpack.c.h.b16 %v365
      %v376 = vunpack.c.h.b16 %v366
      %v377 = vpack.c.b16 %v376, %v375
      %v378 = vrot.slane %v371, 7
      %v379 = vrot.slane %v377, 7
      %380 = vrot.lane.b32.xlu0 %v378, 127
      %v381 = vpop.permute.xlu0 %380
      %382 = vrot.lane.b32.xlu0 %v379, 127
      %v383 = vpop.permute.xlu0 %382
      %v384 = vsel %vm183, %v381, %v383
      %386 = vst [vmem:[#allocation2 + $0x18] sm:$0xf0] %v384
      %v387 = vrot.slane %v377, 3
      %388 = vrot.lane.b32.xlu0 %v372, 126
      %v389 = vpop.permute.xlu0 %388
      %390 = vrot.lane.b32.xlu0 %v387, 126
      %v391 = vpop.permute.xlu0 %390
      %v392 = vsel %vm191, %v389, %v391
      %394 = vst [vmem:[#allocation2 + $0x78] sm:$0xf] %v392
      %395 = vrot.lane.b32.xlu0 %v378, 125
      %v396 = vpop.permute.xlu0 %395
      %397 = vrot.lane.b32.xlu0 %v379, 125
      %v398 = vpop.permute.xlu0 %397
      %v399 = vsel %vm199, %v396, %v398
      %401 = vst [vmem:[#allocation2 + $0x78] sm:$0xf0] %v399
      %402 = vrot.lane.b32.xlu0 %v372, 124
      %v403 = vpop.permute.xlu0 %402
      %404 = vrot.lane.b32.xlu0 %v387, 124
      %v405 = vpop.permute.xlu0 %404
      %v406 = vsel %vm207, %v403, %v405
      %408 = vst [vmem:[#allocation2 + $0xd8] sm:$0xf] %v406
      %409 = vrot.lane.b32.xlu0 %v378, 123
      %v410 = vpop.permute.xlu0 %409
      %411 = vrot.lane.b32.xlu0 %v379, 123
      %v412 = vpop.permute.xlu0 %411
      %v413 = vsel %vm215, %v410, %v412
      %415 = vst [vmem:[#allocation2 + $0xd8] sm:$0xf0] %v413
      %416 = vrot.lane.b32.xlu0 %v372, 122
      %v417 = vpop.permute.xlu0 %416
      %418 = vrot.lane.b32.xlu0 %v387, 122
      %v419 = vpop.permute.xlu0 %418
      %v420 = vsel %vm223, %v417, %v419
      %422 = vst [vmem:[#allocation2 + $0x138] sm:$0xf] %v420
      %423 = vrot.lane.b32.xlu0 %v378, 121
      %v424 = vpop.permute.xlu0 %423
      %425 = vrot.lane.b32.xlu0 %v379, 121
      %v426 = vpop.permute.xlu0 %425
      %v427 = vsel %vm231, %v424, %v426
      %429 = vst [vmem:[#allocation2 + $0x138] sm:$0xf0] %v427
      %v430 = vld [vmem:[%s165 + $0x8] sm:$0xff]
      %431 = vst [vmem:[#allocation2 + $0x20] sm:$0xf] %v430
      %v433 = vunpack.c.l.b16 %v430
      %v434 = vunpack.c.h.b16 %v430
      %v435 = vpack.c.b16 %v433, %v433
      %v436 = vpack.c.b16 %v434, %v434
      %437 = vrot.lane.b32.xlu0 %v435, 127
      %v438 = vpop.permute.xlu0 %437
      %439 = vrot.lane.b32.xlu0 %v436, 127
      %v440 = vpop.permute.xlu0 %439
      %v441 = vsel %vm183, %v438, %v440
      %443 = vst [vmem:[#allocation2 + $0x20] sm:$0xf0] %v441
      %444 = vrot.lane.b32.xlu0 %v435, 126
      %v445 = vpop.permute.xlu0 %444
      %446 = vrot.lane.b32.xlu0 %v436, 126
      %v447 = vpop.permute.xlu0 %446
      %v448 = vsel %vm191, %v445, %v447
      %450 = vst [vmem:[#allocation2 + $0x80] sm:$0xf] %v448
      %451 = vrot.lane.b32.xlu0 %v435, 125
      %v452 = vpop.permute.xlu0 %451
      %453 = vrot.lane.b32.xlu0 %v436, 125
      %v454 = vpop.permute.xlu0 %453
      %v455 = vsel %vm199, %v452, %v454
      %457 = vst [vmem:[#allocation2 + $0x80] sm:$0xf0] %v455
      %458 = vrot.lane.b32.xlu0 %v435, 124
      %v459 = vpop.permute.xlu0 %458
      %460 = vrot.lane.b32.xlu0 %v436, 124
      %v461 = vpop.permute.xlu0 %460
      %v462 = vsel %vm207, %v459, %v461
      %464 = vst [vmem:[#allocation2 + $0xe0] sm:$0xf] %v462
      %465 = vrot.lane.b32.xlu0 %v435, 123
      %v466 = vpop.permute.xlu0 %465
      %467 = vrot.lane.b32.xlu0 %v436, 123
      %v468 = vpop.permute.xlu0 %467
      %v469 = vsel %vm215, %v466, %v468
      %471 = vst [vmem:[#allocation2 + $0xe0] sm:$0xf0] %v469
      %472 = vrot.lane.b32.xlu0 %v435, 122
      %v473 = vpop.permute.xlu0 %472
      %474 = vrot.lane.b32.xlu0 %v436, 122
      %v475 = vpop.permute.xlu0 %474
      %v476 = vsel %vm223, %v473, %v475
      %478 = vst [vmem:[#allocation2 + $0x140] sm:$0xf] %v476
      %479 = vrot.lane.b32.xlu0 %v435, 121
      %v480 = vpop.permute.xlu0 %479
      %481 = vrot.lane.b32.xlu0 %v436, 121
      %v482 = vpop.permute.xlu0 %481
      %v483 = vsel %vm231, %v480, %v482
      %485 = vst [vmem:[#allocation2 + $0x140] sm:$0xf0] %v483
      %v486 = vld [vmem:[%s165 + $0x8] sm:$0xee]
      %v487 = vld [vmem:[%s165 + $0x10] sm:$0x11]
      %v490 = vunpack.c.l.b16 %v486
      %v491 = vunpack.c.l.b16 %v487
      %v492 = vpack.c.b16 %v491, %v490
      %v493 = vrot.slane %v492, 1
      %495 = vst [vmem:[#allocation2 + $0x28] sm:$0xf] %v493
      %v496 = vunpack.c.h.b16 %v486
      %v497 = vunpack.c.h.b16 %v487
      %v498 = vpack.c.b16 %v497, %v496
      %v499 = vrot.slane %v492, 5
      %v500 = vrot.slane %v498, 5
      %501 = vrot.lane.b32.xlu0 %v499, 127
      %v502 = vpop.permute.xlu0 %501
      %503 = vrot.lane.b32.xlu0 %v500, 127
      %v504 = vpop.permute.xlu0 %503
      %v505 = vsel %vm183, %v502, %v504
      %507 = vst [vmem:[#allocation2 + $0x28] sm:$0xf0] %v505
      %v508 = vrot.slane %v498, 1
      %509 = vrot.lane.b32.xlu0 %v493, 126
      %v510 = vpop.permute.xlu0 %509
      %511 = vrot.lane.b32.xlu0 %v508, 126
      %v512 = vpop.permute.xlu0 %511
      %v513 = vsel %vm191, %v510, %v512
      %515 = vst [vmem:[#allocation2 + $0x88] sm:$0xf] %v513
      %516 = vrot.lane.b32.xlu0 %v499, 125
      %v517 = vpop.permute.xlu0 %516
      %518 = vrot.lane.b32.xlu0 %v500, 125
      %v519 = vpop.permute.xlu0 %518
      %v520 = vsel %vm199, %v517, %v519
      %522 = vst [vmem:[#allocation2 + $0x88] sm:$0xf0] %v520
      %523 = vrot.lane.b32.xlu0 %v493, 124
      %v524 = vpop.permute.xlu0 %523
      %525 = vrot.lane.b32.xlu0 %v508, 124
      %v526 = vpop.permute.xlu0 %525
      %v527 = vsel %vm207, %v524, %v526
      %529 = vst [vmem:[#allocation2 + $0xe8] sm:$0xf] %v527
      %530 = vrot.lane.b32.xlu0 %v499, 123
      %v531 = vpop.permute.xlu0 %530
      %532 = vrot.lane.b32.xlu0 %v500, 123
      %v533 = vpop.permute.xlu0 %532
      %v534 = vsel %vm215, %v531, %v533
      %536 = vst [vmem:[#allocation2 + $0xe8] sm:$0xf0] %v534
      %537 = vrot.lane.b32.xlu0 %v493, 122
      %v538 = vpop.permute.xlu0 %537
      %539 = vrot.lane.b32.xlu0 %v508, 122
      %v540 = vpop.permute.xlu0 %539
      %v541 = vsel %vm223, %v538, %v540
      %543 = vst [vmem:[#allocation2 + $0x148] sm:$0xf] %v541
      %544 = vrot.lane.b32.xlu0 %v499, 121
      %v545 = vpop.permute.xlu0 %544
      %546 = vrot.lane.b32.xlu0 %v500, 121
      %v547 = vpop.permute.xlu0 %546
      %v548 = vsel %vm231, %v545, %v547
      %550 = vst [vmem:[#allocation2 + $0x148] sm:$0xf0] %v548
      %v551 = vld [vmem:[%s165 + $0x8] sm:$0xcc]
      %v552 = vld [vmem:[%s165 + $0x10] sm:$0x33]
      %v555 = vunpack.c.l.b16 %v551
      %v556 = vunpack.c.l.b16 %v552
      %v557 = vpack.c.b16 %v556, %v555
      %v558 = vrot.slane %v557, 2
      %560 = vst [vmem:[#allocation2 + $0x30] sm:$0xf] %v558
      %v561 = vunpack.c.h.b16 %v551
      %v562 = vunpack.c.h.b16 %v552
      %v563 = vpack.c.b16 %v562, %v561
      %v564 = vrot.slane %v557, 6
      %v565 = vrot.slane %v563, 6
      %566 = vrot.lane.b32.xlu0 %v564, 127
      %v567 = vpop.permute.xlu0 %566
      %568 = vrot.lane.b32.xlu0 %v565, 127
      %v569 = vpop.permute.xlu0 %568
      %v570 = vsel %vm183, %v567, %v569
      %572 = vst [vmem:[#allocation2 + $0x30] sm:$0xf0] %v570
      %v573 = vrot.slane %v563, 2
      %574 = vrot.lane.b32.xlu0 %v558, 126
      %v575 = vpop.permute.xlu0 %574
      %576 = vrot.lane.b32.xlu0 %v573, 126
      %v577 = vpop.permute.xlu0 %576
      %v578 = vsel %vm191, %v575, %v577
      %580 = vst [vmem:[#allocation2 + $0x90] sm:$0xf] %v578
      %581 = vrot.lane.b32.xlu0 %v564, 125
      %v582 = vpop.permute.xlu0 %581
      %583 = vrot.lane.b32.xlu0 %v565, 125
      %v584 = vpop.permute.xlu0 %583
      %v585 = vsel %vm199, %v582, %v584
      %587 = vst [vmem:[#allocation2 + $0x90] sm:$0xf0] %v585
      %588 = vrot.lane.b32.xlu0 %v558, 124
      %v589 = vpop.permute.xlu0 %588
      %590 = vrot.lane.b32.xlu0 %v573, 124
      %v591 = vpop.permute.xlu0 %590
      %v592 = vsel %vm207, %v589, %v591
      %594 = vst [vmem:[#allocation2 + $0xf0] sm:$0xf] %v592
      %595 = vrot.lane.b32.xlu0 %v564, 123
      %v596 = vpop.permute.xlu0 %595
      %597 = vrot.lane.b32.xlu0 %v565, 123
      %v598 = vpop.permute.xlu0 %597
      %v599 = vsel %vm215, %v596, %v598
      %601 = vst [vmem:[#allocation2 + $0xf0] sm:$0xf0] %v599
      %602 = vrot.lane.b32.xlu0 %v558, 122
      %v603 = vpop.permute.xlu0 %602
      %604 = vrot.lane.b32.xlu0 %v573, 122
      %v605 = vpop.permute.xlu0 %604
      %v606 = vsel %vm223, %v603, %v605
      %608 = vst [vmem:[#allocation2 + $0x150] sm:$0xf] %v606
      %609 = vrot.lane.b32.xlu0 %v564, 121
      %v610 = vpop.permute.xlu0 %609
      %611 = vrot.lane.b32.xlu0 %v565, 121
      %v612 = vpop.permute.xlu0 %611
      %v613 = vsel %vm231, %v610, %v612
      %615 = vst [vmem:[#allocation2 + $0x150] sm:$0xf0] %v613
      %v616 = vld [vmem:[%s165 + $0x8] sm:$0x88]
      %v617 = vld [vmem:[%s165 + $0x10] sm:$0x77]
      %v620 = vunpack.c.l.b16 %v616
      %v621 = vunpack.c.l.b16 %v617
      %v622 = vpack.c.b16 %v621, %v620
      %v623 = vrot.slane %v622, 3
      %625 = vst [vmem:[#allocation2 + $0x38] sm:$0xf] %v623
      %v626 = vunpack.c.h.b16 %v616
      %v627 = vunpack.c.h.b16 %v617
      %v628 = vpack.c.b16 %v627, %v626
      %v629 = vrot.slane %v622, 7
      %v630 = vrot.slane %v628, 7
      %631 = vrot.lane.b32.xlu0 %v629, 127
      %v632 = vpop.permute.xlu0 %631
      %633 = vrot.lane.b32.xlu0 %v630, 127
      %v634 = vpop.permute.xlu0 %633
      %v635 = vsel %vm183, %v632, %v634
      %637 = vst [vmem:[#allocation2 + $0x38] sm:$0xf0] %v635
      %v638 = vrot.slane %v628, 3
      %639 = vrot.lane.b32.xlu0 %v623, 126
      %v640 = vpop.permute.xlu0 %639
      %641 = vrot.lane.b32.xlu0 %v638, 126
      %v642 = vpop.permute.xlu0 %641
      %v643 = vsel %vm191, %v640, %v642
      %645 = vst [vmem:[#allocation2 + $0x98] sm:$0xf] %v643
      %646 = vrot.lane.b32.xlu0 %v629, 125
      %v647 = vpop.permute.xlu0 %646
      %648 = vrot.lane.b32.xlu0 %v630, 125
      %v649 = vpop.permute.xlu0 %648
      %v650 = vsel %vm199, %v647, %v649
      %652 = vst [vmem:[#allocation2 + $0x98] sm:$0xf0] %v650
      %653 = vrot.lane.b32.xlu0 %v623, 124
      %v654 = vpop.permute.xlu0 %653
      %655 = vrot.lane.b32.xlu0 %v638, 124
      %v656 = vpop.permute.xlu0 %655
      %v657 = vsel %vm207, %v654, %v656
      %659 = vst [vmem:[#allocation2 + $0xf8] sm:$0xf] %v657
      %660 = vrot.lane.b32.xlu0 %v629, 123
      %v661 = vpop.permute.xlu0 %660
      %662 = vrot.lane.b32.xlu0 %v630, 123
      %v663 = vpop.permute.xlu0 %662
      %v664 = vsel %vm215, %v661, %v663
      %666 = vst [vmem:[#allocation2 + $0xf8] sm:$0xf0] %v664
      %667 = vrot.lane.b32.xlu0 %v623, 122
      %v668 = vpop.permute.xlu0 %667
      %669 = vrot.lane.b32.xlu0 %v638, 122
      %v670 = vpop.permute.xlu0 %669
      %v671 = vsel %vm223, %v668, %v670
      %673 = vst [vmem:[#allocation2 + $0x158] sm:$0xf] %v671
      %674 = vrot.lane.b32.xlu0 %v629, 121
      %v675 = vpop.permute.xlu0 %674
      %676 = vrot.lane.b32.xlu0 %v630, 121
      %v677 = vpop.permute.xlu0 %676
      %v678 = vsel %vm231, %v675, %v677
      %680 = vst [vmem:[#allocation2 + $0x158] sm:$0xf0] %v678
      %v681 = vld [vmem:[%s165 + $0x10] sm:$0xff]
      %682 = vst [vmem:[#allocation2 + $0x40] sm:$0xf] %v681
      %v684 = vunpack.c.l.b16 %v681
      %v685 = vunpack.c.h.b16 %v681
      %v686 = vpack.c.b16 %v684, %v684
      %v687 = vpack.c.b16 %v685, %v685
      %688 = vrot.lane.b32.xlu0 %v686, 127
      %v689 = vpop.permute.xlu0 %688
      %690 = vrot.lane.b32.xlu0 %v687, 127
      %v691 = vpop.permute.xlu0 %690
      %v692 = vsel %vm183, %v689, %v691
      %694 = vst [vmem:[#allocation2 + $0x40] sm:$0xf0] %v692
      %695 = vrot.lane.b32.xlu0 %v686, 126
      %v696 = vpop.permute.xlu0 %695
      %697 = vrot.lane.b32.xlu0 %v687, 126
      %v698 = vpop.permute.xlu0 %697
      %v699 = vsel %vm191, %v696, %v698
      %701 = vst [vmem:[#allocation2 + $0xa0] sm:$0xf] %v699
      %702 = vrot.lane.b32.xlu0 %v686, 125
      %v703 = vpop.permute.xlu0 %702
      %704 = vrot.lane.b32.xlu0 %v687, 125
      %v705 = vpop.permute.xlu0 %704
      %v706 = vsel %vm199, %v703, %v705
      %708 = vst [vmem:[#allocation2 + $0xa0] sm:$0xf0] %v706
      %709 = vrot.lane.b32.xlu0 %v686, 124
      %v710 = vpop.permute.xlu0 %709
      %711 = vrot.lane.b32.xlu0 %v687, 124
      %v712 = vpop.permute.xlu0 %711
      %v713 = vsel %vm207, %v710, %v712
      %715 = vst [vmem:[#allocation2 + $0x100] sm:$0xf] %v713
      %716 = vrot.lane.b32.xlu0 %v686, 123
      %v717 = vpop.permute.xlu0 %716
      %718 = vrot.lane.b32.xlu0 %v687, 123
      %v719 = vpop.permute.xlu0 %718
      %v720 = vsel %vm215, %v717, %v719
      %722 = vst [vmem:[#allocation2 + $0x100] sm:$0xf0] %v720
      %723 = vrot.lane.b32.xlu0 %v686, 122
      %v724 = vpop.permute.xlu0 %723
      %725 = vrot.lane.b32.xlu0 %v687, 122
      %v726 = vpop.permute.xlu0 %725
      %v727 = vsel %vm223, %v724, %v726
      %729 = vst [vmem:[#allocation2 + $0x160] sm:$0xf] %v727
      %730 = vrot.lane.b32.xlu0 %v686, 121
      %v731 = vpop.permute.xlu0 %730
      %732 = vrot.lane.b32.xlu0 %v687, 121
      %v733 = vpop.permute.xlu0 %732
      %v734 = vsel %vm231, %v731, %v733
      %736 = vst [vmem:[#allocation2 + $0x160] sm:$0xf0] %v734
      %v737 = vld [vmem:[%s165 + $0x10] sm:$0xee]
      %v738 = vld [vmem:[%s165 + $0x18] sm:$0x11]
      %v741 = vunpack.c.l.b16 %v737
      %v742 = vunpack.c.l.b16 %v738
      %v743 = vpack.c.b16 %v742, %v741
      %v744 = vrot.slane %v743, 1
      %746 = vst [vmem:[#allocation2 + $0x48] sm:$0xf] %v744
      %v747 = vunpack.c.h.b16 %v737
      %v748 = vunpack.c.h.b16 %v738
      %v749 = vpack.c.b16 %v748, %v747
      %v750 = vrot.slane %v743, 5
      %v751 = vrot.slane %v749, 5
      %752 = vrot.lane.b32.xlu0 %v750, 127
      %v753 = vpop.permute.xlu0 %752
      %754 = vrot.lane.b32.xlu0 %v751, 127
      %v755 = vpop.permute.xlu0 %754
      %v756 = vsel %vm183, %v753, %v755
      %758 = vst [vmem:[#allocation2 + $0x48] sm:$0xf0] %v756
      %v759 = vrot.slane %v749, 1
      %760 = vrot.lane.b32.xlu0 %v744, 126
      %v761 = vpop.permute.xlu0 %760
      %762 = vrot.lane.b32.xlu0 %v759, 126
      %v763 = vpop.permute.xlu0 %762
      %v764 = vsel %vm191, %v761, %v763
      %766 = vst [vmem:[#allocation2 + $0xa8] sm:$0xf] %v764
      %767 = vrot.lane.b32.xlu0 %v750, 125
      %v768 = vpop.permute.xlu0 %767
      %769 = vrot.lane.b32.xlu0 %v751, 125
      %v770 = vpop.permute.xlu0 %769
      %v771 = vsel %vm199, %v768, %v770
      %773 = vst [vmem:[#allocation2 + $0xa8] sm:$0xf0] %v771
      %774 = vrot.lane.b32.xlu0 %v744, 124
      %v775 = vpop.permute.xlu0 %774
      %776 = vrot.lane.b32.xlu0 %v759, 124
      %v777 = vpop.permute.xlu0 %776
      %v778 = vsel %vm207, %v775, %v777
      %780 = vst [vmem:[#allocation2 + $0x108] sm:$0xf] %v778
      %781 = vrot.lane.b32.xlu0 %v750, 123
      %v782 = vpop.permute.xlu0 %781
      %783 = vrot.lane.b32.xlu0 %v751, 123
      %v784 = vpop.permute.xlu0 %783
      %v785 = vsel %vm215, %v782, %v784
      %787 = vst [vmem:[#allocation2 + $0x108] sm:$0xf0] %v785
      %788 = vrot.lane.b32.xlu0 %v744, 122
      %v789 = vpop.permute.xlu0 %788
      %790 = vrot.lane.b32.xlu0 %v759, 122
      %v791 = vpop.permute.xlu0 %790
      %v792 = vsel %vm223, %v789, %v791
      %794 = vst [vmem:[#allocation2 + $0x168] sm:$0xf] %v792
      %795 = vrot.lane.b32.xlu0 %v750, 121
      %v796 = vpop.permute.xlu0 %795
      %797 = vrot.lane.b32.xlu0 %v751, 121
      %v798 = vpop.permute.xlu0 %797
      %v799 = vsel %vm231, %v796, %v798
      %801 = vst [vmem:[#allocation2 + $0x168] sm:$0xf0] %v799
      %v802 = vld [vmem:[%s165 + $0x10] sm:$0xcc]
      %v803 = vld [vmem:[%s165 + $0x18] sm:$0x33]
      %v806 = vunpack.c.l.b16 %v802
      %v807 = vunpack.c.l.b16 %v803
      %v808 = vpack.c.b16 %v807, %v806
      %v809 = vrot.slane %v808, 2
      %811 = vst [vmem:[#allocation2 + $0x50] sm:$0xf] %v809
      %v812 = vunpack.c.h.b16 %v802
      %v813 = vunpack.c.h.b16 %v803
      %v814 = vpack.c.b16 %v813, %v812
      %v815 = vrot.slane %v808, 6
      %v816 = vrot.slane %v814, 6
      %817 = vrot.lane.b32.xlu0 %v815, 127
      %v818 = vpop.permute.xlu0 %817
      %819 = vrot.lane.b32.xlu0 %v816, 127
      %v820 = vpop.permute.xlu0 %819
      %v821 = vsel %vm183, %v818, %v820
      %823 = vst [vmem:[#allocation2 + $0x50] sm:$0xf0] %v821
      %v824 = vrot.slane %v814, 2
      %825 = vrot.lane.b32.xlu0 %v809, 126
      %v826 = vpop.permute.xlu0 %825
      %827 = vrot.lane.b32.xlu0 %v824, 126
      %v828 = vpop.permute.xlu0 %827
      %v829 = vsel %vm191, %v826, %v828
      %831 = vst [vmem:[#allocation2 + $0xb0] sm:$0xf] %v829
      %832 = vrot.lane.b32.xlu0 %v815, 125
      %v833 = vpop.permute.xlu0 %832
      %834 = vrot.lane.b32.xlu0 %v816, 125
      %v835 = vpop.permute.xlu0 %834
      %v836 = vsel %vm199, %v833, %v835
      %838 = vst [vmem:[#allocation2 + $0xb0] sm:$0xf0] %v836
      %839 = vrot.lane.b32.xlu0 %v809, 124
      %v840 = vpop.permute.xlu0 %839
      %841 = vrot.lane.b32.xlu0 %v824, 124
      %v842 = vpop.permute.xlu0 %841
      %v843 = vsel %vm207, %v840, %v842
      %845 = vst [vmem:[#allocation2 + $0x110] sm:$0xf] %v843
      %846 = vrot.lane.b32.xlu0 %v815, 123
      %v847 = vpop.permute.xlu0 %846
      %848 = vrot.lane.b32.xlu0 %v816, 123
      %v849 = vpop.permute.xlu0 %848
      %v850 = vsel %vm215, %v847, %v849
      %852 = vst [vmem:[#allocation2 + $0x110] sm:$0xf0] %v850
      %853 = vrot.lane.b32.xlu0 %v809, 122
      %v854 = vpop.permute.xlu0 %853
      %855 = vrot.lane.b32.xlu0 %v824, 122
      %v856 = vpop.permute.xlu0 %855
      %v857 = vsel %vm223, %v854, %v856
      %859 = vst [vmem:[#allocation2 + $0x170] sm:$0xf] %v857
      %860 = vrot.lane.b32.xlu0 %v815, 121
      %v861 = vpop.permute.xlu0 %860
      %862 = vrot.lane.b32.xlu0 %v816, 121
      %v863 = vpop.permute.xlu0 %862
      %v864 = vsel %vm231, %v861, %v863
      %866 = vst [vmem:[#allocation2 + $0x170] sm:$0xf0] %v864
      %v867 = vld [vmem:[%s165 + $0x10] sm:$0x88]
      %v868 = vld [vmem:[%s165 + $0x18] sm:$0x77]
      %v871 = vunpack.c.l.b16 %v867
      %v872 = vunpack.c.l.b16 %v868
      %v873 = vpack.c.b16 %v872, %v871
      %v874 = vrot.slane %v873, 3
      %876 = vst [vmem:[#allocation2 + $0x58] sm:$0xf] %v874
      %v877 = vunpack.c.h.b16 %v867
      %v878 = vunpack.c.h.b16 %v868
      %v879 = vpack.c.b16 %v878, %v877
      %v880 = vrot.slane %v873, 7
      %v881 = vrot.slane %v879, 7
      %882 = vrot.lane.b32.xlu0 %v880, 127
      %v883 = vpop.permute.xlu0 %882
      %884 = vrot.lane.b32.xlu0 %v881, 127
      %v885 = vpop.permute.xlu0 %884
      %v886 = vsel %vm183, %v883, %v885
      %888 = vst [vmem:[#allocation2 + $0x58] sm:$0xf0] %v886
      %v889 = vrot.slane %v879, 3
      %890 = vrot.lane.b32.xlu0 %v874, 126
      %v891 = vpop.permute.xlu0 %890
      %892 = vrot.lane.b32.xlu0 %v889, 126
      %v893 = vpop.permute.xlu0 %892
      %v894 = vsel %vm191, %v891, %v893
      %896 = vst [vmem:[#allocation2 + $0xb8] sm:$0xf] %v894
      %897 = vrot.lane.b32.xlu0 %v880, 125
      %v898 = vpop.permute.xlu0 %897
      %899 = vrot.lane.b32.xlu0 %v881, 125
      %v900 = vpop.permute.xlu0 %899
      %v901 = vsel %vm199, %v898, %v900
      %903 = vst [vmem:[#allocation2 + $0xb8] sm:$0xf0] %v901
      %904 = vrot.lane.b32.xlu0 %v874, 124
      %v905 = vpop.permute.xlu0 %904
      %906 = vrot.lane.b32.xlu0 %v889, 124
      %v907 = vpop.permute.xlu0 %906
      %v908 = vsel %vm207, %v905, %v907
      %910 = vst [vmem:[#allocation2 + $0x118] sm:$0xf] %v908
      %911 = vrot.lane.b32.xlu0 %v880, 123
      %v912 = vpop.permute.xlu0 %911
      %913 = vrot.lane.b32.xlu0 %v881, 123
      %v914 = vpop.permute.xlu0 %913
      %v915 = vsel %vm215, %v912, %v914
      %917 = vst [vmem:[#allocation2 + $0x118] sm:$0xf0] %v915
      %918 = vrot.lane.b32.xlu0 %v874, 122
      %v919 = vpop.permute.xlu0 %918
      %920 = vrot.lane.b32.xlu0 %v889, 122
      %v921 = vpop.permute.xlu0 %920
      %v922 = vsel %vm223, %v919, %v921
      %924 = vst [vmem:[#allocation2 + $0x178] sm:$0xf] %v922
      %925 = vrot.lane.b32.xlu0 %v880, 121
      %v926 = vpop.permute.xlu0 %925
      %927 = vrot.lane.b32.xlu0 %v881, 121
      %v928 = vpop.permute.xlu0 %927
      %v929 = vsel %vm231, %v926, %v928
      %931 = vst [vmem:[#allocation2 + $0x178] sm:$0xf0] %v929
      %v932 = vld [vmem:[%s1] sm:$0xf]
      %v933 = vld [vmem:[%s1 + $0x4] sm:$0xf]
      %v934 = vld [vmem:[%s1 + $0x8] sm:$0xf]
      %v935 = vld [vmem:[%s1 + $0xc] sm:$0xf]
      %v936 = vld [vmem:[%s1 + $0x10] sm:$0xf]
      %v937 = vld [vmem:[%s1 + $0x14] sm:$0xf]
      %v938 = vld [vmem:[%s1 + $0x18] sm:$0xf]
      %v939 = vld [vmem:[%s1 + $0x1c] sm:$0xf]
      %v940 = vld [vmem:[%s1 + $0x20] sm:$0xf]
      %v941 = vld [vmem:[%s1 + $0x24] sm:$0xf]
      %v942 = vld [vmem:[%s1 + $0x28] sm:$0xf]
      %v943 = vld [vmem:[%s1 + $0x2c] sm:$0xf]
      %v944 = vld [vmem:[%s1 + $0x30] sm:$0xf]
      %v945 = vld [vmem:[%s1 + $0x34] sm:$0xf]
      %v946 = vld [vmem:[%s1 + $0x38] sm:$0xf]
      %v947 = vld [vmem:[%s1 + $0x3c] sm:$0xf]
      %v948 = vld [vmem:[%s2] sm:$0xff]
      %v949 = vld [vmem:[%s2 + $0x8] sm:$0xff]
      %v950 = vld [vmem:[%s2 + $0x10] sm:$0xff]
      %v951 = vld [vmem:[%s2 + $0x18] sm:$0xff]
      %v952 = vld [vmem:[%s2 + $0x20] sm:$0xff]
      %v953 = vld [vmem:[%s2 + $0x28] sm:$0xff]
      %v954 = vld [vmem:[%s2 + $0x30] sm:$0xff]
      %v955 = vld [vmem:[%s2 + $0x38] sm:$0xff]
      %v956 = vld [vmem:[%s2 + $0x40] sm:$0xff]
      %v957 = vld [vmem:[%s2 + $0x48] sm:$0xff]
      %v958 = vld [vmem:[%s2 + $0x50] sm:$0xff]
      %v959 = vld [vmem:[%s2 + $0x58] sm:$0xff]
      %v960 = vld [vmem:[%s2 + $0x60] sm:$0xff]
      %v961 = vld [vmem:[%s2 + $0x68] sm:$0xff]
      %v962 = vld [vmem:[%s2 + $0x70] sm:$0xff]
      %v963 = vld [vmem:[%s2 + $0x78] sm:$0xff]
      %v964 = vld [vmem:[#allocation2] sm:$0xff]
      %v965 = vld [vmem:[#allocation2 + $0x8] sm:$0xff]
      %v966 = vld [vmem:[#allocation2 + $0x60] sm:$0xff]
      %v967 = vld [vmem:[#allocation2 + $0x68] sm:$0xff]
      %v968 = vld [vmem:[#allocation2 + $0xc0] sm:$0xff]
      %v969 = vld [vmem:[#allocation2 + $0xc8] sm:$0xff]
      %v970 = vld [vmem:[#allocation2 + $0x120] sm:$0xff]
      %v971 = vld [vmem:[#allocation2 + $0x128] sm:$0xff]
      %973 = vset.pattern.permute.xlu0 0
      %974 = vperm.xlu0 %973, %v948
      %v975 = vpop.permute.xlu0 %974
      %978 = vset.pattern.permute.xlu0 0
      %979 = vperm.xlu0 %978, %v949
      %v980 = vpop.permute.xlu0 %979
      %983 = vset.pattern.permute.xlu0 0
      %984 = vperm.xlu0 %983, %v950
      %v985 = vpop.permute.xlu0 %984
      %988 = vset.pattern.permute.xlu0 0
      %989 = vperm.xlu0 %988, %v951
      %v990 = vpop.permute.xlu0 %989
      %993 = vset.pattern.permute.xlu0 0
      %994 = vperm.xlu0 %993, %v952
      %v995 = vpop.permute.xlu0 %994
      %998 = vset.pattern.permute.xlu0 0
      %999 = vperm.xlu0 %998, %v953
      %v1000 = vpop.permute.xlu0 %999
      %1003 = vset.pattern.permute.xlu0 0
      %1004 = vperm.xlu0 %1003, %v954
      %v1005 = vpop.permute.xlu0 %1004
      %1008 = vset.pattern.permute.xlu0 0
      %1009 = vperm.xlu0 %1008, %v955
      %v1010 = vpop.permute.xlu0 %1009
      %1013 = vset.pattern.permute.xlu0 0
      %1014 = vperm.xlu0 %1013, %v956
      %v1015 = vpop.permute.xlu0 %1014
      %1018 = vset.pattern.permute.xlu0 0
      %1019 = vperm.xlu0 %1018, %v957
      %v1020 = vpop.permute.xlu0 %1019
      %1023 = vset.pattern.permute.xlu0 0
      %1024 = vperm.xlu0 %1023, %v958
      %v1025 = vpop.permute.xlu0 %1024
      %1028 = vset.pattern.permute.xlu0 0
      %1029 = vperm.xlu0 %1028, %v959
      %v1030 = vpop.permute.xlu0 %1029
      %1033 = vset.pattern.permute.xlu0 0
      %1034 = vperm.xlu0 %1033, %v960
      %v1035 = vpop.permute.xlu0 %1034
      %1038 = vset.pattern.permute.xlu0 0
      %1039 = vperm.xlu0 %1038, %v961
      %v1040 = vpop.permute.xlu0 %1039
      %1043 = vset.pattern.permute.xlu0 0
      %1044 = vperm.xlu0 %1043, %v962
      %v1045 = vpop.permute.xlu0 %1044
      %1048 = vset.pattern.permute.xlu0 0
      %1049 = vperm.xlu0 %1048, %v963
      %v1050 = vpop.permute.xlu0 %1049
      %v1068 = vunpack.c.l.b16 %v932
      %v1069 = vunpack.c.l.b16 %v933
      %v1070 = vunpack.c.l.b16 %v934
      %v1071 = vunpack.c.l.b16 %v935
      %v1072 = vunpack.c.l.b16 %v936
      %v1073 = vunpack.c.l.b16 %v937
      %v1074 = vunpack.c.l.b16 %v938
      %v1075 = vunpack.c.l.b16 %v939
      %v1076 = vunpack.c.l.b16 %v940
      %v1077 = vunpack.c.l.b16 %v941
      %v1078 = vunpack.c.l.b16 %v942
      %v1079 = vunpack.c.l.b16 %v943
      %v1080 = vunpack.c.l.b16 %v944
      %v1081 = vunpack.c.l.b16 %v945
      %v1082 = vunpack.c.l.b16 %v946
      %v1083 = vunpack.c.l.b16 %v947
      %v1084 = vpack.c.b16 %v1069, %v1068
      %v1085 = vpack.c.b16 %v1071, %v1070
      %v1086 = vpack.c.b16 %v1073, %v1072
      %v1087 = vpack.c.b16 %v1075, %v1074
      %v1088 = vpack.c.b16 %v1077, %v1076
      %v1089 = vpack.c.b16 %v1079, %v1078
      %v1090 = vpack.c.b16 %v1081, %v1080
      %v1091 = vpack.c.b16 %v1083, %v1082
      %vm1092 = vcmask 523264
      %v1094 = vsel %vm1092, %v1084, 0
      %v1097 = vsel %vm1092, %v1085, 0
      %v1100 = vsel %vm1092, %v1086, 0
      %v1103 = vsel %vm1092, %v1087, 0
      %v1106 = vsel %vm1092, %v1088, 0
      %v1109 = vsel %vm1092, %v1089, 0
      %v1112 = vsel %vm1092, %v1090, 0
      %v1115 = vsel %vm1092, %v1091, 0
      %1117 = vmatprep.subr.bf16.mxu0 %v965
      %1118 = vmatpush1.bf16.msra.mxu0 %v964
      %1119 = vmatprep.subr.bf16.mxu0 %v967
      %1120 = vmatpush1.bf16.msra.mxu0 %v966
      %1121 = vmatprep.subr.bf16.mxu0 %v969
      %1122 = vmatpush1.bf16.msra.mxu0 %v968
      %1123 = vmatprep.subr.bf16.mxu0 %v971
      %1124 = vmatpush1.bf16.msra.mxu0 %v970
      %1125 = vmatprep.subr.bf16.mxu0 0
      %1126 = vmatpush1.bf16.msra.mxu0 0
      %1127 = vmatprep.subr.bf16.mxu0 0
      %1128 = vmatpush1.bf16.msra.mxu0 0
      %1129 = vmatprep.subr.bf16.mxu0 0
      %1130 = vmatpush1.bf16.msra.mxu0 0
      %1131 = vmatprep.subr.bf16.mxu0 0
      %1132 = vmatpush1.bf16.msra.mxu0 0
      %1133 = vmatprep.subr.bf16.mxu0 0
      %1134 = vmatpush1.bf16.msra.mxu0 0
      %1135 = vmatprep.subr.bf16.mxu0 0
      %1136 = vmatpush1.bf16.msra.mxu0 0
      %1137 = vmatprep.subr.bf16.mxu0 0
      %1138 = vmatpush1.bf16.msra.mxu0 0
      %1139 = vmatprep.subr.bf16.mxu0 0
      %1140 = vmatpush1.bf16.msra.mxu0 0
      %1141 = vmatprep.subr.bf16.mxu0 0
      %1142 = vmatpush1.bf16.msra.mxu0 0
      %1143 = vmatprep.subr.bf16.mxu0 0
      %1144 = vmatpush1.bf16.msra.mxu0 0
      %1145 = vmatprep.subr.bf16.mxu0 0
      %1146 = vmatpush1.bf16.msra.mxu0 0
      %1147 = vmatprep.subr.bf16.mxu0 0
      %1148 = vmatpush1.bf16.msra.mxu0 0
      %1149 = vmatprep.mubr.bf16.mxu0 0
      %1150 = vmatmul.mubr.bf16.gmra.mrb[0].mxu0 %v1094
      %v1151 = vpop.f32.mrb[0].mxu0
      %v1152 = vadd.f32 %v975, %v1151
      %v1153 = vpop.f32.mrb[0].mxu0
      %v1154 = vadd.f32 %v975, %v1153
      %v1155 = vpop.f32.mrb[0].mxu0
      %v1156 = vadd.f32 %v980, %v1155
      %v1157 = vpop.f32.mrb[0].mxu0
      %v1158 = vadd.f32 %v980, %v1157
      %1159 = vmatprep.mubr.bf16.mxu0 0
      %1160 = vmatmul.mubr.bf16.gmra.mrb[0].mxu0 %v1097
      %v1161 = vpop.f32.mrb[0].mxu0
      %v1162 = vadd.f32 %v985, %v1161
      %v1163 = vpop.f32.mrb[0].mxu0
      %v1164 = vadd.f32 %v985, %v1163
      %v1165 = vpop.f32.mrb[0].mxu0
      %v1166 = vadd.f32 %v990, %v1165
      %v1167 = vpop.f32.mrb[0].mxu0
      %v1168 = vadd.f32 %v990, %v1167
      %1169 = vmatprep.mubr.bf16.mxu0 0
      %1170 = vmatmul.mubr.bf16.gmra.mrb[0].mxu0 %v1100
      %v1171 = vpop.f32.mrb[0].mxu0
      %v1172 = vadd.f32 %v995, %v1171
      %v1173 = vpop.f32.mrb[0].mxu0
      %v1174 = vadd.f32 %v995, %v1173
      %v1175 = vpop.f32.mrb[0].mxu0
      %v1176 = vadd.f32 %v1000, %v1175
      %v1177 = vpop.f32.mrb[0].mxu0
      %v1178 = vadd.f32 %v1000, %v1177
      %1179 = vmatprep.mubr.bf16.mxu0 0
      %1180 = vmatmul.mubr.bf16.gmra.mrb[0].mxu0 %v1103
      %v1181 = vpop.f32.mrb[0].mxu0
      %v1182 = vadd.f32 %v1005, %v1181
      %v1183 = vpop.f32.mrb[0].mxu0
      %v1184 = vadd.f32 %v1005, %v1183
      %v1185 = vpop.f32.mrb[0].mxu0
      %v1186 = vadd.f32 %v1010, %v1185
      %v1187 = vpop.f32.mrb[0].mxu0
      %v1188 = vadd.f32 %v1010, %v1187
      %1189 = vmatprep.mubr.bf16.mxu0 0
      %1190 = vmatmul.mubr.bf16.gmra.mrb[0].mxu0 %v1106
      %v1191 = vpop.f32.mrb[0].mxu0
      %v1192 = vadd.f32 %v1015, %v1191
      %v1193 = vpop.f32.mrb[0].mxu0
      %v1194 = vadd.f32 %v1015, %v1193
      %v1195 = vpop.f32.mrb[0].mxu0
      %v1196 = vadd.f32 %v1020, %v1195
      %v1197 = vpop.f32.mrb[0].mxu0
      %v1198 = vadd.f32 %v1020, %v1197
      %1199 = vmatprep.mubr.bf16.mxu0 0
      %1200 = vmatmul.mubr.bf16.gmra.mrb[0].mxu0 %v1109
      %v1201 = vpop.f32.mrb[0].mxu0
      %v1202 = vadd.f32 %v1025, %v1201
      %v1203 = vpop.f32.mrb[0].mxu0
      %v1204 = vadd.f32 %v1025, %v1203
      %v1205 = vpop.f32.mrb[0].mxu0
      %v1206 = vadd.f32 %v1030, %v1205
      %v1207 = vpop.f32.mrb[0].mxu0
      %v1208 = vadd.f32 %v1030, %v1207
      %1209 = vmatprep.mubr.bf16.mxu0 0
      %1210 = vmatmul.mubr.bf16.gmra.mrb[0].mxu0 %v1112
      %v1211 = vpop.f32.mrb[0].mxu0
      %v1212 = vadd.f32 %v1035, %v1211
      %v1213 = vpop.f32.mrb[0].mxu0
      %v1214 = vadd.f32 %v1035, %v1213
      %v1215 = vpop.f32.mrb[0].mxu0
      %v1216 = vadd.f32 %v1040, %v1215
      %v1217 = vpop.f32.mrb[0].mxu0
      %v1218 = vadd.f32 %v1040, %v1217
      %1219 = vmatprep.mubr.bf16.mxu0 0
      %1220 = vmatmul.mubr.bf16.gmra.mrb[0].mxu0 %v1115
      %v1221 = vpop.f32.mrb[0].mxu0
      %v1222 = vadd.f32 %v1045, %v1221
      %v1223 = vpop.f32.mrb[0].mxu0
      %v1224 = vadd.f32 %v1045, %v1223
      %v1225 = vpop.f32.mrb[0].mxu0
      %v1226 = vadd.f32 %v1050, %v1225
      %v1227 = vpop.f32.mrb[0].mxu0
      %v1228 = vadd.f32 %v1050, %v1227
      %1229 = vdwg.mxu0
      %vm1230 = vcmp.gt.f32.partialorder %v1152, 0.0
      %vm1231 = vcmp.gt.f32.partialorder %v1154, 0.0
      %vm1232 = vcmp.gt.f32.partialorder %v1156, 0.0
      %vm1233 = vcmp.gt.f32.partialorder %v1158, 0.0
      %vm1234 = vcmp.gt.f32.partialorder %v1162, 0.0
      %vm1235 = vcmp.gt.f32.partialorder %v1164, 0.0
      %vm1236 = vcmp.gt.f32.partialorder %v1166, 0.0
      %vm1237 = vcmp.gt.f32.partialorder %v1168, 0.0
      %vm1238 = vcmp.gt.f32.partialorder %v1172, 0.0
      %vm1239 = vcmp.gt.f32.partialorder %v1174, 0.0
      %vm1240 = vcmp.gt.f32.partialorder %v1176, 0.0
      %vm1241 = vcmp.gt.f32.partialorder %v1178, 0.0
      %vm1242 = vcmp.gt.f32.partialorder %v1182, 0.0
      %vm1243 = vcmp.gt.f32.partialorder %v1184, 0.0
      %vm1244 = vcmp.gt.f32.partialorder %v1186, 0.0
      %vm1245 = vcmp.gt.f32.partialorder %v1188, 0.0
      %vm1246 = vcmp.gt.f32.partialorder %v1192, 0.0
      %vm1247 = vcmp.gt.f32.partialorder %v1194, 0.0
      %vm1248 = vcmp.gt.f32.partialorder %v1196, 0.0
      %vm1249 = vcmp.gt.f32.partialorder %v1198, 0.0
      %vm1250 = vcmp.gt.f32.partialorder %v1202, 0.0
      %vm1251 = vcmp.gt.f32.partialorder %v1204, 0.0
      %vm1252 = vcmp.gt.f32.partialorder %v1206, 0.0
      %vm1253 = vcmp.gt.f32.partialorder %v1208, 0.0
      %vm1254 = vcmp.gt.f32.partialorder %v1212, 0.0
      %vm1255 = vcmp.gt.f32.partialorder %v1214, 0.0
      %vm1256 = vcmp.gt.f32.partialorder %v1216, 0.0
      %vm1257 = vcmp.gt.f32.partialorder %v1218, 0.0
      %vm1258 = vcmp.gt.f32.partialorder %v1222, 0.0
      %vm1259 = vcmp.gt.f32.partialorder %v1224, 0.0
      %vm1260 = vcmp.gt.f32.partialorder %v1226, 0.0
      %vm1261 = vcmp.gt.f32.partialorder %v1228, 0.0
      %v1262 = vmul.f32 %v1152, 0.01
      %v1263 = vmul.f32 %v1154, 0.01
      %v1264 = vmul.f32 %v1156, 0.01
      %v1265 = vmul.f32 %v1158, 0.01
      %v1266 = vmul.f32 %v1162, 0.01
      %v1267 = vmul.f32 %v1164, 0.01
      %v1268 = vmul.f32 %v1166, 0.01
      %v1269 = vmul.f32 %v1168, 0.01
      %v1270 = vmul.f32 %v1172, 0.01
      %v1271 = vmul.f32 %v1174, 0.01
      %v1272 = vmul.f32 %v1176, 0.01
      %v1273 = vmul.f32 %v1178, 0.01
      %v1274 = vmul.f32 %v1182, 0.01
      %v1275 = vmul.f32 %v1184, 0.01
      %v1276 = vmul.f32 %v1186, 0.01
      %v1277 = vmul.f32 %v1188, 0.01
      %v1278 = vmul.f32 %v1192, 0.01
      %v1279 = vmul.f32 %v1194, 0.01
      %v1280 = vmul.f32 %v1196, 0.01
      %v1281 = vmul.f32 %v1198, 0.01
      %v1282 = vmul.f32 %v1202, 0.01
      %v1283 = vmul.f32 %v1204, 0.01
      %v1284 = vmul.f32 %v1206, 0.01
      %v1285 = vmul.f32 %v1208, 0.01
      %v1286 = vmul.f32 %v1212, 0.01
      %v1287 = vmul.f32 %v1214, 0.01
      %v1288 = vmul.f32 %v1216, 0.01
      %v1289 = vmul.f32 %v1218, 0.01
      %v1290 = vmul.f32 %v1222, 0.01
      %v1291 = vmul.f32 %v1224, 0.01
      %v1292 = vmul.f32 %v1226, 0.01
      %v1293 = vmul.f32 %v1228, 0.01
      %v1294 = vsel %vm1230, %v1152, %v1262
      %v1295 = vsel %vm1231, %v1154, %v1263
      %v1296 = vsel %vm1232, %v1156, %v1264
      %v1297 = vsel %vm1233, %v1158, %v1265
      %v1298 = vsel %vm1234, %v1162, %v1266
      %v1299 = vsel %vm1235, %v1164, %v1267
      %v1300 = vsel %vm1236, %v1166, %v1268
      %v1301 = vsel %vm1237, %v1168, %v1269
      %v1302 = vsel %vm1238, %v1172, %v1270
      %v1303 = vsel %vm1239, %v1174, %v1271
      %v1304 = vsel %vm1240, %v1176, %v1272
      %v1305 = vsel %vm1241, %v1178, %v1273
      %v1306 = vsel %vm1242, %v1182, %v1274
      %v1307 = vsel %vm1243, %v1184, %v1275
      %v1308 = vsel %vm1244, %v1186, %v1276
      %v1309 = vsel %vm1245, %v1188, %v1277
      %v1310 = vsel %vm1246, %v1192, %v1278
      %v1311 = vsel %vm1247, %v1194, %v1279
      %v1312 = vsel %vm1248, %v1196, %v1280
      %v1313 = vsel %vm1249, %v1198, %v1281
      %v1314 = vsel %vm1250, %v1202, %v1282
      %v1315 = vsel %vm1251, %v1204, %v1283
      %v1316 = vsel %vm1252, %v1206, %v1284
      %v1317 = vsel %vm1253, %v1208, %v1285
      %v1318 = vsel %vm1254, %v1212, %v1286
      %v1319 = vsel %vm1255, %v1214, %v1287
      %v1320 = vsel %vm1256, %v1216, %v1288
      %v1321 = vsel %vm1257, %v1218, %v1289
      %v1322 = vsel %vm1258, %v1222, %v1290
      %v1323 = vsel %vm1259, %v1224, %v1291
      %v1324 = vsel %vm1260, %v1226, %v1292
      %v1325 = vsel %vm1261, %v1228, %v1293
      %1326 = vst [vmem:[%s170] sm:$0xff] %v1294
      %1327 = vst [vmem:[%s170 + $0x8] sm:$0xff] %v1295
      %1328 = vst [vmem:[%s170 + $0x60] sm:$0xff] %v1296
      %1329 = vst [vmem:[%s170 + $0x68] sm:$0xff] %v1297
      %1330 = vst [vmem:[%s170 + $0xc0] sm:$0xff] %v1298
      %1331 = vst [vmem:[%s170 + $0xc8] sm:$0xff] %v1299
      %1332 = vst [vmem:[%s170 + $0x120] sm:$0xff] %v1300
      %1333 = vst [vmem:[%s170 + $0x128] sm:$0xff] %v1301
      %1334 = vst [vmem:[%s170 + $0x180] sm:$0xff] %v1302
      %1335 = vst [vmem:[%s170 + $0x188] sm:$0xff] %v1303
      %1336 = vst [vmem:[%s170 + $0x1e0] sm:$0xff] %v1304
      %1337 = vst [vmem:[%s170 + $0x1e8] sm:$0xff] %v1305
      %1338 = vst [vmem:[%s170 + $0x240] sm:$0xff] %v1306
      %1339 = vst [vmem:[%s170 + $0x248] sm:$0xff] %v1307
      %1340 = vst [vmem:[%s170 + $0x2a0] sm:$0xff] %v1308
      %1341 = vst [vmem:[%s170 + $0x2a8] sm:$0xff] %v1309
      %1342 = vst [vmem:[%s170 + $0x300] sm:$0xff] %v1310
      %1343 = vst [vmem:[%s170 + $0x308] sm:$0xff] %v1311
      %1344 = vst [vmem:[%s170 + $0x360] sm:$0xff] %v1312
      %1345 = vst [vmem:[%s170 + $0x368] sm:$0xff] %v1313
      %1346 = vst [vmem:[%s170 + $0x3c0] sm:$0xff] %v1314
      %1347 = vst [vmem:[%s170 + $0x3c8] sm:$0xff] %v1315
      %1348 = vst [vmem:[%s170 + $0x420] sm:$0xff] %v1316
      %1349 = vst [vmem:[%s170 + $0x428] sm:$0xff] %v1317
      %1350 = vst [vmem:[%s170 + $0x480] sm:$0xff] %v1318
      %1351 = vst [vmem:[%s170 + $0x488] sm:$0xff] %v1319
      %1352 = vst [vmem:[%s170 + $0x4e0] sm:$0xff] %v1320
      %1353 = vst [vmem:[%s170 + $0x4e8] sm:$0xff] %v1321
      %1354 = vst [vmem:[%s170 + $0x540] sm:$0xff] %v1322
      %1355 = vst [vmem:[%s170 + $0x548] sm:$0xff] %v1323
      %1356 = vst [vmem:[%s170 + $0x5a0] sm:$0xff] %v1324
      %1357 = vst [vmem:[%s170 + $0x5a8] sm:$0xff] %v1325
      %v1358 = vld [vmem:[#allocation2 + $0x10] sm:$0xff]
      %v1359 = vld [vmem:[#allocation2 + $0x18] sm:$0xff]
      %v1360 = vld [vmem:[#allocation2 + $0x70] sm:$0xff]
      %v1361 = vld [vmem:[#allocation2 + $0x78] sm:$0xff]
      %v1362 = vld [vmem:[#allocation2 + $0xd0] sm:$0xff]
      %v1363 = vld [vmem:[#allocation2 + $0xd8] sm:$0xff]
      %v1364 = vld [vmem:[#allocation2 + $0x130] sm:$0xff]
      %v1365 = vld [vmem:[#allocation2 + $0x138] sm:$0xff]
      %1366 = vmatprep.subr.bf16.mxu0 %v1359
      %1367 = vmatpush1.bf16.msra.mxu0 %v1358
      %1368 = vmatprep.subr.bf16.mxu0 %v1361
      %1369 = vmatpush1.bf16.msra.mxu0 %v1360
      %1370 = vmatprep.subr.bf16.mxu0 %v1363
      %1371 = vmatpush1.bf16.msra.mxu0 %v1362
      %1372 = vmatprep.subr.bf16.mxu0 %v1365
      %1373 = vmatpush1.bf16.msra.mxu0 %v1364
      %1374 = vmatprep.subr.bf16.mxu0 0
      %1375 = vmatpush1.bf16.msra.mxu0 0
      %1376 = vmatprep.subr.bf16.mxu0 0
      %1377 = vmatpush1.bf16.msra.mxu0 0
      %1378 = vmatprep.subr.bf16.mxu0 0
      %1379 = vmatpush1.bf16.msra.mxu0 0
      %1380 = vmatprep.subr.bf16.mxu0 0
      %1381 = vmatpush1.bf16.msra.mxu0 0
      %1382 = vmatprep.subr.bf16.mxu0 0
      %1383 = vmatpush1.bf16.msra.mxu0 0
      %1384 = vmatprep.subr.bf16.mxu0 0
      %1385 = vmatpush1.bf16.msra.mxu0 0
      %1386 = vmatprep.subr.bf16.mxu0 0
      %1387 = vmatpush1.bf16.msra.mxu0 0
      %1388 = vmatprep.subr.bf16.mxu0 0
      %1389 = vmatpush1.bf16.msra.mxu0 0
      %1390 = vmatprep.subr.bf16.mxu0 0
      %1391 = vmatpush1.bf16.msra.mxu0 0
      %1392 = vmatprep.subr.bf16.mxu0 0
      %1393 = vmatpush1.bf16.msra.mxu0 0
      %1394 = vmatprep.subr.bf16.mxu0 0
      %1395 = vmatpush1.bf16.msra.mxu0 0
      %1396 = vmatprep.subr.bf16.mxu0 0
      %1397 = vmatpush1.bf16.msra.mxu0 0
      %1398 = vmatprep.mubr.bf16.mxu0 0
      %1399 = vmatmul.mubr.bf16.gmra.mrb[0].mxu0 %v1094
      %v1400 = vpop.f32.mrb[0].mxu0
      %v1401 = vadd.f32 %v975, %v1400
      %v1402 = vpop.f32.mrb[0].mxu0
      %v1403 = vadd.f32 %v975, %v1402
      %v1404 = vpop.f32.mrb[0].mxu0
      %v1405 = vadd.f32 %v980, %v1404
      %v1406 = vpop.f32.mrb[0].mxu0
      %v1407 = vadd.f32 %v980, %v1406
      %1408 = vmatprep.mubr.bf16.mxu0 0
      %1409 = vmatmul.mubr.bf16.gmra.mrb[0].mxu0 %v1097
      %v1410 = vpop.f32.mrb[0].mxu0
      %v1411 = vadd.f32 %v985, %v1410
      %v1412 = vpop.f32.mrb[0].mxu0
      %v1413 = vadd.f32 %v985, %v1412
      %v1414 = vpop.f32.mrb[0].mxu0
      %v1415 = vadd.f32 %v990, %v1414
      %v1416 = vpop.f32.mrb[0].mxu0
      %v1417 = vadd.f32 %v990, %v1416
      %1418 = vmatprep.mubr.bf16.mxu0 0
      %1419 = vmatmul.mubr.bf16.gmra.mrb[0].mxu0 %v1100
      %v1420 = vpop.f32.mrb[0].mxu0
      %v1421 = vadd.f32 %v995, %v1420
      %v1422 = vpop.f32.mrb[0].mxu0
      %v1423 = vadd.f32 %v995, %v1422
      %v1424 = vpop.f32.mrb[0].mxu0
      %v1425 = vadd.f32 %v1000, %v1424
      %v1426 = vpop.f32.mrb[0].mxu0
      %v1427 = vadd.f32 %v1000, %v1426
      %1428 = vmatprep.mubr.bf16.mxu0 0
      %1429 = vmatmul.mubr.bf16.gmra.mrb[0].mxu0 %v1103
      %v1430 = vpop.f32.mrb[0].mxu0
      %v1431 = vadd.f32 %v1005, %v1430
      %v1432 = vpop.f32.mrb[0].mxu0
      %v1433 = vadd.f32 %v1005, %v1432
      %v1434 = vpop.f32.mrb[0].mxu0
      %v1435 = vadd.f32 %v1010, %v1434
      %v1436 = vpop.f32.mrb[0].mxu0
      %v1437 = vadd.f32 %v1010, %v1436
      %1438 = vmatprep.mubr.bf16.mxu0 0
      %1439 = vmatmul.mubr.bf16.gmra.mrb[0].mxu0 %v1106
      %v1440 = vpop.f32.mrb[0].mxu0
      %v1441 = vadd.f32 %v1015, %v1440
      %v1442 = vpop.f32.mrb[0].mxu0
      %v1443 = vadd.f32 %v1015, %v1442
      %v1444 = vpop.f32.mrb[0].mxu0
      %v1445 = vadd.f32 %v1020, %v1444
      %v1446 = vpop.f32.mrb[0].mxu0
      %v1447 = vadd.f32 %v1020, %v1446
      %1448 = vmatprep.mubr.bf16.mxu0 0
      %1449 = vmatmul.mubr.bf16.gmra.mrb[0].mxu0 %v1109
      %v1450 = vpop.f32.mrb[0].mxu0
      %v1451 = vadd.f32 %v1025, %v1450
      %v1452 = vpop.f32.mrb[0].mxu0
      %v1453 = vadd.f32 %v1025, %v1452
      %v1454 = vpop.f32.mrb[0].mxu0
      %v1455 = vadd.f32 %v1030, %v1454
      %v1456 = vpop.f32.mrb[0].mxu0
      %v1457 = vadd.f32 %v1030, %v1456
      %1458 = vmatprep.mubr.bf16.mxu0 0
      %1459 = vmatmul.mubr.bf16.gmra.mrb[0].mxu0 %v1112
      %v1460 = vpop.f32.mrb[0].mxu0
      %v1461 = vadd.f32 %v1035, %v1460
      %v1462 = vpop.f32.mrb[0].mxu0
      %v1463 = vadd.f32 %v1035, %v1462
      %v1464 = vpop.f32.mrb[0].mxu0
      %v1465 = vadd.f32 %v1040, %v1464
      %v1466 = vpop.f32.mrb[0].mxu0
      %v1467 = vadd.f32 %v1040, %v1466
      %1468 = vmatprep.mubr.bf16.mxu0 0
      %1469 = vmatmul.mubr.bf16.gmra.mrb[0].mxu0 %v1115
      %v1470 = vpop.f32.mrb[0].mxu0
      %v1471 = vadd.f32 %v1045, %v1470
      %v1472 = vpop.f32.mrb[0].mxu0
      %v1473 = vadd.f32 %v1045, %v1472
      %v1474 = vpop.f32.mrb[0].mxu0
      %v1475 = vadd.f32 %v1050, %v1474
      %v1476 = vpop.f32.mrb[0].mxu0
      %v1477 = vadd.f32 %v1050, %v1476
      %1478 = vdwg.mxu0
      %vm1479 = vcmp.gt.f32.partialorder %v1401, 0.0
      %vm1480 = vcmp.gt.f32.partialorder %v1403, 0.0
      %vm1481 = vcmp.gt.f32.partialorder %v1405, 0.0
      %vm1482 = vcmp.gt.f32.partialorder %v1407, 0.0
      %vm1483 = vcmp.gt.f32.partialorder %v1411, 0.0
      %vm1484 = vcmp.gt.f32.partialorder %v1413, 0.0
      %vm1485 = vcmp.gt.f32.partialorder %v1415, 0.0
      %vm1486 = vcmp.gt.f32.partialorder %v1417, 0.0
      %vm1487 = vcmp.gt.f32.partialorder %v1421, 0.0
      %vm1488 = vcmp.gt.f32.partialorder %v1423, 0.0
      %vm1489 = vcmp.gt.f32.partialorder %v1425, 0.0
      %vm1490 = vcmp.gt.f32.partialorder %v1427, 0.0
      %vm1491 = vcmp.gt.f32.partialorder %v1431, 0.0
      %vm1492 = vcmp.gt.f32.partialorder %v1433, 0.0
      %vm1493 = vcmp.gt.f32.partialorder %v1435, 0.0
      %vm1494 = vcmp.gt.f32.partialorder %v1437, 0.0
      %vm1495 = vcmp.gt.f32.partialorder %v1441, 0.0
      %vm1496 = vcmp.gt.f32.partialorder %v1443, 0.0
      %vm1497 = vcmp.gt.f32.partialorder %v1445, 0.0
      %vm1498 = vcmp.gt.f32.partialorder %v1447, 0.0
      %vm1499 = vcmp.gt.f32.partialorder %v1451, 0.0
      %vm1500 = vcmp.gt.f32.partialorder %v1453, 0.0
      %vm1501 = vcmp.gt.f32.partialorder %v1455, 0.0
      %vm1502 = vcmp.gt.f32.partialorder %v1457, 0.0
      %vm1503 = vcmp.gt.f32.partialorder %v1461, 0.0
      %vm1504 = vcmp.gt.f32.partialorder %v1463, 0.0
      %vm1505 = vcmp.gt.f32.partialorder %v1465, 0.0
      %vm1506 = vcmp.gt.f32.partialorder %v1467, 0.0
      %vm1507 = vcmp.gt.f32.partialorder %v1471, 0.0
      %vm1508 = vcmp.gt.f32.partialorder %v1473, 0.0
      %vm1509 = vcmp.gt.f32.partialorder %v1475, 0.0
      %vm1510 = vcmp.gt.f32.partialorder %v1477, 0.0
      %v1511 = vmul.f32 %v1401, 0.01
      %v1512 = vmul.f32 %v1403, 0.01
      %v1513 = vmul.f32 %v1405, 0.01
      %v1514 = vmul.f32 %v1407, 0.01
      %v1515 = vmul.f32 %v1411, 0.01
      %v1516 = vmul.f32 %v1413, 0.01
      %v1517 = vmul.f32 %v1415, 0.01
      %v1518 = vmul.f32 %v1417, 0.01
      %v1519 = vmul.f32 %v1421, 0.01
      %v1520 = vmul.f32 %v1423, 0.01
      %v1521 = vmul.f32 %v1425, 0.01
      %v1522 = vmul.f32 %v1427, 0.01
      %v1523 = vmul.f32 %v1431, 0.01
      %v1524 = vmul.f32 %v1433, 0.01
      %v1525 = vmul.f32 %v1435, 0.01
      %v1526 = vmul.f32 %v1437, 0.01
      %v1527 = vmul.f32 %v1441, 0.01
      %v1528 = vmul.f32 %v1443, 0.01
      %v1529 = vmul.f32 %v1445, 0.01
      %v1530 = vmul.f32 %v1447, 0.01
      %v1531 = vmul.f32 %v1451, 0.01
      %v1532 = vmul.f32 %v1453, 0.01
      %v1533 = vmul.f32 %v1455, 0.01
      %v1534 = vmul.f32 %v1457, 0.01
      %v1535 = vmul.f32 %v1461, 0.01
      %v1536 = vmul.f32 %v1463, 0.01
      %v1537 = vmul.f32 %v1465, 0.01
      %v1538 = vmul.f32 %v1467, 0.01
      %v1539 = vmul.f32 %v1471, 0.01
      %v1540 = vmul.f32 %v1473, 0.01
      %v1541 = vmul.f32 %v1475, 0.01
      %v1542 = vmul.f32 %v1477, 0.01
      %v1543 = vsel %vm1479, %v1401, %v1511
      %v1544 = vsel %vm1480, %v1403, %v1512
      %v1545 = vsel %vm1481, %v1405, %v1513
      %v1546 = vsel %vm1482, %v1407, %v1514
      %v1547 = vsel %vm1483, %v1411, %v1515
      %v1548 = vsel %vm1484, %v1413, %v1516
      %v1549 = vsel %vm1485, %v1415, %v1517
      %v1550 = vsel %vm1486, %v1417, %v1518
      %v1551 = vsel %vm1487, %v1421, %v1519
      %v1552 = vsel %vm1488, %v1423, %v1520
      %v1553 = vsel %vm1489, %v1425, %v1521
      %v1554 = vsel %vm1490, %v1427, %v1522
      %v1555 = vsel %vm1491, %v1431, %v1523
      %v1556 = vsel %vm1492, %v1433, %v1524
      %v1557 = vsel %vm1493, %v1435, %v1525
      %v1558 = vsel %vm1494, %v1437, %v1526
      %v1559 = vsel %vm1495, %v1441, %v1527
      %v1560 = vsel %vm1496, %v1443, %v1528
      %v1561 = vsel %vm1497, %v1445, %v1529
      %v1562 = vsel %vm1498, %v1447, %v1530
      %v1563 = vsel %vm1499, %v1451, %v1531
      %v1564 = vsel %vm1500, %v1453, %v1532
      %v1565 = vsel %vm1501, %v1455, %v1533
      %v1566 = vsel %vm1502, %v1457, %v1534
      %v1567 = vsel %vm1503, %v1461, %v1535
      %v1568 = vsel %vm1504, %v1463, %v1536
      %v1569 = vsel %vm1505, %v1465, %v1537
      %v1570 = vsel %vm1506, %v1467, %v1538
      %v1571 = vsel %vm1507, %v1471, %v1539
      %v1572 = vsel %vm1508, %v1473, %v1540
      %v1573 = vsel %vm1509, %v1475, %v1541
      %v1574 = vsel %vm1510, %v1477, %v1542
      %1575 = vst [vmem:[%s170 + $0x10] sm:$0xff] %v1543
      %1576 = vst [vmem:[%s170 + $0x18] sm:$0xff] %v1544
      %1577 = vst [vmem:[%s170 + $0x70] sm:$0xff] %v1545
      %1578 = vst [vmem:[%s170 + $0x78] sm:$0xff] %v1546
      %1579 = vst [vmem:[%s170 + $0xd0] sm:$0xff] %v1547
      %1580 = vst [vmem:[%s170 + $0xd8] sm:$0xff] %v1548
      %1581 = vst [vmem:[%s170 + $0x130] sm:$0xff] %v1549
      %1582 = vst [vmem:[%s170 + $0x138] sm:$0xff] %v1550
      %1583 = vst [vmem:[%s170 + $0x190] sm:$0xff] %v1551
      %1584 = vst [vmem:[%s170 + $0x198] sm:$0xff] %v1552
      %1585 = vst [vmem:[%s170 + $0x1f0] sm:$0xff] %v1553
      %1586 = vst [vmem:[%s170 + $0x1f8] sm:$0xff] %v1554
      %1587 = vst [vmem:[%s170 + $0x250] sm:$0xff] %v1555
      %1588 = vst [vmem:[%s170 + $0x258] sm:$0xff] %v1556
      %1589 = vst [vmem:[%s170 + $0x2b0] sm:$0xff] %v1557
      %1590 = vst [vmem:[%s170 + $0x2b8] sm:$0xff] %v1558
      %1591 = vst [vmem:[%s170 + $0x310] sm:$0xff] %v1559
      %1592 = vst [vmem:[%s170 + $0x318] sm:$0xff] %v1560
      %1593 = vst [vmem:[%s170 + $0x370] sm:$0xff] %v1561
      %1594 = vst [vmem:[%s170 + $0x378] sm:$0xff] %v1562
      %1595 = vst [vmem:[%s170 + $0x3d0] sm:$0xff] %v1563
      %1596 = vst [vmem:[%s170 + $0x3d8] sm:$0xff] %v1564
      %1597 = vst [vmem:[%s170 + $0x430] sm:$0xff] %v1565
      %1598 = vst [vmem:[%s170 + $0x438] sm:$0xff] %v1566
      %1599 = vst [vmem:[%s170 + $0x490] sm:$0xff] %v1567
      %1600 = vst [vmem:[%s170 + $0x498] sm:$0xff] %v1568
      %1601 = vst [vmem:[%s170 + $0x4f0] sm:$0xff] %v1569
      %1602 = vst [vmem:[%s170 + $0x4f8] sm:$0xff] %v1570
      %1603 = vst [vmem:[%s170 + $0x550] sm:$0xff] %v1571
      %1604 = vst [vmem:[%s170 + $0x558] sm:$0xff] %v1572
      %1605 = vst [vmem:[%s170 + $0x5b0] sm:$0xff] %v1573
      %1606 = vst [vmem:[%s170 + $0x5b8] sm:$0xff] %v1574
      %v1607 = vld [vmem:[#allocation2 + $0x20] sm:$0xff]
      %v1608 = vld [vmem:[#allocation2 + $0x28] sm:$0xff]
      %v1609 = vld [vmem:[#allocation2 + $0x80] sm:$0xff]
      %v1610 = vld [vmem:[#allocation2 + $0x88] sm:$0xff]
      %v1611 = vld [vmem:[#allocation2 + $0xe0] sm:$0xff]
      %v1612 = vld [vmem:[#allocation2 + $0xe8] sm:$0xff]
      %v1613 = vld [vmem:[#allocation2 + $0x140] sm:$0xff]
      %v1614 = vld [vmem:[#allocation2 + $0x148] sm:$0xff]
      %1615 = vmatprep.subr.bf16.mxu0 %v1608
      %1616 = vmatpush1.bf16.msra.mxu0 %v1607
      %1617 = vmatprep.subr.bf16.mxu0 %v1610
      %1618 = vmatpush1.bf16.msra.mxu0 %v1609
      %1619 = vmatprep.subr.bf16.mxu0 %v1612
      %1620 = vmatpush1.bf16.msra.mxu0 %v1611
      %1621 = vmatprep.subr.bf16.mxu0 %v1614
      %1622 = vmatpush1.bf16.msra.mxu0 %v1613
      %1623 = vmatprep.subr.bf16.mxu0 0
      %1624 = vmatpush1.bf16.msra.mxu0 0
      %1625 = vmatprep.subr.bf16.mxu0 0
      %1626 = vmatpush1.bf16.msra.mxu0 0
      %1627 = vmatprep.subr.bf16.mxu0 0
      %1628 = vmatpush1.bf16.msra.mxu0 0
      %1629 = vmatprep.subr.bf16.mxu0 0
      %1630 = vmatpush1.bf16.msra.mxu0 0
      %1631 = vmatprep.subr.bf16.mxu0 0
      %1632 = vmatpush1.bf16.msra.mxu0 0
      %1633 = vmatprep.subr.bf16.mxu0 0
      %1634 = vmatpush1.bf16.msra.mxu0 0
      %1635 = vmatprep.subr.bf16.mxu0 0
      %1636 = vmatpush1.bf16.msra.mxu0 0
      %1637 = vmatprep.subr.bf16.mxu0 0
      %1638 = vmatpush1.bf16.msra.mxu0 0
      %1639 = vmatprep.subr.bf16.mxu0 0
      %1640 = vmatpush1.bf16.msra.mxu0 0
      %1641 = vmatprep.subr.bf16.mxu0 0
      %1642 = vmatpush1.bf16.msra.mxu0 0
      %1643 = vmatprep.subr.bf16.mxu0 0
      %1644 = vmatpush1.bf16.msra.mxu0 0
      %1645 = vmatprep.subr.bf16.mxu0 0
      %1646 = vmatpush1.bf16.msra.mxu0 0
      %1647 = vmatprep.mubr.bf16.mxu0 0
      %1648 = vmatmul.mubr.bf16.gmra.mrb[0].mxu0 %v1094
      %v1649 = vpop.f32.mrb[0].mxu0
      %v1650 = vadd.f32 %v975, %v1649
      %v1651 = vpop.f32.mrb[0].mxu0
      %v1652 = vadd.f32 %v975, %v1651
      %v1653 = vpop.f32.mrb[0].mxu0
      %v1654 = vadd.f32 %v980, %v1653
      %v1655 = vpop.f32.mrb[0].mxu0
      %v1656 = vadd.f32 %v980, %v1655
      %1657 = vmatprep.mubr.bf16.mxu0 0
      %1658 = vmatmul.mubr.bf16.gmra.mrb[0].mxu0 %v1097
      %v1659 = vpop.f32.mrb[0].mxu0
      %v1660 = vadd.f32 %v985, %v1659
      %v1661 = vpop.f32.mrb[0].mxu0
      %v1662 = vadd.f32 %v985, %v1661
      %v1663 = vpop.f32.mrb[0].mxu0
      %v1664 = vadd.f32 %v990, %v1663
      %v1665 = vpop.f32.mrb[0].mxu0
      %v1666 = vadd.f32 %v990, %v1665
      %1667 = vmatprep.mubr.bf16.mxu0 0
      %1668 = vmatmul.mubr.bf16.gmra.mrb[0].mxu0 %v1100
      %v1669 = vpop.f32.mrb[0].mxu0
      %v1670 = vadd.f32 %v995, %v1669
      %v1671 = vpop.f32.mrb[0].mxu0
      %v1672 = vadd.f32 %v995, %v1671
      %v1673 = vpop.f32.mrb[0].mxu0
      %v1674 = vadd.f32 %v1000, %v1673
      %v1675 = vpop.f32.mrb[0].mxu0
      %v1676 = vadd.f32 %v1000, %v1675
      %1677 = vmatprep.mubr.bf16.mxu0 0
      %1678 = vmatmul.mubr.bf16.gmra.mrb[0].mxu0 %v1103
      %v1679 = vpop.f32.mrb[0].mxu0
      %v1680 = vadd.f32 %v1005, %v1679
      %v1681 = vpop.f32.mrb[0].mxu0
      %v1682 = vadd.f32 %v1005, %v1681
      %v1683 = vpop.f32.mrb[0].mxu0
      %v1684 = vadd.f32 %v1010, %v1683
      %v1685 = vpop.f32.mrb[0].mxu0
      %v1686 = vadd.f32 %v1010, %v1685
      %1687 = vmatprep.mubr.bf16.mxu0 0
      %1688 = vmatmul.mubr.bf16.gmra.mrb[0].mxu0 %v1106
      %v1689 = vpop.f32.mrb[0].mxu0
      %v1690 = vadd.f32 %v1015, %v1689
      %v1691 = vpop.f32.mrb[0].mxu0
      %v1692 = vadd.f32 %v1015, %v1691
      %v1693 = vpop.f32.mrb[0].mxu0
      %v1694 = vadd.f32 %v1020, %v1693
      %v1695 = vpop.f32.mrb[0].mxu0
      %v1696 = vadd.f32 %v1020, %v1695
      %1697 = vmatprep.mubr.bf16.mxu0 0
      %1698 = vmatmul.mubr.bf16.gmra.mrb[0].mxu0 %v1109
      %v1699 = vpop.f32.mrb[0].mxu0
      %v1700 = vadd.f32 %v1025, %v1699
      %v1701 = vpop.f32.mrb[0].mxu0
      %v1702 = vadd.f32 %v1025, %v1701
      %v1703 = vpop.f32.mrb[0].mxu0
      %v1704 = vadd.f32 %v1030, %v1703
      %v1705 = vpop.f32.mrb[0].mxu0
      %v1706 = vadd.f32 %v1030, %v1705
      %1707 = vmatprep.mubr.bf16.mxu0 0
      %1708 = vmatmul.mubr.bf16.gmra.mrb[0].mxu0 %v1112
      %v1709 = vpop.f32.mrb[0].mxu0
      %v1710 = vadd.f32 %v1035, %v1709
      %v1711 = vpop.f32.mrb[0].mxu0
      %v1712 = vadd.f32 %v1035, %v1711
      %v1713 = vpop.f32.mrb[0].mxu0
      %v1714 = vadd.f32 %v1040, %v1713
      %v1715 = vpop.f32.mrb[0].mxu0
      %v1716 = vadd.f32 %v1040, %v1715
      %1717 = vmatprep.mubr.bf16.mxu0 0
      %1718 = vmatmul.mubr.bf16.gmra.mrb[0].mxu0 %v1115
      %v1719 = vpop.f32.mrb[0].mxu0
      %v1720 = vadd.f32 %v1045, %v1719
      %v1721 = vpop.f32.mrb[0].mxu0
      %v1722 = vadd.f32 %v1045, %v1721
      %v1723 = vpop.f32.mrb[0].mxu0
      %v1724 = vadd.f32 %v1050, %v1723
      %v1725 = vpop.f32.mrb[0].mxu0
      %v1726 = vadd.f32 %v1050, %v1725
      %1727 = vdwg.mxu0
      %vm1728 = vcmp.gt.f32.partialorder %v1650, 0.0
      %vm1729 = vcmp.gt.f32.partialorder %v1652, 0.0
      %vm1730 = vcmp.gt.f32.partialorder %v1654, 0.0
      %vm1731 = vcmp.gt.f32.partialorder %v1656, 0.0
      %vm1732 = vcmp.gt.f32.partialorder %v1660, 0.0
      %vm1733 = vcmp.gt.f32.partialorder %v1662, 0.0
      %vm1734 = vcmp.gt.f32.partialorder %v1664, 0.0
      %vm1735 = vcmp.gt.f32.partialorder %v1666, 0.0
      %vm1736 = vcmp.gt.f32.partialorder %v1670, 0.0
      %vm1737 = vcmp.gt.f32.partialorder %v1672, 0.0
      %vm1738 = vcmp.gt.f32.partialorder %v1674, 0.0
      %vm1739 = vcmp.gt.f32.partialorder %v1676, 0.0
      %vm1740 = vcmp.gt.f32.partialorder %v1680, 0.0
      %vm1741 = vcmp.gt.f32.partialorder %v1682, 0.0
      %vm1742 = vcmp.gt.f32.partialorder %v1684, 0.0
      %vm1743 = vcmp.gt.f32.partialorder %v1686, 0.0
      %vm1744 = vcmp.gt.f32.partialorder %v1690, 0.0
      %vm1745 = vcmp.gt.f32.partialorder %v1692, 0.0
      %vm1746 = vcmp.gt.f32.partialorder %v1694, 0.0
      %vm1747 = vcmp.gt.f32.partialorder %v1696, 0.0
      %vm1748 = vcmp.gt.f32.partialorder %v1700, 0.0
      %vm1749 = vcmp.gt.f32.partialorder %v1702, 0.0
      %vm1750 = vcmp.gt.f32.partialorder %v1704, 0.0
      %vm1751 = vcmp.gt.f32.partialorder %v1706, 0.0
      %vm1752 = vcmp.gt.f32.partialorder %v1710, 0.0
      %vm1753 = vcmp.gt.f32.partialorder %v1712, 0.0
      %vm1754 = vcmp.gt.f32.partialorder %v1714, 0.0
      %vm1755 = vcmp.gt.f32.partialorder %v1716, 0.0
      %vm1756 = vcmp.gt.f32.partialorder %v1720, 0.0
      %vm1757 = vcmp.gt.f32.partialorder %v1722, 0.0
      %vm1758 = vcmp.gt.f32.partialorder %v1724, 0.0
      %vm1759 = vcmp.gt.f32.partialorder %v1726, 0.0
      %v1760 = vmul.f32 %v1650, 0.01
      %v1761 = vmul.f32 %v1652, 0.01
      %v1762 = vmul.f32 %v1654, 0.01
      %v1763 = vmul.f32 %v1656, 0.01
      %v1764 = vmul.f32 %v1660, 0.01
      %v1765 = vmul.f32 %v1662, 0.01
      %v1766 = vmul.f32 %v1664, 0.01
      %v1767 = vmul.f32 %v1666, 0.01
      %v1768 = vmul.f32 %v1670, 0.01
      %v1769 = vmul.f32 %v1672, 0.01
      %v1770 = vmul.f32 %v1674, 0.01
      %v1771 = vmul.f32 %v1676, 0.01
      %v1772 = vmul.f32 %v1680, 0.01
      %v1773 = vmul.f32 %v1682, 0.01
      %v1774 = vmul.f32 %v1684, 0.01
      %v1775 = vmul.f32 %v1686, 0.01
      %v1776 = vmul.f32 %v1690, 0.01
      %v1777 = vmul.f32 %v1692, 0.01
      %v1778 = vmul.f32 %v1694, 0.01
      %v1779 = vmul.f32 %v1696, 0.01
      %v1780 = vmul.f32 %v1700, 0.01
      %v1781 = vmul.f32 %v1702, 0.01
      %v1782 = vmul.f32 %v1704, 0.01
      %v1783 = vmul.f32 %v1706, 0.01
      %v1784 = vmul.f32 %v1710, 0.01
      %v1785 = vmul.f32 %v1712, 0.01
      %v1786 = vmul.f32 %v1714, 0.01
      %v1787 = vmul.f32 %v1716, 0.01
      %v1788 = vmul.f32 %v1720, 0.01
      %v1789 = vmul.f32 %v1722, 0.01
      %v1790 = vmul.f32 %v1724, 0.01
      %v1791 = vmul.f32 %v1726, 0.01
      %v1792 = vsel %vm1728, %v1650, %v1760
      %v1793 = vsel %vm1729, %v1652, %v1761
      %v1794 = vsel %vm1730, %v1654, %v1762
      %v1795 = vsel %vm1731, %v1656, %v1763
      %v1796 = vsel %vm1732, %v1660, %v1764
      %v1797 = vsel %vm1733, %v1662, %v1765
      %v1798 = vsel %vm1734, %v1664, %v1766
      %v1799 = vsel %vm1735, %v1666, %v1767
      %v1800 = vsel %vm1736, %v1670, %v1768
      %v1801 = vsel %vm1737, %v1672, %v1769
      %v1802 = vsel %vm1738, %v1674, %v1770
      %v1803 = vsel %vm1739, %v1676, %v1771
      %v1804 = vsel %vm1740, %v1680, %v1772
      %v1805 = vsel %vm1741, %v1682, %v1773
      %v1806 = vsel %vm1742, %v1684, %v1774
      %v1807 = vsel %vm1743, %v1686, %v1775
      %v1808 = vsel %vm1744, %v1690, %v1776
      %v1809 = vsel %vm1745, %v1692, %v1777
      %v1810 = vsel %vm1746, %v1694, %v1778
      %v1811 = vsel %vm1747, %v1696, %v1779
      %v1812 = vsel %vm1748, %v1700, %v1780
      %v1813 = vsel %vm1749, %v1702, %v1781
      %v1814 = vsel %vm1750, %v1704, %v1782
      %v1815 = vsel %vm1751, %v1706, %v1783
      %v1816 = vsel %vm1752, %v1710, %v1784
      %v1817 = vsel %vm1753, %v1712, %v1785
      %v1818 = vsel %vm1754, %v1714, %v1786
      %v1819 = vsel %vm1755, %v1716, %v1787
      %v1820 = vsel %vm1756, %v1720, %v1788
      %v1821 = vsel %vm1757, %v1722, %v1789
      %v1822 = vsel %vm1758, %v1724, %v1790
      %v1823 = vsel %vm1759, %v1726, %v1791
      %1824 = vst [vmem:[%s170 + $0x20] sm:$0xff] %v1792
      %1825 = vst [vmem:[%s170 + $0x28] sm:$0xff] %v1793
      %1826 = vst [vmem:[%s170 + $0x80] sm:$0xff] %v1794
      %1827 = vst [vmem:[%s170 + $0x88] sm:$0xff] %v1795
      %1828 = vst [vmem:[%s170 + $0xe0] sm:$0xff] %v1796
      %1829 = vst [vmem:[%s170 + $0xe8] sm:$0xff] %v1797
      %1830 = vst [vmem:[%s170 + $0x140] sm:$0xff] %v1798
      %1831 = vst [vmem:[%s170 + $0x148] sm:$0xff] %v1799
      %1832 = vst [vmem:[%s170 + $0x1a0] sm:$0xff] %v1800
      %1833 = vst [vmem:[%s170 + $0x1a8] sm:$0xff] %v1801
      %1834 = vst [vmem:[%s170 + $0x200] sm:$0xff] %v1802
      %1835 = vst [vmem:[%s170 + $0x208] sm:$0xff] %v1803
      %1836 = vst [vmem:[%s170 + $0x260] sm:$0xff] %v1804
      %1837 = vst [vmem:[%s170 + $0x268] sm:$0xff] %v1805
      %1838 = vst [vmem:[%s170 + $0x2c0] sm:$0xff] %v1806
      %1839 = vst [vmem:[%s170 + $0x2c8] sm:$0xff] %v1807
      %1840 = vst [vmem:[%s170 + $0x320] sm:$0xff] %v1808
      %1841 = vst [vmem:[%s170 + $0x328] sm:$0xff] %v1809
      %1842 = vst [vmem:[%s170 + $0x380] sm:$0xff] %v1810
      %1843 = vst [vmem:[%s170 + $0x388] sm:$0xff] %v1811
      %1844 = vst [vmem:[%s170 + $0x3e0] sm:$0xff] %v1812
      %1845 = vst [vmem:[%s170 + $0x3e8] sm:$0xff] %v1813
      %1846 = vst [vmem:[%s170 + $0x440] sm:$0xff] %v1814
      %1847 = vst [vmem:[%s170 + $0x448] sm:$0xff] %v1815
      %1848 = vst [vmem:[%s170 + $0x4a0] sm:$0xff] %v1816
      %1849 = vst [vmem:[%s170 + $0x4a8] sm:$0xff] %v1817
      %1850 = vst [vmem:[%s170 + $0x500] sm:$0xff] %v1818
      %1851 = vst [vmem:[%s170 + $0x508] sm:$0xff] %v1819
      %1852 = vst [vmem:[%s170 + $0x560] sm:$0xff] %v1820
      %1853 = vst [vmem:[%s170 + $0x568] sm:$0xff] %v1821
      %1854 = vst [vmem:[%s170 + $0x5c0] sm:$0xff] %v1822
      %1855 = vst [vmem:[%s170 + $0x5c8] sm:$0xff] %v1823
      %v1856 = vld [vmem:[#allocation2 + $0x30] sm:$0xff]
      %v1857 = vld [vmem:[#allocation2 + $0x38] sm:$0xff]
      %v1858 = vld [vmem:[#allocation2 + $0x90] sm:$0xff]
      %v1859 = vld [vmem:[#allocation2 + $0x98] sm:$0xff]
      %v1860 = vld [vmem:[#allocation2 + $0xf0] sm:$0xff]
      %v1861 = vld [vmem:[#allocation2 + $0xf8] sm:$0xff]
      %v1862 = vld [vmem:[#allocation2 + $0x150] sm:$0xff]
      %v1863 = vld [vmem:[#allocation2 + $0x158] sm:$0xff]
      %1864 = vmatprep.subr.bf16.mxu0 %v1857
      %1865 = vmatpush1.bf16.msra.mxu0 %v1856
      %1866 = vmatprep.subr.bf16.mxu0 %v1859
      %1867 = vmatpush1.bf16.msra.mxu0 %v1858
      %1868 = vmatprep.subr.bf16.mxu0 %v1861
      %1869 = vmatpush1.bf16.msra.mxu0 %v1860
      %1870 = vmatprep.subr.bf16.mxu0 %v1863
      %1871 = vmatpush1.bf16.msra.mxu0 %v1862
      %1872 = vmatprep.subr.bf16.mxu0 0
      %1873 = vmatpush1.bf16.msra.mxu0 0
      %1874 = vmatprep.subr.bf16.mxu0 0
      %1875 = vmatpush1.bf16.msra.mxu0 0
      %1876 = vmatprep.subr.bf16.mxu0 0
      %1877 = vmatpush1.bf16.msra.mxu0 0
      %1878 = vmatprep.subr.bf16.mxu0 0
      %1879 = vmatpush1.bf16.msra.mxu0 0
      %1880 = vmatprep.subr.bf16.mxu0 0
      %1881 = vmatpush1.bf16.msra.mxu0 0
      %1882 = vmatprep.subr.bf16.mxu0 0
      %1883 = vmatpush1.bf16.msra.mxu0 0
      %1884 = vmatprep.subr.bf16.mxu0 0
      %1885 = vmatpush1.bf16.msra.mxu0 0
      %1886 = vmatprep.subr.bf16.mxu0 0
      %1887 = vmatpush1.bf16.msra.mxu0 0
      %1888 = vmatprep.subr.bf16.mxu0 0
      %1889 = vmatpush1.bf16.msra.mxu0 0
      %1890 = vmatprep.subr.bf16.mxu0 0
      %1891 = vmatpush1.bf16.msra.mxu0 0
      %1892 = vmatprep.subr.bf16.mxu0 0
      %1893 = vmatpush1.bf16.msra.mxu0 0
      %1894 = vmatprep.subr.bf16.mxu0 0
      %1895 = vmatpush1.bf16.msra.mxu0 0
      %1896 = vmatprep.mubr.bf16.mxu0 0
      %1897 = vmatmul.mubr.bf16.gmra.mrb[0].mxu0 %v1094
      %v1898 = vpop.f32.mrb[0].mxu0
      %v1899 = vadd.f32 %v975, %v1898
      %v1900 = vpop.f32.mrb[0].mxu0
      %v1901 = vadd.f32 %v975, %v1900
      %v1902 = vpop.f32.mrb[0].mxu0
      %v1903 = vadd.f32 %v980, %v1902
      %v1904 = vpop.f32.mrb[0].mxu0
      %v1905 = vadd.f32 %v980, %v1904
      %1906 = vmatprep.mubr.bf16.mxu0 0
      %1907 = vmatmul.mubr.bf16.gmra.mrb[0].mxu0 %v1097
      %v1908 = vpop.f32.mrb[0].mxu0
      %v1909 = vadd.f32 %v985, %v1908
      %v1910 = vpop.f32.mrb[0].mxu0
      %v1911 = vadd.f32 %v985, %v1910
      %v1912 = vpop.f32.mrb[0].mxu0
      %v1913 = vadd.f32 %v990, %v1912
      %v1914 = vpop.f32.mrb[0].mxu0
      %v1915 = vadd.f32 %v990, %v1914
      %1916 = vmatprep.mubr.bf16.mxu0 0
      %1917 = vmatmul.mubr.bf16.gmra.mrb[0].mxu0 %v1100
      %v1918 = vpop.f32.mrb[0].mxu0
      %v1919 = vadd.f32 %v995, %v1918
      %v1920 = vpop.f32.mrb[0].mxu0
      %v1921 = vadd.f32 %v995, %v1920
      %v1922 = vpop.f32.mrb[0].mxu0
      %v1923 = vadd.f32 %v1000, %v1922
      %v1924 = vpop.f32.mrb[0].mxu0
      %v1925 = vadd.f32 %v1000, %v1924
      %1926 = vmatprep.mubr.bf16.mxu0 0
      %1927 = vmatmul.mubr.bf16.gmra.mrb[0].mxu0 %v1103
      %v1928 = vpop.f32.mrb[0].mxu0
      %v1929 = vadd.f32 %v1005, %v1928
      %v1930 = vpop.f32.mrb[0].mxu0
      %v1931 = vadd.f32 %v1005, %v1930
      %v1932 = vpop.f32.mrb[0].mxu0
      %v1933 = vadd.f32 %v1010, %v1932
      %v1934 = vpop.f32.mrb[0].mxu0
      %v1935 = vadd.f32 %v1010, %v1934
      %1936 = vmatprep.mubr.bf16.mxu0 0
      %1937 = vmatmul.mubr.bf16.gmra.mrb[0].mxu0 %v1106
      %v1938 = vpop.f32.mrb[0].mxu0
      %v1939 = vadd.f32 %v1015, %v1938
      %v1940 = vpop.f32.mrb[0].mxu0
      %v1941 = vadd.f32 %v1015, %v1940
      %v1942 = vpop.f32.mrb[0].mxu0
      %v1943 = vadd.f32 %v1020, %v1942
      %v1944 = vpop.f32.mrb[0].mxu0
      %v1945 = vadd.f32 %v1020, %v1944
      %1946 = vmatprep.mubr.bf16.mxu0 0
      %1947 = vmatmul.mubr.bf16.gmra.mrb[0].mxu0 %v1109
      %v1948 = vpop.f32.mrb[0].mxu0
      %v1949 = vadd.f32 %v1025, %v1948
      %v1950 = vpop.f32.mrb[0].mxu0
      %v1951 = vadd.f32 %v1025, %v1950
      %v1952 = vpop.f32.mrb[0].mxu0
      %v1953 = vadd.f32 %v1030, %v1952
      %v1954 = vpop.f32.mrb[0].mxu0
      %v1955 = vadd.f32 %v1030, %v1954
      %1956 = vmatprep.mubr.bf16.mxu0 0
      %1957 = vmatmul.mubr.bf16.gmra.mrb[0].mxu0 %v1112
      %v1958 = vpop.f32.mrb[0].mxu0
      %v1959 = vadd.f32 %v1035, %v1958
      %v1960 = vpop.f32.mrb[0].mxu0
      %v1961 = vadd.f32 %v1035, %v1960
      %v1962 = vpop.f32.mrb[0].mxu0
      %v1963 = vadd.f32 %v1040, %v1962
      %v1964 = vpop.f32.mrb[0].mxu0
      %v1965 = vadd.f32 %v1040, %v1964
      %1966 = vmatprep.mubr.bf16.mxu0 0
      %1967 = vmatmul.mubr.bf16.gmra.mrb[0].mxu0 %v1115
      %v1968 = vpop.f32.mrb[0].mxu0
      %v1969 = vadd.f32 %v1045, %v1968
      %v1970 = vpop.f32.mrb[0].mxu0
      %v1971 = vadd.f32 %v1045, %v1970
      %v1972 = vpop.f32.mrb[0].mxu0
      %v1973 = vadd.f32 %v1050, %v1972
      %v1974 = vpop.f32.mrb[0].mxu0
      %v1975 = vadd.f32 %v1050, %v1974
      %1976 = vdwg.mxu0
      %vm1977 = vcmp.gt.f32.partialorder %v1899, 0.0
      %vm1978 = vcmp.gt.f32.partialorder %v1901, 0.0
      %vm1979 = vcmp.gt.f32.partialorder %v1903, 0.0
      %vm1980 = vcmp.gt.f32.partialorder %v1905, 0.0
      %vm1981 = vcmp.gt.f32.partialorder %v1909, 0.0
      %vm1982 = vcmp.gt.f32.partialorder %v1911, 0.0
      %vm1983 = vcmp.gt.f32.partialorder %v1913, 0.0
      %vm1984 = vcmp.gt.f32.partialorder %v1915, 0.0
      %vm1985 = vcmp.gt.f32.partialorder %v1919, 0.0
      %vm1986 = vcmp.gt.f32.partialorder %v1921, 0.0
      %vm1987 = vcmp.gt.f32.partialorder %v1923, 0.0
      %vm1988 = vcmp.gt.f32.partialorder %v1925, 0.0
      %vm1989 = vcmp.gt.f32.partialorder %v1929, 0.0
      %vm1990 = vcmp.gt.f32.partialorder %v1931, 0.0
      %vm1991 = vcmp.gt.f32.partialorder %v1933, 0.0
      %vm1992 = vcmp.gt.f32.partialorder %v1935, 0.0
      %vm1993 = vcmp.gt.f32.partialorder %v1939, 0.0
      %vm1994 = vcmp.gt.f32.partialorder %v1941, 0.0
      %vm1995 = vcmp.gt.f32.partialorder %v1943, 0.0
      %vm1996 = vcmp.gt.f32.partialorder %v1945, 0.0
      %vm1997 = vcmp.gt.f32.partialorder %v1949, 0.0
      %vm1998 = vcmp.gt.f32.partialorder %v1951, 0.0
      %vm1999 = vcmp.gt.f32.partialorder %v1953, 0.0
      %vm2000 = vcmp.gt.f32.partialorder %v1955, 0.0
      %vm2001 = vcmp.gt.f32.partialorder %v1959, 0.0
      %vm2002 = vcmp.gt.f32.partialorder %v1961, 0.0
      %vm2003 = vcmp.gt.f32.partialorder %v1963, 0.0
      %vm2004 = vcmp.gt.f32.partialorder %v1965, 0.0
      %vm2005 = vcmp.gt.f32.partialorder %v1969, 0.0
      %vm2006 = vcmp.gt.f32.partialorder %v1971, 0.0
      %vm2007 = vcmp.gt.f32.partialorder %v1973, 0.0
      %vm2008 = vcmp.gt.f32.partialorder %v1975, 0.0
      %v2009 = vmul.f32 %v1899, 0.01
      %v2010 = vmul.f32 %v1901, 0.01
      %v2011 = vmul.f32 %v1903, 0.01
      %v2012 = vmul.f32 %v1905, 0.01
      %v2013 = vmul.f32 %v1909, 0.01
      %v2014 = vmul.f32 %v1911, 0.01
      %v2015 = vmul.f32 %v1913, 0.01
      %v2016 = vmul.f32 %v1915, 0.01
      %v2017 = vmul.f32 %v1919, 0.01
      %v2018 = vmul.f32 %v1921, 0.01
      %v2019 = vmul.f32 %v1923, 0.01
      %v2020 = vmul.f32 %v1925, 0.01
      %v2021 = vmul.f32 %v1929, 0.01
      %v2022 = vmul.f32 %v1931, 0.01
      %v2023 = vmul.f32 %v1933, 0.01
      %v2024 = vmul.f32 %v1935, 0.01
      %v2025 = vmul.f32 %v1939, 0.01
      %v2026 = vmul.f32 %v1941, 0.01
      %v2027 = vmul.f32 %v1943, 0.01
      %v2028 = vmul.f32 %v1945, 0.01
      %v2029 = vmul.f32 %v1949, 0.01
      %v2030 = vmul.f32 %v1951, 0.01
      %v2031 = vmul.f32 %v1953, 0.01
      %v2032 = vmul.f32 %v1955, 0.01
      %v2033 = vmul.f32 %v1959, 0.01
      %v2034 = vmul.f32 %v1961, 0.01
      %v2035 = vmul.f32 %v1963, 0.01
      %v2036 = vmul.f32 %v1965, 0.01
      %v2037 = vmul.f32 %v1969, 0.01
      %v2038 = vmul.f32 %v1971, 0.01
      %v2039 = vmul.f32 %v1973, 0.01
      %v2040 = vmul.f32 %v1975, 0.01
      %v2041 = vsel %vm1977, %v1899, %v2009
      %v2042 = vsel %vm1978, %v1901, %v2010
      %v2043 = vsel %vm1979, %v1903, %v2011
      %v2044 = vsel %vm1980, %v1905, %v2012
      %v2045 = vsel %vm1981, %v1909, %v2013
      %v2046 = vsel %vm1982, %v1911, %v2014
      %v2047 = vsel %vm1983, %v1913, %v2015
      %v2048 = vsel %vm1984, %v1915, %v2016
      %v2049 = vsel %vm1985, %v1919, %v2017
      %v2050 = vsel %vm1986, %v1921, %v2018
      %v2051 = vsel %vm1987, %v1923, %v2019
      %v2052 = vsel %vm1988, %v1925, %v2020
      %v2053 = vsel %vm1989, %v1929, %v2021
      %v2054 = vsel %vm1990, %v1931, %v2022
      %v2055 = vsel %vm1991, %v1933, %v2023
      %v2056 = vsel %vm1992, %v1935, %v2024
      %v2057 = vsel %vm1993, %v1939, %v2025
      %v2058 = vsel %vm1994, %v1941, %v2026
      %v2059 = vsel %vm1995, %v1943, %v2027
      %v2060 = vsel %vm1996, %v1945, %v2028
      %v2061 = vsel %vm1997, %v1949, %v2029
      %v2062 = vsel %vm1998, %v1951, %v2030
      %v2063 = vsel %vm1999, %v1953, %v2031
      %v2064 = vsel %vm2000, %v1955, %v2032
      %v2065 = vsel %vm2001, %v1959, %v2033
      %v2066 = vsel %vm2002, %v1961, %v2034
      %v2067 = vsel %vm2003, %v1963, %v2035
      %v2068 = vsel %vm2004, %v1965, %v2036
      %v2069 = vsel %vm2005, %v1969, %v2037
      %v2070 = vsel %vm2006, %v1971, %v2038
      %v2071 = vsel %vm2007, %v1973, %v2039
      %v2072 = vsel %vm2008, %v1975, %v2040
      %2073 = vst [vmem:[%s170 + $0x30] sm:$0xff] %v2041
      %2074 = vst [vmem:[%s170 + $0x38] sm:$0xff] %v2042
      %2075 = vst [vmem:[%s170 + $0x90] sm:$0xff] %v2043
      %2076 = vst [vmem:[%s170 + $0x98] sm:$0xff] %v2044
      %2077 = vst [vmem:[%s170 + $0xf0] sm:$0xff] %v2045
      %2078 = vst [vmem:[%s170 + $0xf8] sm:$0xff] %v2046
      %2079 = vst [vmem:[%s170 + $0x150] sm:$0xff] %v2047
      %2080 = vst [vmem:[%s170 + $0x158] sm:$0xff] %v2048
      %2081 = vst [vmem:[%s170 + $0x1b0] sm:$0xff] %v2049
      %2082 = vst [vmem:[%s170 + $0x1b8] sm:$0xff] %v2050
      %2083 = vst [vmem:[%s170 + $0x210] sm:$0xff] %v2051
      %2084 = vst [vmem:[%s170 + $0x218] sm:$0xff] %v2052
      %2085 = vst [vmem:[%s170 + $0x270] sm:$0xff] %v2053
      %2086 = vst [vmem:[%s170 + $0x278] sm:$0xff] %v2054
      %2087 = vst [vmem:[%s170 + $0x2d0] sm:$0xff] %v2055
      %2088 = vst [vmem:[%s170 + $0x2d8] sm:$0xff] %v2056
      %2089 = vst [vmem:[%s170 + $0x330] sm:$0xff] %v2057
      %2090 = vst [vmem:[%s170 + $0x338] sm:$0xff] %v2058
      %2091 = vst [vmem:[%s170 + $0x390] sm:$0xff] %v2059
      %2092 = vst [vmem:[%s170 + $0x398] sm:$0xff] %v2060
      %2093 = vst [vmem:[%s170 + $0x3f0] sm:$0xff] %v2061
      %2094 = vst [vmem:[%s170 + $0x3f8] sm:$0xff] %v2062
      %2095 = vst [vmem:[%s170 + $0x450] sm:$0xff] %v2063
      %2096 = vst [vmem:[%s170 + $0x458] sm:$0xff] %v2064
      %2097 = vst [vmem:[%s170 + $0x4b0] sm:$0xff] %v2065
      %2098 = vst [vmem:[%s170 + $0x4b8] sm:$0xff] %v2066
      %2099 = vst [vmem:[%s170 + $0x510] sm:$0xff] %v2067
      %2100 = vst [vmem:[%s170 + $0x518] sm:$0xff] %v2068
      %2101 = vst [vmem:[%s170 + $0x570] sm:$0xff] %v2069
      %2102 = vst [vmem:[%s170 + $0x578] sm:$0xff] %v2070
      %2103 = vst [vmem:[%s170 + $0x5d0] sm:$0xff] %v2071
      %2104 = vst [vmem:[%s170 + $0x5d8] sm:$0xff] %v2072
      %v2105 = vld [vmem:[#allocation2 + $0x40] sm:$0xff]
      %v2106 = vld [vmem:[#allocation2 + $0x48] sm:$0xff]
      %v2107 = vld [vmem:[#allocation2 + $0xa0] sm:$0xff]
      %v2108 = vld [vmem:[#allocation2 + $0xa8] sm:$0xff]
      %v2109 = vld [vmem:[#allocation2 + $0x100] sm:$0xff]
      %v2110 = vld [vmem:[#allocation2 + $0x108] sm:$0xff]
      %v2111 = vld [vmem:[#allocation2 + $0x160] sm:$0xff]
      %v2112 = vld [vmem:[#allocation2 + $0x168] sm:$0xff]
      %2113 = vmatprep.subr.bf16.mxu0 %v2106
      %2114 = vmatpush1.bf16.msra.mxu0 %v2105
      %2115 = vmatprep.subr.bf16.mxu0 %v2108
      %2116 = vmatpush1.bf16.msra.mxu0 %v2107
      %2117 = vmatprep.subr.bf16.mxu0 %v2110
      %2118 = vmatpush1.bf16.msra.mxu0 %v2109
      %2119 = vmatprep.subr.bf16.mxu0 %v2112
      %2120 = vmatpush1.bf16.msra.mxu0 %v2111
      %2121 = vmatprep.subr.bf16.mxu0 0
      %2122 = vmatpush1.bf16.msra.mxu0 0
      %2123 = vmatprep.subr.bf16.mxu0 0
      %2124 = vmatpush1.bf16.msra.mxu0 0
      %2125 = vmatprep.subr.bf16.mxu0 0
      %2126 = vmatpush1.bf16.msra.mxu0 0
      %2127 = vmatprep.subr.bf16.mxu0 0
      %2128 = vmatpush1.bf16.msra.mxu0 0
      %2129 = vmatprep.subr.bf16.mxu0 0
      %2130 = vmatpush1.bf16.msra.mxu0 0
      %2131 = vmatprep.subr.bf16.mxu0 0
      %2132 = vmatpush1.bf16.msra.mxu0 0
      %2133 = vmatprep.subr.bf16.mxu0 0
      %2134 = vmatpush1.bf16.msra.mxu0 0
      %2135 = vmatprep.subr.bf16.mxu0 0
      %2136 = vmatpush1.bf16.msra.mxu0 0
      %2137 = vmatprep.subr.bf16.mxu0 0
      %2138 = vmatpush1.bf16.msra.mxu0 0
      %2139 = vmatprep.subr.bf16.mxu0 0
      %2140 = vmatpush1.bf16.msra.mxu0 0
      %2141 = vmatprep.subr.bf16.mxu0 0
      %2142 = vmatpush1.bf16.msra.mxu0 0
      %2143 = vmatprep.subr.bf16.mxu0 0
      %2144 = vmatpush1.bf16.msra.mxu0 0
      %2145 = vmatprep.mubr.bf16.mxu0 0
      %2146 = vmatmul.mubr.bf16.gmra.mrb[0].mxu0 %v1094
      %v2147 = vpop.f32.mrb[0].mxu0
      %v2148 = vadd.f32 %v975, %v2147
      %v2149 = vpop.f32.mrb[0].mxu0
      %v2150 = vadd.f32 %v975, %v2149
      %v2151 = vpop.f32.mrb[0].mxu0
      %v2152 = vadd.f32 %v980, %v2151
      %v2153 = vpop.f32.mrb[0].mxu0
      %v2154 = vadd.f32 %v980, %v2153
      %2155 = vmatprep.mubr.bf16.mxu0 0
      %2156 = vmatmul.mubr.bf16.gmra.mrb[0].mxu0 %v1097
      %v2157 = vpop.f32.mrb[0].mxu0
      %v2158 = vadd.f32 %v985, %v2157
      %v2159 = vpop.f32.mrb[0].mxu0
      %v2160 = vadd.f32 %v985, %v2159
      %v2161 = vpop.f32.mrb[0].mxu0
      %v2162 = vadd.f32 %v990, %v2161
      %v2163 = vpop.f32.mrb[0].mxu0
      %v2164 = vadd.f32 %v990, %v2163
      %2165 = vmatprep.mubr.bf16.mxu0 0
      %2166 = vmatmul.mubr.bf16.gmra.mrb[0].mxu0 %v1100
      %v2167 = vpop.f32.mrb[0].mxu0
      %v2168 = vadd.f32 %v995, %v2167
      %v2169 = vpop.f32.mrb[0].mxu0
      %v2170 = vadd.f32 %v995, %v2169
      %v2171 = vpop.f32.mrb[0].mxu0
      %v2172 = vadd.f32 %v1000, %v2171
      %v2173 = vpop.f32.mrb[0].mxu0
      %v2174 = vadd.f32 %v1000, %v2173
      %2175 = vmatprep.mubr.bf16.mxu0 0
      %2176 = vmatmul.mubr.bf16.gmra.mrb[0].mxu0 %v1103
      %v2177 = vpop.f32.mrb[0].mxu0
      %v2178 = vadd.f32 %v1005, %v2177
      %v2179 = vpop.f32.mrb[0].mxu0
      %v2180 = vadd.f32 %v1005, %v2179
      %v2181 = vpop.f32.mrb[0].mxu0
      %v2182 = vadd.f32 %v1010, %v2181
      %v2183 = vpop.f32.mrb[0].mxu0
      %v2184 = vadd.f32 %v1010, %v2183
      %2185 = vmatprep.mubr.bf16.mxu0 0
      %2186 = vmatmul.mubr.bf16.gmra.mrb[0].mxu0 %v1106
      %v2187 = vpop.f32.mrb[0].mxu0
      %v2188 = vadd.f32 %v1015, %v2187
      %v2189 = vpop.f32.mrb[0].mxu0
      %v2190 = vadd.f32 %v1015, %v2189
      %v2191 = vpop.f32.mrb[0].mxu0
      %v2192 = vadd.f32 %v1020, %v2191
      %v2193 = vpop.f32.mrb[0].mxu0
      %v2194 = vadd.f32 %v1020, %v2193
      %2195 = vmatprep.mubr.bf16.mxu0 0
      %2196 = vmatmul.mubr.bf16.gmra.mrb[0].mxu0 %v1109
      %v2197 = vpop.f32.mrb[0].mxu0
      %v2198 = vadd.f32 %v1025, %v2197
      %v2199 = vpop.f32.mrb[0].mxu0
      %v2200 = vadd.f32 %v1025, %v2199
      %v2201 = vpop.f32.mrb[0].mxu0
      %v2202 = vadd.f32 %v1030, %v2201
      %v2203 = vpop.f32.mrb[0].mxu0
      %v2204 = vadd.f32 %v1030, %v2203
      %2205 = vmatprep.mubr.bf16.mxu0 0
      %2206 = vmatmul.mubr.bf16.gmra.mrb[0].mxu0 %v1112
      %v2207 = vpop.f32.mrb[0].mxu0
      %v2208 = vadd.f32 %v1035, %v2207
      %v2209 = vpop.f32.mrb[0].mxu0
      %v2210 = vadd.f32 %v1035, %v2209
      %v2211 = vpop.f32.mrb[0].mxu0
      %v2212 = vadd.f32 %v1040, %v2211
      %v2213 = vpop.f32.mrb[0].mxu0
      %v2214 = vadd.f32 %v1040, %v2213
      %2215 = vmatprep.mubr.bf16.mxu0 0
      %2216 = vmatmul.mubr.bf16.gmra.mrb[0].mxu0 %v1115
      %v2217 = vpop.f32.mrb[0].mxu0
      %v2218 = vadd.f32 %v1045, %v2217
      %v2219 = vpop.f32.mrb[0].mxu0
      %v2220 = vadd.f32 %v1045, %v2219
      %v2221 = vpop.f32.mrb[0].mxu0
      %v2222 = vadd.f32 %v1050, %v2221
      %v2223 = vpop.f32.mrb[0].mxu0
      %v2224 = vadd.f32 %v1050, %v2223
      %2225 = vdwg.mxu0
      %vm2226 = vcmp.gt.f32.partialorder %v2148, 0.0
      %vm2227 = vcmp.gt.f32.partialorder %v2150, 0.0
      %vm2228 = vcmp.gt.f32.partialorder %v2152, 0.0
      %vm2229 = vcmp.gt.f32.partialorder %v2154, 0.0
      %vm2230 = vcmp.gt.f32.partialorder %v2158, 0.0
      %vm2231 = vcmp.gt.f32.partialorder %v2160, 0.0
      %vm2232 = vcmp.gt.f32.partialorder %v2162, 0.0
      %vm2233 = vcmp.gt.f32.partialorder %v2164, 0.0
      %vm2234 = vcmp.gt.f32.partialorder %v2168, 0.0
      %vm2235 = vcmp.gt.f32.partialorder %v2170, 0.0
      %vm2236 = vcmp.gt.f32.partialorder %v2172, 0.0
      %vm2237 = vcmp.gt.f32.partialorder %v2174, 0.0
      %vm2238 = vcmp.gt.f32.partialorder %v2178, 0.0
      %vm2239 = vcmp.gt.f32.partialorder %v2180, 0.0
      %vm2240 = vcmp.gt.f32.partialorder %v2182, 0.0
      %vm2241 = vcmp.gt.f32.partialorder %v2184, 0.0
      %vm2242 = vcmp.gt.f32.partialorder %v2188, 0.0
      %vm2243 = vcmp.gt.f32.partialorder %v2190, 0.0
      %vm2244 = vcmp.gt.f32.partialorder %v2192, 0.0
      %vm2245 = vcmp.gt.f32.partialorder %v2194, 0.0
      %vm2246 = vcmp.gt.f32.partialorder %v2198, 0.0
      %vm2247 = vcmp.gt.f32.partialorder %v2200, 0.0
      %vm2248 = vcmp.gt.f32.partialorder %v2202, 0.0
      %vm2249 = vcmp.gt.f32.partialorder %v2204, 0.0
      %vm2250 = vcmp.gt.f32.partialorder %v2208, 0.0
      %vm2251 = vcmp.gt.f32.partialorder %v2210, 0.0
      %vm2252 = vcmp.gt.f32.partialorder %v2212, 0.0
      %vm2253 = vcmp.gt.f32.partialorder %v2214, 0.0
      %vm2254 = vcmp.gt.f32.partialorder %v2218, 0.0
      %vm2255 = vcmp.gt.f32.partialorder %v2220, 0.0
      %vm2256 = vcmp.gt.f32.partialorder %v2222, 0.0
      %vm2257 = vcmp.gt.f32.partialorder %v2224, 0.0
      %v2258 = vmul.f32 %v2148, 0.01
      %v2259 = vmul.f32 %v2150, 0.01
      %v2260 = vmul.f32 %v2152, 0.01
      %v2261 = vmul.f32 %v2154, 0.01
      %v2262 = vmul.f32 %v2158, 0.01
      %v2263 = vmul.f32 %v2160, 0.01
      %v2264 = vmul.f32 %v2162, 0.01
      %v2265 = vmul.f32 %v2164, 0.01
      %v2266 = vmul.f32 %v2168, 0.01
      %v2267 = vmul.f32 %v2170, 0.01
      %v2268 = vmul.f32 %v2172, 0.01
      %v2269 = vmul.f32 %v2174, 0.01
      %v2270 = vmul.f32 %v2178, 0.01
      %v2271 = vmul.f32 %v2180, 0.01
      %v2272 = vmul.f32 %v2182, 0.01
      %v2273 = vmul.f32 %v2184, 0.01
      %v2274 = vmul.f32 %v2188, 0.01
      %v2275 = vmul.f32 %v2190, 0.01
      %v2276 = vmul.f32 %v2192, 0.01
      %v2277 = vmul.f32 %v2194, 0.01
      %v2278 = vmul.f32 %v2198, 0.01
      %v2279 = vmul.f32 %v2200, 0.01
      %v2280 = vmul.f32 %v2202, 0.01
      %v2281 = vmul.f32 %v2204, 0.01
      %v2282 = vmul.f32 %v2208, 0.01
      %v2283 = vmul.f32 %v2210, 0.01
      %v2284 = vmul.f32 %v2212, 0.01
      %v2285 = vmul.f32 %v2214, 0.01
      %v2286 = vmul.f32 %v2218, 0.01
      %v2287 = vmul.f32 %v2220, 0.01
      %v2288 = vmul.f32 %v2222, 0.01
      %v2289 = vmul.f32 %v2224, 0.01
      %v2290 = vsel %vm2226, %v2148, %v2258
      %v2291 = vsel %vm2227, %v2150, %v2259
      %v2292 = vsel %vm2228, %v2152, %v2260
      %v2293 = vsel %vm2229, %v2154, %v2261
      %v2294 = vsel %vm2230, %v2158, %v2262
      %v2295 = vsel %vm2231, %v2160, %v2263
      %v2296 = vsel %vm2232, %v2162, %v2264
      %v2297 = vsel %vm2233, %v2164, %v2265
      %v2298 = vsel %vm2234, %v2168, %v2266
      %v2299 = vsel %vm2235, %v2170, %v2267
      %v2300 = vsel %vm2236, %v2172, %v2268
      %v2301 = vsel %vm2237, %v2174, %v2269
      %v2302 = vsel %vm2238, %v2178, %v2270
      %v2303 = vsel %vm2239, %v2180, %v2271
      %v2304 = vsel %vm2240, %v2182, %v2272
      %v2305 = vsel %vm2241, %v2184, %v2273
      %v2306 = vsel %vm2242, %v2188, %v2274
      %v2307 = vsel %vm2243, %v2190, %v2275
      %v2308 = vsel %vm2244, %v2192, %v2276
      %v2309 = vsel %vm2245, %v2194, %v2277
      %v2310 = vsel %vm2246, %v2198, %v2278
      %v2311 = vsel %vm2247, %v2200, %v2279
      %v2312 = vsel %vm2248, %v2202, %v2280
      %v2313 = vsel %vm2249, %v2204, %v2281
      %v2314 = vsel %vm2250, %v2208, %v2282
      %v2315 = vsel %vm2251, %v2210, %v2283
      %v2316 = vsel %vm2252, %v2212, %v2284
      %v2317 = vsel %vm2253, %v2214, %v2285
      %v2318 = vsel %vm2254, %v2218, %v2286
      %v2319 = vsel %vm2255, %v2220, %v2287
      %v2320 = vsel %vm2256, %v2222, %v2288
      %v2321 = vsel %vm2257, %v2224, %v2289
      %2322 = vst [vmem:[%s170 + $0x40] sm:$0xff] %v2290
      %2323 = vst [vmem:[%s170 + $0x48] sm:$0xff] %v2291
      %2324 = vst [vmem:[%s170 + $0xa0] sm:$0xff] %v2292
      %2325 = vst [vmem:[%s170 + $0xa8] sm:$0xff] %v2293
      %2326 = vst [vmem:[%s170 + $0x100] sm:$0xff] %v2294
      %2327 = vst [vmem:[%s170 + $0x108] sm:$0xff] %v2295
      %2328 = vst [vmem:[%s170 + $0x160] sm:$0xff] %v2296
      %2329 = vst [vmem:[%s170 + $0x168] sm:$0xff] %v2297
      %2330 = vst [vmem:[%s170 + $0x1c0] sm:$0xff] %v2298
      %2331 = vst [vmem:[%s170 + $0x1c8] sm:$0xff] %v2299
      %2332 = vst [vmem:[%s170 + $0x220] sm:$0xff] %v2300
      %2333 = vst [vmem:[%s170 + $0x228] sm:$0xff] %v2301
      %2334 = vst [vmem:[%s170 + $0x280] sm:$0xff] %v2302
      %2335 = vst [vmem:[%s170 + $0x288] sm:$0xff] %v2303
      %2336 = vst [vmem:[%s170 + $0x2e0] sm:$0xff] %v2304
      %2337 = vst [vmem:[%s170 + $0x2e8] sm:$0xff] %v2305
      %2338 = vst [vmem:[%s170 + $0x340] sm:$0xff] %v2306
      %2339 = vst [vmem:[%s170 + $0x348] sm:$0xff] %v2307
      %2340 = vst [vmem:[%s170 + $0x3a0] sm:$0xff] %v2308
      %2341 = vst [vmem:[%s170 + $0x3a8] sm:$0xff] %v2309
      %2342 = vst [vmem:[%s170 + $0x400] sm:$0xff] %v2310
      %2343 = vst [vmem:[%s170 + $0x408] sm:$0xff] %v2311
      %2344 = vst [vmem:[%s170 + $0x460] sm:$0xff] %v2312
      %2345 = vst [vmem:[%s170 + $0x468] sm:$0xff] %v2313
      %2346 = vst [vmem:[%s170 + $0x4c0] sm:$0xff] %v2314
      %2347 = vst [vmem:[%s170 + $0x4c8] sm:$0xff] %v2315
      %2348 = vst [vmem:[%s170 + $0x520] sm:$0xff] %v2316
      %2349 = vst [vmem:[%s170 + $0x528] sm:$0xff] %v2317
      %2350 = vst [vmem:[%s170 + $0x580] sm:$0xff] %v2318
      %2351 = vst [vmem:[%s170 + $0x588] sm:$0xff] %v2319
      %2352 = vst [vmem:[%s170 + $0x5e0] sm:$0xff] %v2320
      %2353 = vst [vmem:[%s170 + $0x5e8] sm:$0xff] %v2321
      %v2354 = vld [vmem:[#allocation2 + $0x50] sm:$0xff]
      %v2355 = vld [vmem:[#allocation2 + $0x58] sm:$0xff]
      %v2356 = vld [vmem:[#allocation2 + $0xb0] sm:$0xff]
      %v2357 = vld [vmem:[#allocation2 + $0xb8] sm:$0xff]
      %v2358 = vld [vmem:[#allocation2 + $0x110] sm:$0xff]
      %v2359 = vld [vmem:[#allocation2 + $0x118] sm:$0xff]
      %v2360 = vld [vmem:[#allocation2 + $0x170] sm:$0xff]
      %v2361 = vld [vmem:[#allocation2 + $0x178] sm:$0xff]
      %2362 = vmatprep.subr.bf16.mxu0 %v2355
      %2363 = vmatpush1.bf16.msra.mxu0 %v2354
      %2364 = vmatprep.subr.bf16.mxu0 %v2357
      %2365 = vmatpush1.bf16.msra.mxu0 %v2356
      %2366 = vmatprep.subr.bf16.mxu0 %v2359
      %2367 = vmatpush1.bf16.msra.mxu0 %v2358
      %2368 = vmatprep.subr.bf16.mxu0 %v2361
      %2369 = vmatpush1.bf16.msra.mxu0 %v2360
      %2370 = vmatprep.subr.bf16.mxu0 0
      %2371 = vmatpush1.bf16.msra.mxu0 0
      %2372 = vmatprep.subr.bf16.mxu0 0
      %2373 = vmatpush1.bf16.msra.mxu0 0
      %2374 = vmatprep.subr.bf16.mxu0 0
      %2375 = vmatpush1.bf16.msra.mxu0 0
      %2376 = vmatprep.subr.bf16.mxu0 0
      %2377 = vmatpush1.bf16.msra.mxu0 0
      %2378 = vmatprep.subr.bf16.mxu0 0
      %2379 = vmatpush1.bf16.msra.mxu0 0
      %2380 = vmatprep.subr.bf16.mxu0 0
      %2381 = vmatpush1.bf16.msra.mxu0 0
      %2382 = vmatprep.subr.bf16.mxu0 0
      %2383 = vmatpush1.bf16.msra.mxu0 0
      %2384 = vmatprep.subr.bf16.mxu0 0
      %2385 = vmatpush1.bf16.msra.mxu0 0
      %2386 = vmatprep.subr.bf16.mxu0 0
      %2387 = vmatpush1.bf16.msra.mxu0 0
      %2388 = vmatprep.subr.bf16.mxu0 0
      %2389 = vmatpush1.bf16.msra.mxu0 0
      %2390 = vmatprep.subr.bf16.mxu0 0
      %2391 = vmatpush1.bf16.msra.mxu0 0
      %2392 = vmatprep.subr.bf16.mxu0 0
      %2393 = vmatpush1.bf16.msra.mxu0 0
      %2394 = vmatprep.mubr.bf16.mxu0 0
      %2395 = vmatmul.mubr.bf16.gmra.mrb[0].mxu0 %v1094
      %v2396 = vpop.f32.mrb[0].mxu0
      %v2397 = vadd.f32 %v975, %v2396
      %v2398 = vpop.f32.mrb[0].mxu0
      %v2399 = vadd.f32 %v975, %v2398
      %v2400 = vpop.f32.mrb[0].mxu0
      %v2401 = vadd.f32 %v980, %v2400
      %v2402 = vpop.f32.mrb[0].mxu0
      %v2403 = vadd.f32 %v980, %v2402
      %2404 = vmatprep.mubr.bf16.mxu0 0
      %2405 = vmatmul.mubr.bf16.gmra.mrb[0].mxu0 %v1097
      %v2406 = vpop.f32.mrb[0].mxu0
      %v2407 = vadd.f32 %v985, %v2406
      %v2408 = vpop.f32.mrb[0].mxu0
      %v2409 = vadd.f32 %v985, %v2408
      %v2410 = vpop.f32.mrb[0].mxu0
      %v2411 = vadd.f32 %v990, %v2410
      %v2412 = vpop.f32.mrb[0].mxu0
      %v2413 = vadd.f32 %v990, %v2412
      %2414 = vmatprep.mubr.bf16.mxu0 0
      %2415 = vmatmul.mubr.bf16.gmra.mrb[0].mxu0 %v1100
      %v2416 = vpop.f32.mrb[0].mxu0
      %v2417 = vadd.f32 %v995, %v2416
      %v2418 = vpop.f32.mrb[0].mxu0
      %v2419 = vadd.f32 %v995, %v2418
      %v2420 = vpop.f32.mrb[0].mxu0
      %v2421 = vadd.f32 %v1000, %v2420
      %v2422 = vpop.f32.mrb[0].mxu0
      %v2423 = vadd.f32 %v1000, %v2422
      %2424 = vmatprep.mubr.bf16.mxu0 0
      %2425 = vmatmul.mubr.bf16.gmra.mrb[0].mxu0 %v1103
      %v2426 = vpop.f32.mrb[0].mxu0
      %v2427 = vadd.f32 %v1005, %v2426
      %v2428 = vpop.f32.mrb[0].mxu0
      %v2429 = vadd.f32 %v1005, %v2428
      %v2430 = vpop.f32.mrb[0].mxu0
      %v2431 = vadd.f32 %v1010, %v2430
      %v2432 = vpop.f32.mrb[0].mxu0
      %v2433 = vadd.f32 %v1010, %v2432
      %2434 = vmatprep.mubr.bf16.mxu0 0
      %2435 = vmatmul.mubr.bf16.gmra.mrb[0].mxu0 %v1106
      %v2436 = vpop.f32.mrb[0].mxu0
      %v2437 = vadd.f32 %v1015, %v2436
      %v2438 = vpop.f32.mrb[0].mxu0
      %v2439 = vadd.f32 %v1015, %v2438
      %v2440 = vpop.f32.mrb[0].mxu0
      %v2441 = vadd.f32 %v1020, %v2440
      %v2442 = vpop.f32.mrb[0].mxu0
      %v2443 = vadd.f32 %v1020, %v2442
      %2444 = vmatprep.mubr.bf16.mxu0 0
      %2445 = vmatmul.mubr.bf16.gmra.mrb[0].mxu0 %v1109
      %v2446 = vpop.f32.mrb[0].mxu0
      %v2447 = vadd.f32 %v1025, %v2446
      %v2448 = vpop.f32.mrb[0].mxu0
      %v2449 = vadd.f32 %v1025, %v2448
      %v2450 = vpop.f32.mrb[0].mxu0
      %v2451 = vadd.f32 %v1030, %v2450
      %v2452 = vpop.f32.mrb[0].mxu0
      %v2453 = vadd.f32 %v1030, %v2452
      %2454 = vmatprep.mubr.bf16.mxu0 0
      %2455 = vmatmul.mubr.bf16.gmra.mrb[0].mxu0 %v1112
      %v2456 = vpop.f32.mrb[0].mxu0
      %v2457 = vadd.f32 %v1035, %v2456
      %v2458 = vpop.f32.mrb[0].mxu0
      %v2459 = vadd.f32 %v1035, %v2458
      %v2460 = vpop.f32.mrb[0].mxu0
      %v2461 = vadd.f32 %v1040, %v2460
      %v2462 = vpop.f32.mrb[0].mxu0
      %v2463 = vadd.f32 %v1040, %v2462
      %2464 = vmatprep.mubr.bf16.mxu0 0
      %2465 = vmatmul.mubr.bf16.gmra.mrb[0].mxu0 %v1115
      %v2466 = vpop.f32.mrb[0].mxu0
      %v2467 = vadd.f32 %v1045, %v2466
      %v2468 = vpop.f32.mrb[0].mxu0
      %v2469 = vadd.f32 %v1045, %v2468
      %v2470 = vpop.f32.mrb[0].mxu0
      %v2471 = vadd.f32 %v1050, %v2470
      %v2472 = vpop.f32.mrb[0].mxu0
      %v2473 = vadd.f32 %v1050, %v2472
      %2474 = vdwg.mxu0
      %vm2475 = vcmp.gt.f32.partialorder %v2397, 0.0
      %vm2476 = vcmp.gt.f32.partialorder %v2399, 0.0
      %vm2477 = vcmp.gt.f32.partialorder %v2401, 0.0
      %vm2478 = vcmp.gt.f32.partialorder %v2403, 0.0
      %vm2479 = vcmp.gt.f32.partialorder %v2407, 0.0
      %vm2480 = vcmp.gt.f32.partialorder %v2409, 0.0
      %vm2481 = vcmp.gt.f32.partialorder %v2411, 0.0
      %vm2482 = vcmp.gt.f32.partialorder %v2413, 0.0
      %vm2483 = vcmp.gt.f32.partialorder %v2417, 0.0
      %vm2484 = vcmp.gt.f32.partialorder %v2419, 0.0
      %vm2485 = vcmp.gt.f32.partialorder %v2421, 0.0
      %vm2486 = vcmp.gt.f32.partialorder %v2423, 0.0
      %vm2487 = vcmp.gt.f32.partialorder %v2427, 0.0
      %vm2488 = vcmp.gt.f32.partialorder %v2429, 0.0
      %vm2489 = vcmp.gt.f32.partialorder %v2431, 0.0
      %vm2490 = vcmp.gt.f32.partialorder %v2433, 0.0
      %vm2491 = vcmp.gt.f32.partialorder %v2437, 0.0
      %vm2492 = vcmp.gt.f32.partialorder %v2439, 0.0
      %vm2493 = vcmp.gt.f32.partialorder %v2441, 0.0
      %vm2494 = vcmp.gt.f32.partialorder %v2443, 0.0
      %vm2495 = vcmp.gt.f32.partialorder %v2447, 0.0
      %vm2496 = vcmp.gt.f32.partialorder %v2449, 0.0
      %vm2497 = vcmp.gt.f32.partialorder %v2451, 0.0
      %vm2498 = vcmp.gt.f32.partialorder %v2453, 0.0
      %vm2499 = vcmp.gt.f32.partialorder %v2457, 0.0
      %vm2500 = vcmp.gt.f32.partialorder %v2459, 0.0
      %vm2501 = vcmp.gt.f32.partialorder %v2461, 0.0
      %vm2502 = vcmp.gt.f32.partialorder %v2463, 0.0
      %vm2503 = vcmp.gt.f32.partialorder %v2467, 0.0
      %vm2504 = vcmp.gt.f32.partialorder %v2469, 0.0
      %vm2505 = vcmp.gt.f32.partialorder %v2471, 0.0
      %vm2506 = vcmp.gt.f32.partialorder %v2473, 0.0
      %v2507 = vmul.f32 %v2397, 0.01
      %v2508 = vmul.f32 %v2399, 0.01
      %v2509 = vmul.f32 %v2401, 0.01
      %v2510 = vmul.f32 %v2403, 0.01
      %v2511 = vmul.f32 %v2407, 0.01
      %v2512 = vmul.f32 %v2409, 0.01
      %v2513 = vmul.f32 %v2411, 0.01
      %v2514 = vmul.f32 %v2413, 0.01
      %v2515 = vmul.f32 %v2417, 0.01
      %v2516 = vmul.f32 %v2419, 0.01
      %v2517 = vmul.f32 %v2421, 0.01
      %v2518 = vmul.f32 %v2423, 0.01
      %v2519 = vmul.f32 %v2427, 0.01
      %v2520 = vmul.f32 %v2429, 0.01
      %v2521 = vmul.f32 %v2431, 0.01
      %v2522 = vmul.f32 %v2433, 0.01
      %v2523 = vmul.f32 %v2437, 0.01
      %v2524 = vmul.f32 %v2439, 0.01
      %v2525 = vmul.f32 %v2441, 0.01
      %v2526 = vmul.f32 %v2443, 0.01
      %v2527 = vmul.f32 %v2447, 0.01
      %v2528 = vmul.f32 %v2449, 0.01
      %v2529 = vmul.f32 %v2451, 0.01
      %v2530 = vmul.f32 %v2453, 0.01
      %v2531 = vmul.f32 %v2457, 0.01
      %v2532 = vmul.f32 %v2459, 0.01
      %v2533 = vmul.f32 %v2461, 0.01
      %v2534 = vmul.f32 %v2463, 0.01
      %v2535 = vmul.f32 %v2467, 0.01
      %v2536 = vmul.f32 %v2469, 0.01
      %v2537 = vmul.f32 %v2471, 0.01
      %v2538 = vmul.f32 %v2473, 0.01
      %v2539 = vsel %vm2475, %v2397, %v2507
      %v2540 = vsel %vm2476, %v2399, %v2508
      %v2541 = vsel %vm2477, %v2401, %v2509
      %v2542 = vsel %vm2478, %v2403, %v2510
      %v2543 = vsel %vm2479, %v2407, %v2511
      %v2544 = vsel %vm2480, %v2409, %v2512
      %v2545 = vsel %vm2481, %v2411, %v2513
      %v2546 = vsel %vm2482, %v2413, %v2514
      %v2547 = vsel %vm2483, %v2417, %v2515
      %v2548 = vsel %vm2484, %v2419, %v2516
      %v2549 = vsel %vm2485, %v2421, %v2517
      %v2550 = vsel %vm2486, %v2423, %v2518
      %v2551 = vsel %vm2487, %v2427, %v2519
      %v2552 = vsel %vm2488, %v2429, %v2520
      %v2553 = vsel %vm2489, %v2431, %v2521
      %v2554 = vsel %vm2490, %v2433, %v2522
      %v2555 = vsel %vm2491, %v2437, %v2523
      %v2556 = vsel %vm2492, %v2439, %v2524
      %v2557 = vsel %vm2493, %v2441, %v2525
      %v2558 = vsel %vm2494, %v2443, %v2526
      %v2559 = vsel %vm2495, %v2447, %v2527
      %v2560 = vsel %vm2496, %v2449, %v2528
      %v2561 = vsel %vm2497, %v2451, %v2529
      %v2562 = vsel %vm2498, %v2453, %v2530
      %v2563 = vsel %vm2499, %v2457, %v2531
      %v2564 = vsel %vm2500, %v2459, %v2532
      %v2565 = vsel %vm2501, %v2461, %v2533
      %v2566 = vsel %vm2502, %v2463, %v2534
      %v2567 = vsel %vm2503, %v2467, %v2535
      %v2568 = vsel %vm2504, %v2469, %v2536
      %v2569 = vsel %vm2505, %v2471, %v2537
      %v2570 = vsel %vm2506, %v2473, %v2538
      %2571 = vst [vmem:[%s170 + $0x50] sm:$0xff] %v2539
      %2572 = vst [vmem:[%s170 + $0x58] sm:$0xff] %v2540
      %2573 = vst [vmem:[%s170 + $0xb0] sm:$0xff] %v2541
      %2574 = vst [vmem:[%s170 + $0xb8] sm:$0xff] %v2542
      %2575 = vst [vmem:[%s170 + $0x110] sm:$0xff] %v2543
      %2576 = vst [vmem:[%s170 + $0x118] sm:$0xff] %v2544
      %2577 = vst [vmem:[%s170 + $0x170] sm:$0xff] %v2545
      %2578 = vst [vmem:[%s170 + $0x178] sm:$0xff] %v2546
      %2579 = vst [vmem:[%s170 + $0x1d0] sm:$0xff] %v2547
      %2580 = vst [vmem:[%s170 + $0x1d8] sm:$0xff] %v2548
      %2581 = vst [vmem:[%s170 + $0x230] sm:$0xff] %v2549
      %2582 = vst [vmem:[%s170 + $0x238] sm:$0xff] %v2550
      %2583 = vst [vmem:[%s170 + $0x290] sm:$0xff] %v2551
      %2584 = vst [vmem:[%s170 + $0x298] sm:$0xff] %v2552
      %2585 = vst [vmem:[%s170 + $0x2f0] sm:$0xff] %v2553
      %2586 = vst [vmem:[%s170 + $0x2f8] sm:$0xff] %v2554
      %2587 = vst [vmem:[%s170 + $0x350] sm:$0xff] %v2555
      %2588 = vst [vmem:[%s170 + $0x358] sm:$0xff] %v2556
      %2589 = vst [vmem:[%s170 + $0x3b0] sm:$0xff] %v2557
      %2590 = vst [vmem:[%s170 + $0x3b8] sm:$0xff] %v2558
      %2591 = vst [vmem:[%s170 + $0x410] sm:$0xff] %v2559
      %2592 = vst [vmem:[%s170 + $0x418] sm:$0xff] %v2560
      %2593 = vst [vmem:[%s170 + $0x470] sm:$0xff] %v2561
      %2594 = vst [vmem:[%s170 + $0x478] sm:$0xff] %v2562
      %2595 = vst [vmem:[%s170 + $0x4d0] sm:$0xff] %v2563
      %2596 = vst [vmem:[%s170 + $0x4d8] sm:$0xff] %v2564
      %2597 = vst [vmem:[%s170 + $0x530] sm:$0xff] %v2565
      %2598 = vst [vmem:[%s170 + $0x538] sm:$0xff] %v2566
      %2599 = vst [vmem:[%s170 + $0x590] sm:$0xff] %v2567
      %2600 = vst [vmem:[%s170 + $0x598] sm:$0xff] %v2568
      %2601 = vst [vmem:[%s170 + $0x5f0] sm:$0xff] %v2569
      %2602 = vst [vmem:[%s170 + $0x5f8] sm:$0xff] %v2570
      %p2603 = scmp.lt.s32.totalorder %s14, 1
      %s2604 = scalar_select %p2603, %s14, 1
      %s2605 = smul.addr %s2604, 192
      %s2606 = smul.addr %s2605, 8
      %s2607 = scalar_lea.vmem %s3, %s2606
      // Predicated region
      $region33: #{inconv_forward.1} parent=31 // pred_check
        %p2608 = pneg %p100
      $region34: #{inconv_forward.1} parent=31 // pred_check_branch
        %2610 = sbr.rel (%p2608) target = $region36
      $region35: #{inconv_forward.1} parent=31 // pred_region
        _
      $region36: #{inconv_forward.1} parent=31 // pred_fallthru
        _
    $region32: #{inconv_forward.1} parent=5 // pred_fallthru
      _
    %p2611 = scmp.le.s32.totalorder 2, %s9
    // Predicated region
    $region37: #{inconv_forward.1} parent=5 // pred_check
      %p2612 = pneg %p2611
    $region38: #{inconv_forward.1} parent=5 // pred_check_branch
      %2614 = sbr.rel (%p2612) target = $region40
    $region39: #{inconv_forward.1} parent=5 // pred_region
      %s2615 = ssub.s32 %s9, 2
      // Predicated region
      $region41: #{inconv_forward.1} parent=39 // pred_check
        %p2616 = pneg %p106
      $region42: #{inconv_forward.1} parent=39 // pred_check_branch
        %2618 = sbr.rel (%p2616) target = $region44
      $region43: #{inconv_forward.1} parent=39 // pred_region
        %p2619 = scmp.lt.s32.totalorder %s15, 1
        %s2620 = scalar_select %p2619, %s15, 1
        %s2621 = smul.addr %s2620, 192
        %s2622 = smul.addr %s2621, 8
        %s2623 = scalar_lea.vmem %s3, %s2622
      $region44: #{inconv_forward.1} parent=39 // pred_fallthru
        _
    $region40: #{inconv_forward.1} parent=5 // pred_fallthru
      _
  $region6: #{inconv_forward.1} parent=0 // loop_footer
    %s13 = sadd.s32 1, %s9
  $region7: #{inconv_forward.1} parent=0 // loop_footer_branch
    %8 = sbr.rel target = $region3
  $region8: #{inconv_forward.1} parent=0 // loop_exit
    _

</llo_original>
